<compile_context>
chip_gen: v7x
topology: tpu7x:2x2x1
jax: 0.10.0
libtpu: 0.0.40
codegen_flags: <defaults>
</compile_context>

<pallas_src>
import jax
import jax.numpy as jnp
from jax.experimental import pallas as pl
from jax.experimental.pallas import tpu as pltpu


STATE_SIZE = 24
ACTION_SIZE = 2
FC_UNITS = (1024, 512, 128, 64, 32)
OUT_LANES = 128                        # lane-padded output slab width (lane-dense store)
BIAS_LANES = max(*FC_UNITS, OUT_LANES)
MAX_BATCH_TILE = 2048                  # keeps the per-step working set well under v7x's 64 MiB VMEM


def _cdiv(a, b):
    return (a + b - 1) // b


def _round_up(x, m):
    return _cdiv(x, m) * m


# ---------------------------------------------------------------------------
# Kernel
# ---------------------------------------------------------------------------
def actor_kernel(x_ref, w1, w2, w3, w4, w5, w6, b_ref, o_ref):
    """Fused 6-layer MLP: 5x (matmul + bias + ReLU), then matmul + bias + tanh.

    Matmuls run on the MXU in the weights' dtype (bf16 by default) and accumulate in f32;
    the bias add / ReLU / tanh are VPU/EUP filler under the MXU passes (MXU-bound kernel).
    """
    cdt = w1.dtype
    h = x_ref[...].astype(cdt)          # input is DMA'd as f32; cast in-kernel (free VPU work)

    def hidden(h, w_ref, li, n):
        y = jnp.dot(h, w_ref[...], preferred_element_type=jnp.float32) + b_ref[li, :n]
        return jnp.maximum(y, 0.0).astype(cdt)

    h = hidden(h, w1, 0, FC_UNITS[0])
    h = hidden(h, w2, 1, FC_UNITS[1])
    h = hidden(h, w3, 2, FC_UNITS[2])
    h = hidden(h, w4, 3, FC_UNITS[3])
    h = hidden(h, w5, 4, FC_UNITS[4])
    y = jnp.dot(h, w6[...], preferred_element_type=jnp.float32) + b_ref[5, :OUT_LANES]
    o_ref[...] = jnp.tanh(y).astype(o_ref.dtype)   # pad lanes: tanh(0) = 0; wrapper slices them off


# ---------------------------------------------------------------------------
# One-time parameter prep (hoisted out of the per-call hot path)
# ---------------------------------------------------------------------------
def prepare_actor_params(params, compute_dtype=jnp.bfloat16):
    """params: list of 6 (W_t, b), W_t = (in_features, out_features) [transpose of the PyTorch
    weight], b = (1, out_features) or (out_features,). Returns (weights, bias_merged):
      weights     : 6-tuple in compute_dtype; fc6 zero-padded to OUT_LANES output lanes.
      bias_merged : (8, BIAS_LANES) f32; row li holds layer li's bias in its leading lanes.
    """
    assert len(params) == 6
    ws = []
    for li, (w, _) in enumerate(params):
        w = jnp.asarray(w, jnp.float32)
        if li == 5:
            w = jnp.zeros((w.shape[0], OUT_LANES), jnp.float32).at[:, : w.shape[1]].set(w)
        ws.append(w.astype(compute_dtype))
    b_merged = jnp.zeros((8, BIAS_LANES), jnp.float32)
    for li, (_, b) in enumerate(params):
        b = jnp.asarray(b, jnp.float32).reshape(-1)
        b_merged = b_merged.at[li, : b.shape[0]].set(b)
    return tuple(ws), b_merged


# ---------------------------------------------------------------------------
# Tiling / budget helpers
# ---------------------------------------------------------------------------
def _default_num_tensorcores():
    """2 on chips where the grid shards across 2 TensorCores (v4 / v5p / v7x), else 1."""
    try:
        d = jax.devices()[0]
        if d.platform != "tpu":
            return 1
        kind = d.device_kind.lower().replace(" ", "")
        return 2 if ("v4" in kind or "v5p" in kind or "7" in kind) else 1
    except Exception:
        return 1


def _select_batch_tile(B, batch_tile, num_cores):
    """Rows per grid step: multiple of 128, <= MAX_BATCH_TILE, balanced against cdiv(B, tile)
    to minimise padding; on 2-core chips keep >= 2 grid steps once B >= 256 so both TCs work."""
    cap = _round_up(max(128, min(batch_tile, MAX_BATCH_TILE)), 128)
    n_tiles = _cdiv(B, cap)
    if num_cores > 1 and B >= 256:
        n_tiles = max(n_tiles, num_cores)
    bt = min(cap, _round_up(_cdiv(B, n_tiles), 128))
    return bt, _round_up(B, bt)


def _vmem_budget_bytes(bt, compute_itemsize, out_itemsize):
    dims = [STATE_SIZE, *FC_UNITS, OUT_LANES]
    w_bytes = sum(_round_up(dims[i], 16) * _round_up(dims[i + 1], 128)
                  for i in range(len(dims) - 1)) * compute_itemsize
    b_bytes = 8 * BIAS_LANES * 4
    io_bytes = 2 * bt * 128 * 4 + 2 * bt * OUT_LANES * out_itemsize     # double-buffered io tiles
    act_bytes = 2 * bt * max(FC_UNITS) * (4 + compute_itemsize)         # f32 accum + cast copy
    total = 2 * (w_bytes + b_bytes) + io_bytes + act_bytes + (8 << 20)
    # Cap below v7x's 64 MiB physical VMEM (v5e/v6e have 128 MiB, so this is always safe).
    return int(max(16 << 20, min(total, 48 << 20)))


def _cost_estimate(rows, out_itemsize, compute_itemsize):
    dims = [STATE_SIZE, *FC_UNITS, OUT_LANES]
    macs = sum(dims[i] * dims[i + 1] for i in range(len(dims) - 1))
    w_bytes = macs * compute_itemsize
    return pl.CostEstimate(
        flops=2 * rows * macs,
        transcendentals=rows * OUT_LANES,
        bytes_accessed=w_bytes + 8 * BIAS_LANES * 4
        + rows * STATE_SIZE * 4 + rows * OUT_LANES * out_itemsize,
    )


# ---------------------------------------------------------------------------
# Forward wrapper
# ---------------------------------------------------------------------------
def actor_forward(state, prepped_params, *, batch_tile=1024, out_dtype=jnp.float32,
                  num_cores=None, single_buffer_weights=False, return_padded=False):
    """state: (B, STATE_SIZE) f32.  prepped_params: output of prepare_actor_params()."""
    ws, b_merged = prepped_params
    B, S = state.shape
    assert S == STATE_SIZE and len(ws) == 6

    if num_cores is None:
        num_cores = _default_num_tensorcores()
    bt, Bp = _select_batch_tile(B, batch_tile, num_cores)

    x = state
    if Bp != B:
        x = jnp.pad(x, ((0, Bp - B), (0, 0)))   # zero rows are harmless through relu/tanh
    # NOTE: no dtype cast here — the tile is DMA'd in f32 and cast inside the kernel.

    def resident_spec(shape):
        # Constant block index -> the block is DMA'd once and stays resident across grid steps.
        if single_buffer_weights:
            # Optional: drop the dead second pipeline buffer (~1.3 MB of VMEM headroom).
            return pl.BlockSpec(shape, lambda i: (0, 0), pipeline_mode=pl.Buffered(1))
        return pl.BlockSpec(shape, lambda i: (0, 0))

    in_specs = [pl.BlockSpec((bt, STATE_SIZE), lambda i: (i, 0))]
    in_specs += [resident_spec(w.shape) for w in ws]
    in_specs.append(resident_spec(b_merged.shape))

    compute_itemsize = jnp.dtype(ws[0].dtype).itemsize
    out_itemsize = jnp.dtype(out_dtype).itemsize

    out = pl.pallas_call(
        actor_kernel,
        out_shape=jax.ShapeDtypeStruct((Bp, OUT_LANES), out_dtype),
        grid_spec=pltpu.PrefetchScalarGridSpec(
            num_scalar_prefetch=0,
            grid=(Bp // bt,),
            in_specs=in_specs,
            out_specs=pl.BlockSpec((bt, OUT_LANES), lambda i: (i, 0)),
        ),
        compiler_params=pltpu.CompilerParams(
            dimension_semantics=("parallel",),
            vmem_limit_bytes=_vmem_budget_bytes(bt, compute_itemsize, out_itemsize),
        ),
        cost_estimate=_cost_estimate(Bp, out_itemsize, compute_itemsize),
    )(x, *ws, b_merged)

    if return_padded:
        return out   # (Bp, OUT_LANES) lane-dense slab; rows >= B and lanes >= ACTION_SIZE are pad
    return out[:B, :ACTION_SIZE]


# ---------------------------------------------------------------------------
# Init + plain-JAX reference (for the correctness check)
# ---------------------------------------------------------------------------
def init_actor_params(key, state_size=STATE_SIZE, action_size=ACTION_SIZE, fc_units=FC_UNITS):
    """Deterministic init mirroring Actor.reset_parameters().

    NOTE: hidden_init() in the reference uses weight.size()[0] == out_features as "fan_in"
    (a quirk of that code); we intentionally reproduce the same limits. Biases keep the
    default PyTorch nn.Linear init range (+-1/sqrt(in_features)).
    """
    dims = [state_size, *fc_units, action_size]
    params = []
    for li in range(len(dims) - 1):
        d_in, d_out = dims[li], dims[li + 1]
        key, kw, kb = jax.random.split(key, 3)
        lim = (1.0 / (d_out ** 0.5)) if li < len(dims) - 2 else 3e-3
        # PyTorch weight is (out, in); we store the transpose (in, out) for x @ W.
        w_t = jax.random.uniform(kw, (d_in, d_out), jnp.float32, -lim, lim)
        b_lim = 1.0 / (d_in ** 0.5)
        b = jax.random.uniform(kb, (1, d_out), jnp.float32, -b_lim, b_lim)
        params.append((w_t, b))
    return params


def actor_reference(state, params):
    """Plain-JAX f32 reference matching Actor.forward()."""
    h = state
    for i, (w, b) in enumerate(params):
        h = h @ w + b
        h = jnp.maximum(h, 0.0) if i < len(params) - 1 else jnp.tanh(h)
    return h


if __name__ == "__main__":
    key = jax.random.PRNGKey(0)
    key, k_small, k_big = jax.random.split(key, 3)
    params = init_actor_params(key)

    # Small batch (DDPG action-selection path).
    state_small = jax.random.normal(k_small, (8, STATE_SIZE), jnp.float32)
    ref_small = actor_reference(state_small, params)

    # f32 compute path (kept for evaluation where exact actions matter).
    prepped_f32 = prepare_actor_params(params, compute_dtype=jnp.float32)
    out_f32 = jax.block_until_ready(actor_forward(state_small, prepped_f32))
    assert out_f32.shape == (8, ACTION_SIZE)
    assert jnp.allclose(out_f32, ref_small, atol=1e-4, rtol=1e-4), "f32 path mismatch vs reference"

    # Default fast path: bf16 MXU operands, f32 accumulation. Prep is done once and reused.
    prepped_bf16 = prepare_actor_params(params)
    out_bf16 = jax.block_until_ready(actor_forward(state_small, prepped_bf16))
    assert out_bf16.shape == (8, ACTION_SIZE)
    assert jnp.allclose(out_bf16, ref_small, atol=5e-2, rtol=5e-2), "bf16 path mismatch vs reference"

    # Awkward batch size: exercises padding-minimising tile selection and a multi-step grid.
    state_big = jax.random.normal(k_big, (260, STATE_SIZE), jnp.float32)
    ref_big = actor_reference(state_big, params)
    out_big = jax.block_until_ready(actor_forward(state_big, prepped_bf16, batch_tile=128))
    assert out_big.shape == (260, ACTION_SIZE)
    assert jnp.allclose(out_big, ref_big, atol=5e-2, rtol=5e-2), "tiled path mismatch vs reference"

    print("KERNEL_OK")
</pallas_src>

<mosaic_0001>
module attributes {stable_mosaic.version = 11 : i64} {
  func.func @actor_kernel(%arg0: i32, %arg1: memref<128x24xf32, #tpu.memory_space<vmem>>, %arg2: memref<24x1024xf32, #tpu.memory_space<vmem>>, %arg3: memref<1024x512xf32, #tpu.memory_space<vmem>>, %arg4: memref<512x128xf32, #tpu.memory_space<vmem>>, %arg5: memref<128x64xf32, #tpu.memory_space<vmem>>, %arg6: memref<64x32xf32, #tpu.memory_space<vmem>>, %arg7: memref<32x128xf32, #tpu.memory_space<vmem>>, %arg8: memref<8x1024xf32, #tpu.memory_space<vmem>>, %arg9: memref<128x128xf32, #tpu.memory_space<vmem>>) attributes {dimension_semantics = [#tpu.dimension_semantics<parallel>], iteration_bounds = array<i64: 1>, scalar_prefetch = 0 : i64, scratch_operands = 0 : i64, tpu.core_type = #tpu.core_type<tc>, window_params = [{transform_indices = @transform_0, window_bounds = array<i64: 128, 24>}, {pipeline_mode = #tpu.pipeline_mode<synchronous>, transform_indices = @transform_1, window_bounds = array<i64: 24, 1024>}, {pipeline_mode = #tpu.pipeline_mode<synchronous>, transform_indices = @transform_2, window_bounds = array<i64: 1024, 512>}, {pipeline_mode = #tpu.pipeline_mode<synchronous>, transform_indices = @transform_3, window_bounds = array<i64: 512, 128>}, {pipeline_mode = #tpu.pipeline_mode<synchronous>, transform_indices = @transform_4, window_bounds = array<i64: 128, 64>}, {pipeline_mode = #tpu.pipeline_mode<synchronous>, transform_indices = @transform_5, window_bounds = array<i64: 64, 32>}, {pipeline_mode = #tpu.pipeline_mode<synchronous>, transform_indices = @transform_6, window_bounds = array<i64: 32, 128>}, {pipeline_mode = #tpu.pipeline_mode<synchronous>, transform_indices = @transform_7, window_bounds = array<i64: 8, 1024>}, {transform_indices = @transform_8, window_bounds = array<i64: 128, 128>}]} {
    %c0 = arith.constant 0 : index
    %c0_0 = arith.constant 0 : index
    %0 = vector.load %arg1[%c0, %c0_0] : memref<128x24xf32, #tpu.memory_space<vmem>>, vector<128x24xf32>
    %c0_1 = arith.constant 0 : index
    %c0_2 = arith.constant 0 : index
    %1 = vector.load %arg2[%c0_1, %c0_2] : memref<24x1024xf32, #tpu.memory_space<vmem>>, vector<24x1024xf32>
    %cst = arith.constant dense<0.000000e+00> : vector<128x1024xf32>
    %2 = tpu.matmul %0, %1, %cst {dimension_numbers = #tpu.dot_dimension_numbers<[1], [0], [0], [1], [0, 0, 1, 1], [], []>} : vector<128x24xf32>, vector<24x1024xf32>, vector<128x1024xf32> -> vector<128x1024xf32>
    %c0_3 = arith.constant 0 : index
    %c0_4 = arith.constant 0 : index
    %3 = vector.load %arg8[%c0_3, %c0_4] : memref<8x1024xf32, #tpu.memory_space<vmem>>, vector<1x1024xf32>
    %4 = vector.shape_cast %3 : vector<1x1024xf32> to vector<1024xf32>
    %5 = vector.shape_cast %4 : vector<1024xf32> to vector<1x1024xf32>
    %6 = vector.broadcast %5 : vector<1x1024xf32> to vector<128x1024xf32>
    %7 = arith.addf %2, %6 : vector<128x1024xf32>
    %cst_5 = arith.constant 0.000000e+00 : f32
    %8 = vector.broadcast %cst_5 : f32 to vector<128x1024xf32>
    %9 = arith.maximumf %7, %8 : vector<128x1024xf32>
    %c0_6 = arith.constant 0 : index
    %c0_7 = arith.constant 0 : index
    %10 = vector.load %arg3[%c0_6, %c0_7] : memref<1024x512xf32, #tpu.memory_space<vmem>>, vector<1024x512xf32>
    %cst_8 = arith.constant dense<0.000000e+00> : vector<128x512xf32>
    %11 = tpu.matmul %9, %10, %cst_8 {dimension_numbers = #tpu.dot_dimension_numbers<[1], [0], [0], [1], [0, 0, 1, 1], [], []>} : vector<128x1024xf32>, vector<1024x512xf32>, vector<128x512xf32> -> vector<128x512xf32>
    %c1 = arith.constant 1 : index
    %c0_9 = arith.constant 0 : index
    %12 = vector.load %arg8[%c1, %c0_9] : memref<8x1024xf32, #tpu.memory_space<vmem>>, vector<1x512xf32>
    %13 = vector.shape_cast %12 : vector<1x512xf32> to vector<512xf32>
    %14 = vector.shape_cast %13 : vector<512xf32> to vector<1x512xf32>
    %15 = vector.broadcast %14 : vector<1x512xf32> to vector<128x512xf32>
    %16 = arith.addf %11, %15 : vector<128x512xf32>
    %cst_10 = arith.constant 0.000000e+00 : f32
    %17 = vector.broadcast %cst_10 : f32 to vector<128x512xf32>
    %18 = arith.maximumf %16, %17 : vector<128x512xf32>
    %c0_11 = arith.constant 0 : index
    %c0_12 = arith.constant 0 : index
    %19 = vector.load %arg4[%c0_11, %c0_12] : memref<512x128xf32, #tpu.memory_space<vmem>>, vector<512x128xf32>
    %cst_13 = arith.constant dense<0.000000e+00> : vector<128x128xf32>
    %20 = tpu.matmul %18, %19, %cst_13 {dimension_numbers = #tpu.dot_dimension_numbers<[1], [0], [0], [1], [0, 0, 1, 1], [], []>} : vector<128x512xf32>, vector<512x128xf32>, vector<128x128xf32> -> vector<128x128xf32>
    %c2 = arith.constant 2 : index
    %c0_14 = arith.constant 0 : index
    %21 = vector.load %arg8[%c2, %c0_14] : memref<8x1024xf32, #tpu.memory_space<vmem>>, vector<1x128xf32>
    %22 = vector.shape_cast %21 : vector<1x128xf32> to vector<128xf32>
    %23 = vector.shape_cast %22 : vector<128xf32> to vector<1x128xf32>
    %24 = vector.broadcast %23 : vector<1x128xf32> to vector<128x128xf32>
    %25 = arith.addf %20, %24 : vector<128x128xf32>
    %cst_15 = arith.constant 0.000000e+00 : f32
    %26 = vector.broadcast %cst_15 : f32 to vector<128x128xf32>
    %27 = arith.maximumf %25, %26 : vector<128x128xf32>
    %c0_16 = arith.constant 0 : index
    %c0_17 = arith.constant 0 : index
    %28 = vector.load %arg5[%c0_16, %c0_17] : memref<128x64xf32, #tpu.memory_space<vmem>>, vector<128x64xf32>
    %cst_18 = arith.constant dense<0.000000e+00> : vector<128x64xf32>
    %29 = tpu.matmul %27, %28, %cst_18 {dimension_numbers = #tpu.dot_dimension_numbers<[1], [0], [0], [1], [0, 0, 1, 1], [], []>} : vector<128x128xf32>, vector<128x64xf32>, vector<128x64xf32> -> vector<128x64xf32>
    %c3 = arith.constant 3 : index
    %c0_19 = arith.constant 0 : index
    %30 = vector.load %arg8[%c3, %c0_19] : memref<8x1024xf32, #tpu.memory_space<vmem>>, vector<1x64xf32>
    %31 = vector.shape_cast %30 : vector<1x64xf32> to vector<64xf32>
    %32 = vector.shape_cast %31 : vector<64xf32> to vector<1x64xf32>
    %33 = vector.broadcast %32 : vector<1x64xf32> to vector<128x64xf32>
    %34 = arith.addf %29, %33 : vector<128x64xf32>
    %cst_20 = arith.constant 0.000000e+00 : f32
    %35 = vector.broadcast %cst_20 : f32 to vector<128x64xf32>
    %36 = arith.maximumf %34, %35 : vector<128x64xf32>
    %c0_21 = arith.constant 0 : index
    %c0_22 = arith.constant 0 : index
    %37 = vector.load %arg6[%c0_21, %c0_22] : memref<64x32xf32, #tpu.memory_space<vmem>>, vector<64x32xf32>
    %cst_23 = arith.constant dense<0.000000e+00> : vector<128x32xf32>
    %38 = tpu.matmul %36, %37, %cst_23 {dimension_numbers = #tpu.dot_dimension_numbers<[1], [0], [0], [1], [0, 0, 1, 1], [], []>} : vector<128x64xf32>, vector<64x32xf32>, vector<128x32xf32> -> vector<128x32xf32>
    %c4 = arith.constant 4 : index
    %c0_24 = arith.constant 0 : index
    %39 = vector.load %arg8[%c4, %c0_24] : memref<8x1024xf32, #tpu.memory_space<vmem>>, vector<1x32xf32>
    %40 = vector.shape_cast %39 : vector<1x32xf32> to vector<32xf32>
    %41 = vector.shape_cast %40 : vector<32xf32> to vector<1x32xf32>
    %42 = vector.broadcast %41 : vector<1x32xf32> to vector<128x32xf32>
    %43 = arith.addf %38, %42 : vector<128x32xf32>
    %cst_25 = arith.constant 0.000000e+00 : f32
    %44 = vector.broadcast %cst_25 : f32 to vector<128x32xf32>
    %45 = arith.maximumf %43, %44 : vector<128x32xf32>
    %c0_26 = arith.constant 0 : index
    %c0_27 = arith.constant 0 : index
    %46 = vector.load %arg7[%c0_26, %c0_27] : memref<32x128xf32, #tpu.memory_space<vmem>>, vector<32x128xf32>
    %cst_28 = arith.constant dense<0.000000e+00> : vector<128x128xf32>
    %47 = tpu.matmul %45, %46, %cst_28 {dimension_numbers = #tpu.dot_dimension_numbers<[1], [0], [0], [1], [0, 0, 1, 1], [], []>} : vector<128x32xf32>, vector<32x128xf32>, vector<128x128xf32> -> vector<128x128xf32>
    %c5 = arith.constant 5 : index
    %c0_29 = arith.constant 0 : index
    %48 = vector.load %arg8[%c5, %c0_29] : memref<8x1024xf32, #tpu.memory_space<vmem>>, vector<1x128xf32>
    %49 = vector.shape_cast %48 : vector<1x128xf32> to vector<128xf32>
    %50 = vector.shape_cast %49 : vector<128xf32> to vector<1x128xf32>
    %51 = vector.broadcast %50 : vector<1x128xf32> to vector<128x128xf32>
    %52 = arith.addf %47, %51 : vector<128x128xf32>
    %53 = math.tanh %52 : vector<128x128xf32>
    %c0_30 = arith.constant 0 : index
    %c0_31 = arith.constant 0 : index
    %54 = vector.load %arg9[%c0_30, %c0_31] : memref<128x128xf32, #tpu.memory_space<vmem>>, vector<128x128xf32>
    tpu.vector_store %arg9[%c0_30, %c0_31], %53 {strides = array<i32>} : memref<128x128xf32, #tpu.memory_space<vmem>>, vector<128x128xf32>,
    return
  }
  func.func @transform_0(%arg0: i32) -> (i32, i32) {
    %c0_i32 = arith.constant 0 : i32
    %c0_i32_0 = arith.constant 0 : i32
    return %arg0, %c0_i32 : i32, i32
  }
  func.func @transform_1(%arg0: i32) -> (i32, i32) {
    %c0_i32 = arith.constant 0 : i32
    %c0_i32_0 = arith.constant 0 : i32
    %c0_i32_1 = arith.constant 0 : i32
    return %c0_i32, %c0_i32_0 : i32, i32
  }
  func.func @transform_2(%arg0: i32) -> (i32, i32) {
    %c0_i32 = arith.constant 0 : i32
    %c0_i32_0 = arith.constant 0 : i32
    %c0_i32_1 = arith.constant 0 : i32
    return %c0_i32, %c0_i32_0 : i32, i32
  }
  func.func @transform_3(%arg0: i32) -> (i32, i32) {
    %c0_i32 = arith.constant 0 : i32
    %c0_i32_0 = arith.constant 0 : i32
    %c0_i32_1 = arith.constant 0 : i32
    return %c0_i32, %c0_i32_0 : i32, i32
  }
  func.func @transform_4(%arg0: i32) -> (i32, i32) {
    %c0_i32 = arith.constant 0 : i32
    %c0_i32_0 = arith.constant 0 : i32
    %c0_i32_1 = arith.constant 0 : i32
    return %c0_i32, %c0_i32_0 : i32, i32
  }
  func.func @transform_5(%arg0: i32) -> (i32, i32) {
    %c0_i32 = arith.constant 0 : i32
    %c0_i32_0 = arith.constant 0 : i32
    %c0_i32_1 = arith.constant 0 : i32
    return %c0_i32, %c0_i32_0 : i32, i32
  }
  func.func @transform_6(%arg0: i32) -> (i32, i32) {
    %c0_i32 = arith.constant 0 : i32
    %c0_i32_0 = arith.constant 0 : i32
    %c0_i32_1 = arith.constant 0 : i32
    return %c0_i32, %c0_i32_0 : i32, i32
  }
  func.func @transform_7(%arg0: i32) -> (i32, i32) {
    %c0_i32 = arith.constant 0 : i32
    %c0_i32_0 = arith.constant 0 : i32
    %c0_i32_1 = arith.constant 0 : i32
    return %c0_i32, %c0_i32_0 : i32, i32
  }
  func.func @transform_8(%arg0: i32) -> (i32, i32) {
    %c0_i32 = arith.constant 0 : i32
    %c0_i32_0 = arith.constant 0 : i32
    return %arg0, %c0_i32 : i32, i32
  }
}

</mosaic_0001>

<llo_original>
// kernel: tpu_custom_call.1
$region0: #{tpu_custom_call.1}
  #allocation0 [shape = 'u32[]', space=smem, size = 0x4, offset = 0x4, fixed_abs, tag = 'smem constant byte address 0x4 - core index']
  #allocation1 [shape = 'u32[144,128]{1,0:T(1,128)}', space=vmem, size = 0x12000, scoped, tag = 'internal scratch']
  %s0 = inlined_call_operand.vmem [shape: f32[128,24], index: 0, kind: input, shape index: {}]
  %s1 = inlined_call_operand.hbm [shape: f32[24,1024], index: 1, kind: input, shape index: {}]
  %s2 = inlined_call_operand.hbm [shape: f32[1024,512], index: 2, kind: input, shape index: {}]
  %s3 = inlined_call_operand.hbm [shape: f32[512,128], index: 3, kind: input, shape index: {}]
  %s4 = inlined_call_operand.vmem [shape: f32[128,64], index: 4, kind: input, shape index: {}]
  %s5 = inlined_call_operand.vmem [shape: f32[64,32], index: 5, kind: input, shape index: {}]
  %s6 = inlined_call_operand.hbm [shape: f32[32,128], index: 6, kind: input, shape index: {}]
  %s7 = inlined_call_operand.hbm [shape: f32[8,1024], index: 7, kind: input, shape index: {}]
  %s8 = inlined_call_operand.hbm [shape: f32[128,128], index: 8, kind: output, shape index: {}]
  %s9 = sld [smem:[#allocation0]]
  $region62: #{tpu_custom_call.1} parent=0
    _
  %s11 = ssub.s32 1, %s9
  %s12 = scalar_select 0, %s11, %s9
  $region1: #{tpu_custom_call.1} parent=0
    #allocation2 [shape = 'u8[98304]{0}', space=vmem, size = 0x18000, scoped, tag = 'input window, operand 1, single buffered']
    #allocation3 [shape = 's32[1]{0}', space=sflag, size = 0x4, scoped, tag = 'scoped memory for tpu_custom_call.1']
    #allocation4 [shape = 's32[1]{0}', space=sflag, size = 0x4, scoped, tag = 'scoped memory for tpu_custom_call.1']
    #allocation5 [shape = 'u8[2097152]{0}', space=vmem, size = 0x200000, scoped, tag = 'input window, operand 2, single buffered']
    #allocation6 [shape = 's32[1]{0}', space=sflag, size = 0x4, scoped, tag = 'scoped memory for tpu_custom_call.1']
    #allocation7 [shape = 'u8[262144]{0}', space=vmem, size = 0x40000, scoped, tag = 'input window, operand 3, single buffered']
    #allocation8 [shape = 'u8[16384]{0}', space=vmem, size = 0x4000, scoped, tag = 'input window, operand 6, single buffered']
    #allocation9 [shape = 's32[1]{0}', space=sflag, size = 0x4, scoped, tag = 'scoped memory for tpu_custom_call.1']
    #allocation10 [shape = 'u8[32768]{0}', space=vmem, size = 0x8000, scoped, tag = 'input window, operand 7, single buffered']
    #allocation11 [shape = 'u8[65536]{0}', space=vmem, size = 0x10000, scoped, tag = 'output window, operand 0, single buffered']
    %13 = vsyncpa [#allocation3], 0
    %14 = vsyncpa [#allocation6], 0
    %15 = vsyncpa [#allocation9], 0
    %16 = vsyncpa [#allocation4], 0
    // Predicated region
    $region2: #{tpu_custom_call.1} parent=1 // pred_check
      _
    $region3: #{tpu_custom_call.1} parent=1 // pred_check_branch
      %18 = sbr.rel (0) target = $region5
    $region4: #{tpu_custom_call.1} parent=1 // pred_region
      _
    $region5: #{tpu_custom_call.1} parent=1 // pred_fallthru
      _
    // Predicated region
    $region6: #{tpu_custom_call.1} parent=1 // pred_check
      _
    $region7: #{tpu_custom_call.1} parent=1 // pred_check_branch
      %20 = sbr.rel (0) target = $region9
    $region8: #{tpu_custom_call.1} parent=1 // pred_region
      %s22 = ssub.s32 3072, 3072
      %23 = vsyncadd [#allocation3], %s22
      %s24 = sshll.u32 [#allocation2], 4
      %s25 = int_to_ptr.vmem [resolvable:$true] %s24
      %30 = dma.hbm_to_vmem [thread:$0]  %s1, 3072, %s25, [#allocation3], 1024, 1024, 64
    $region9: #{tpu_custom_call.1} parent=1 // pred_fallthru
      _
    // Predicated region
    $region10: #{tpu_custom_call.1} parent=1 // pred_check
      _
    $region11: #{tpu_custom_call.1} parent=1 // pred_check_branch
      %32 = sbr.rel (0) target = $region13
    $region12: #{tpu_custom_call.1} parent=1 // pred_region
      %s34 = ssub.s32 65536, 65536
      %35 = vsyncadd [#allocation6], %s34
      %s36 = sshll.u32 [#allocation5], 4
      %s37 = int_to_ptr.vmem [resolvable:$true] %s36
      %42 = dma.hbm_to_vmem [thread:$0]  %s2, 65536, %s37, [#allocation6], 512, 512, 32
    $region13: #{tpu_custom_call.1} parent=1 // pred_fallthru
      _
    // Predicated region
    $region14: #{tpu_custom_call.1} parent=1 // pred_check
      _
    $region15: #{tpu_custom_call.1} parent=1 // pred_check_branch
      %44 = sbr.rel (0) target = $region17
    $region16: #{tpu_custom_call.1} parent=1 // pred_region
      %s46 = ssub.s32 8192, 8192
      %47 = vsyncadd [#allocation6], %s46
      %s48 = sshll.u32 [#allocation7], 4
      %s49 = int_to_ptr.vmem [resolvable:$true] %s48
      %54 = dma.hbm_to_vmem [thread:$0]  %s3, 8192, %s49, [#allocation6], 128, 128, 8
    $region17: #{tpu_custom_call.1} parent=1 // pred_fallthru
      _
    // Predicated region
    $region18: #{tpu_custom_call.1} parent=1 // pred_check
      _
    $region19: #{tpu_custom_call.1} parent=1 // pred_check_branch
      %56 = sbr.rel (0) target = $region21
    $region20: #{tpu_custom_call.1} parent=1 // pred_region
      _
    $region21: #{tpu_custom_call.1} parent=1 // pred_fallthru
      _
    // Predicated region
    $region22: #{tpu_custom_call.1} parent=1 // pred_check
      _
    $region23: #{tpu_custom_call.1} parent=1 // pred_check_branch
      %58 = sbr.rel (0) target = $region25
    $region24: #{tpu_custom_call.1} parent=1 // pred_region
      _
    $region25: #{tpu_custom_call.1} parent=1 // pred_fallthru
      _
    // Predicated region
    $region26: #{tpu_custom_call.1} parent=1 // pred_check
      _
    $region27: #{tpu_custom_call.1} parent=1 // pred_check_branch
      %60 = sbr.rel (0) target = $region29
    $region28: #{tpu_custom_call.1} parent=1 // pred_region
      %s62 = ssub.s32 512, 512
      %63 = vsyncadd [#allocation9], %s62
      %s64 = sshll.u32 [#allocation8], 4
      %s65 = int_to_ptr.vmem [resolvable:$true] %s64
      %70 = dma.hbm_to_vmem [thread:$0]  %s6, 512, %s65, [#allocation9], 128, 128, 8
    $region29: #{tpu_custom_call.1} parent=1 // pred_fallthru
      _
    // Predicated region
    $region30: #{tpu_custom_call.1} parent=1 // pred_check
      _
    $region31: #{tpu_custom_call.1} parent=1 // pred_check_branch
      %72 = sbr.rel (0) target = $region33
    $region32: #{tpu_custom_call.1} parent=1 // pred_region
      %s74 = ssub.s32 1024, 1024
      %75 = vsyncadd [#allocation9], %s74
      %s77 = sshll.u32 [#allocation10], 4
      %s78 = int_to_ptr.vmem [resolvable:$true] %s77
      %80 = dma.hbm_to_vmem [thread:$0]  %s7, 1024, %s78, [#allocation9]
    $region33: #{tpu_custom_call.1} parent=1 // pred_fallthru
      _
    // Predicated region
    $region34: #{tpu_custom_call.1} parent=1 // pred_check
      _
    $region35: #{tpu_custom_call.1} parent=1 // pred_check_branch
      %82 = sbr.rel (0) target = $region37
    $region36: #{tpu_custom_call.1} parent=1 // pred_region
      %83 = dma.done [#allocation3], 3072
    $region37: #{tpu_custom_call.1} parent=1 // pred_fallthru
      _
    // Predicated region
    $region38: #{tpu_custom_call.1} parent=1 // pred_check
      _
    $region39: #{tpu_custom_call.1} parent=1 // pred_check_branch
      %85 = sbr.rel (0) target = $region41
    $region40: #{tpu_custom_call.1} parent=1 // pred_region
      %86 = dma.done [#allocation6], 65536
    $region41: #{tpu_custom_call.1} parent=1 // pred_fallthru
      _
    // Predicated region
    $region42: #{tpu_custom_call.1} parent=1 // pred_check
      _
    $region43: #{tpu_custom_call.1} parent=1 // pred_check_branch
      %88 = sbr.rel (0) target = $region45
    $region44: #{tpu_custom_call.1} parent=1 // pred_region
      %89 = dma.done [#allocation6], 8192
    $region45: #{tpu_custom_call.1} parent=1 // pred_fallthru
      _
    // Predicated region
    $region46: #{tpu_custom_call.1} parent=1 // pred_check
      _
    $region47: #{tpu_custom_call.1} parent=1 // pred_check_branch
      %91 = sbr.rel (0) target = $region49
    $region48: #{tpu_custom_call.1} parent=1 // pred_region
      %92 = dma.done [#allocation9], 512
    $region49: #{tpu_custom_call.1} parent=1 // pred_fallthru
      _
    // Predicated region
    $region50: #{tpu_custom_call.1} parent=1 // pred_check
      _
    $region51: #{tpu_custom_call.1} parent=1 // pred_check_branch
      %94 = sbr.rel (0) target = $region53
    $region52: #{tpu_custom_call.1} parent=1 // pred_region
      %95 = dma.done [#allocation9], 1024
    $region53: #{tpu_custom_call.1} parent=1 // pred_fallthru
      _
    %v96 = vld [vmem:[%s0] sm:$0xff]
    %v97 = vld [vmem:[%s0 + $0x8] sm:$0xff]
    %v98 = vld [vmem:[%s0 + $0x10] sm:$0xff]
    %v99 = vld [vmem:[%s0 + $0x18] sm:$0xff]
    %v100 = vld [vmem:[%s0 + $0x20] sm:$0xff]
    %v101 = vld [vmem:[%s0 + $0x28] sm:$0xff]
    %v102 = vld [vmem:[%s0 + $0x30] sm:$0xff]
    %v103 = vld [vmem:[%s0 + $0x38] sm:$0xff]
    %v104 = vld [vmem:[%s0 + $0x40] sm:$0xff]
    %v105 = vld [vmem:[%s0 + $0x48] sm:$0xff]
    %v106 = vld [vmem:[%s0 + $0x50] sm:$0xff]
    %v107 = vld [vmem:[%s0 + $0x58] sm:$0xff]
    %v108 = vld [vmem:[%s0 + $0x60] sm:$0xff]
    %v109 = vld [vmem:[%s0 + $0x68] sm:$0xff]
    %v110 = vld [vmem:[%s0 + $0x70] sm:$0xff]
    %v111 = vld [vmem:[%s0 + $0x78] sm:$0xff]
    %v112 = vld [vmem:[#allocation2] sm:$0xff]
    %v113 = vld [vmem:[#allocation2 + $0x8] sm:$0xff]
    %v114 = vld [vmem:[#allocation2 + $0x10] sm:$0xff]
    %v115 = vld [vmem:[#allocation2 + $0x18] sm:$0xff]
    %v116 = vld [vmem:[#allocation2 + $0x20] sm:$0xff]
    %v117 = vld [vmem:[#allocation2 + $0x28] sm:$0xff]
    %v118 = vld [vmem:[#allocation2 + $0x30] sm:$0xff]
    %v119 = vld [vmem:[#allocation2 + $0x38] sm:$0xff]
    %v120 = vld [vmem:[#allocation2 + $0x40] sm:$0xff]
    %v121 = vld [vmem:[#allocation2 + $0x48] sm:$0xff]
    %v122 = vld [vmem:[#allocation2 + $0x50] sm:$0xff]
    %v123 = vld [vmem:[#allocation2 + $0x58] sm:$0xff]
    %v124 = vld [vmem:[#allocation2 + $0x60] sm:$0xff]
    %v125 = vld [vmem:[#allocation2 + $0x68] sm:$0xff]
    %v126 = vld [vmem:[#allocation2 + $0x70] sm:$0xff]
    %v127 = vld [vmem:[#allocation2 + $0x78] sm:$0xff]
    %v128 = vld [vmem:[#allocation2 + $0x80] sm:$0xff]
    %v129 = vld [vmem:[#allocation2 + $0x88] sm:$0xff]
    %v130 = vld [vmem:[#allocation2 + $0x90] sm:$0xff]
    %v131 = vld [vmem:[#allocation2 + $0x98] sm:$0xff]
    %v132 = vld [vmem:[#allocation2 + $0xa0] sm:$0xff]
    %v133 = vld [vmem:[#allocation2 + $0xa8] sm:$0xff]
    %v134 = vld [vmem:[#allocation2 + $0xb0] sm:$0xff]
    %v135 = vld [vmem:[#allocation2 + $0xb8] sm:$0xff]
    %v136 = vld [vmem:[#allocation10] ss:$8 sm:$0xf]
    %v137 = vld [vmem:[#allocation10] ss:$8 sm:$0xf0]
    %v138 = vor.u32 %v136, %v137
    %v140 = vlaneseq
    %v141 = vshrl.u32 %v140, 7
    %v142 = vsub.s32 0, %v141
    %v143 = vrot.slane %v138, %v142
    %v144 = vlaneseq
    %v145 = vshrl.u32 %v144, 7
    %v146 = vsub.s32 1, %v145
    %v147 = vrot.slane %v138, %v146
    %v148 = vlaneseq
    %v149 = vshrl.u32 %v148, 7
    %v150 = vsub.s32 2, %v149
    %v151 = vrot.slane %v138, %v150
    %v152 = vlaneseq
    %v153 = vshrl.u32 %v152, 7
    %v154 = vsub.s32 3, %v153
    %v155 = vrot.slane %v138, %v154
    %v156 = vlaneseq
    %v157 = vshrl.u32 %v156, 7
    %v158 = vsub.s32 4, %v157
    %v159 = vrot.slane %v138, %v158
    %v160 = vlaneseq
    %v161 = vshrl.u32 %v160, 7
    %v162 = vsub.s32 5, %v161
    %v163 = vrot.slane %v138, %v162
    %v164 = vlaneseq
    %v165 = vshrl.u32 %v164, 7
    %v166 = vsub.s32 6, %v165
    %v167 = vrot.slane %v138, %v166
    %v168 = vlaneseq
    %v169 = vshrl.u32 %v168, 7
    %v170 = vsub.s32 7, %v169
    %v171 = vrot.slane %v138, %v170
    %vm180 = vcmask 195584
    %v182 = vsel %vm180, %v96, 0
    %v185 = vsel %vm180, %v97, 0
    %v188 = vsel %vm180, %v98, 0
    %v191 = vsel %vm180, %v99, 0
    %v194 = vsel %vm180, %v100, 0
    %v197 = vsel %vm180, %v101, 0
    %v200 = vsel %vm180, %v102, 0
    %v203 = vsel %vm180, %v103, 0
    %v206 = vsel %vm180, %v104, 0
    %v209 = vsel %vm180, %v105, 0
    %v212 = vsel %vm180, %v106, 0
    %v215 = vsel %vm180, %v107, 0
    %v218 = vsel %vm180, %v108, 0
    %v221 = vsel %vm180, %v109, 0
    %v224 = vsel %vm180, %v110, 0
    %v227 = vsel %vm180, %v111, 0
    %229 = vmatprep.subr.mxu0 %v113
    %230 = vmatpush1.msra.mxu0 %v112
    %231 = vmatprep.subr.mxu0 %v121
    %232 = vmatpush1.msra.mxu0 %v120
    %233 = vmatprep.subr.mxu0 %v129
    %234 = vmatpush1.msra.mxu0 %v128
    %235 = vmatprep.subr.mxu0 0.0
    %236 = vmatpush1.msra.mxu0 0.0
    %237 = vmatprep.subr.mxu0 0.0
    %238 = vmatpush1.msra.mxu0 0.0
    %239 = vmatprep.subr.mxu0 0.0
    %240 = vmatpush1.msra.mxu0 0.0
    %241 = vmatprep.subr.mxu0 0.0
    %242 = vmatpush1.msra.mxu0 0.0
    %243 = vmatprep.subr.mxu0 0.0
    %244 = vmatpush1.msra.mxu0 0.0
    %245 = vmatprep.subr.mxu0 0.0
    %246 = vmatpush1.msra.mxu0 0.0
    %247 = vmatprep.subr.mxu0 0.0
    %248 = vmatpush1.msra.mxu0 0.0
    %249 = vmatprep.subr.mxu0 0.0
    %250 = vmatpush1.msra.mxu0 0.0
    %251 = vmatprep.subr.mxu0 0.0
    %252 = vmatpush1.msra.mxu0 0.0
    %253 = vmatprep.subr.mxu0 0.0
    %254 = vmatpush1.msra.mxu0 0.0
    %255 = vmatprep.subr.mxu0 0.0
    %256 = vmatpush1.msra.mxu0 0.0
    %257 = vmatprep.subr.mxu0 0.0
    %258 = vmatpush1.msra.mxu0 0.0
    %259 = vmatprep.subr.mxu0 0.0
    %260 = vmatpush1.msra.mxu0 0.0
    %261 = vmatprep.subr.mxu0 0.0
    %262 = vmatpush1.msra.mxu0 0.0
    %263 = vmatprep.subr.mxu0 0.0
    %264 = vmatpush1.msra.mxu0 0.0
    %265 = vmatprep.subr.mxu0 0.0
    %266 = vmatpush1.msra.mxu0 0.0
    %267 = vmatprep.subr.mxu0 0.0
    %268 = vmatpush1.msra.mxu0 0.0
    %269 = vmatprep.subr.mxu0 0.0
    %270 = vmatpush1.msra.mxu0 0.0
    %271 = vmatprep.subr.mxu0 0.0
    %272 = vmatpush1.msra.mxu0 0.0
    %273 = vmatprep.subr.mxu0 0.0
    %274 = vmatpush1.msra.mxu0 0.0
    %275 = vmatprep.subr.mxu0 0.0
    %276 = vmatpush1.msra.mxu0 0.0
    %277 = vmatprep.subr.mxu0 0.0
    %278 = vmatpush1.msra.mxu0 0.0
    %279 = vmatprep.subr.mxu0 0.0
    %280 = vmatpush1.msra.mxu0 0.0
    %281 = vmatprep.subr.mxu0 0.0
    %282 = vmatpush1.msra.mxu0 0.0
    %283 = vmatprep.subr.mxu0 0.0
    %284 = vmatpush1.msra.mxu0 0.0
    %285 = vmatprep.subr.mxu0 0.0
    %286 = vmatpush1.msra.mxu0 0.0
    %287 = vmatprep.subr.mxu0 0.0
    %288 = vmatpush1.msra.mxu0 0.0
    %289 = vmatprep.subr.mxu0 0.0
    %290 = vmatpush1.msra.mxu0 0.0
    %291 = vmatprep.subr.mxu0 0.0
    %292 = vmatpush1.msra.mxu0 0.0
    %293 = vmatprep.mubr.f32.mxu0 0.0
    %294 = vmatmul.mubr.f32.gmra.mrb[0].mxu0 %v182
    %v295 = vpop.f32.mrb[0].mxu0
    %v296 = vadd.f32 %v143, %v295
    %v297 = vpop.f32.mrb[0].mxu0
    %v298 = vadd.f32 %v147, %v297
    %299 = vmatprep.mubr.f32.mxu0 0.0
    %300 = vmatmul.mubr.f32.gmra.mrb[0].mxu0 %v185
    %v301 = vpop.f32.mrb[0].mxu0
    %v302 = vadd.f32 %v143, %v301
    %v303 = vpop.f32.mrb[0].mxu0
    %v304 = vadd.f32 %v147, %v303
    %305 = vmatprep.mubr.f32.mxu0 0.0
    %306 = vmatmul.mubr.f32.gmra.mrb[0].mxu0 %v188
    %v307 = vpop.f32.mrb[0].mxu0
    %v308 = vadd.f32 %v143, %v307
    %v309 = vpop.f32.mrb[0].mxu0
    %v310 = vadd.f32 %v147, %v309
    %311 = vmatprep.mubr.f32.mxu0 0.0
    %312 = vmatmul.mubr.f32.gmra.mrb[0].mxu0 %v191
    %v313 = vpop.f32.mrb[0].mxu0
    %v314 = vadd.f32 %v143, %v313
    %v315 = vpop.f32.mrb[0].mxu0
    %v316 = vadd.f32 %v147, %v315
    %317 = vmatprep.mubr.f32.mxu0 0.0
    %318 = vmatmul.mubr.f32.gmra.mrb[0].mxu0 %v194
    %v319 = vpop.f32.mrb[0].mxu0
    %v320 = vadd.f32 %v143, %v319
    %v321 = vpop.f32.mrb[0].mxu0
    %v322 = vadd.f32 %v147, %v321
    %323 = vmatprep.mubr.f32.mxu0 0.0
    %324 = vmatmul.mubr.f32.gmra.mrb[0].mxu0 %v197
    %v325 = vpop.f32.mrb[0].mxu0
    %v326 = vadd.f32 %v143, %v325
    %v327 = vpop.f32.mrb[0].mxu0
    %v328 = vadd.f32 %v147, %v327
    %329 = vmatprep.mubr.f32.mxu0 0.0
    %330 = vmatmul.mubr.f32.gmra.mrb[0].mxu0 %v200
    %v331 = vpop.f32.mrb[0].mxu0
    %v332 = vadd.f32 %v143, %v331
    %v333 = vpop.f32.mrb[0].mxu0
    %v334 = vadd.f32 %v147, %v333
    %335 = vmatprep.mubr.f32.mxu0 0.0
    %336 = vmatmul.mubr.f32.gmra.mrb[0].mxu0 %v203
    %v337 = vpop.f32.mrb[0].mxu0
    %v338 = vadd.f32 %v143, %v337
    %v339 = vpop.f32.mrb[0].mxu0
    %v340 = vadd.f32 %v147, %v339
    %341 = vmatprep.mubr.f32.mxu0 0.0
    %342 = vmatmul.mubr.f32.gmra.mrb[0].mxu0 %v206
    %v343 = vpop.f32.mrb[0].mxu0
    %v344 = vadd.f32 %v143, %v343
    %v345 = vpop.f32.mrb[0].mxu0
    %v346 = vadd.f32 %v147, %v345
    %347 = vmatprep.mubr.f32.mxu0 0.0
    %348 = vmatmul.mubr.f32.gmra.mrb[0].mxu0 %v209
    %v349 = vpop.f32.mrb[0].mxu0
    %v350 = vadd.f32 %v143, %v349
    %v351 = vpop.f32.mrb[0].mxu0
    %v352 = vadd.f32 %v147, %v351
    %353 = vmatprep.mubr.f32.mxu0 0.0
    %354 = vmatmul.mubr.f32.gmra.mrb[0].mxu0 %v212
    %v355 = vpop.f32.mrb[0].mxu0
    %v356 = vadd.f32 %v143, %v355
    %v357 = vpop.f32.mrb[0].mxu0
    %v358 = vadd.f32 %v147, %v357
    %359 = vmatprep.mubr.f32.mxu0 0.0
    %360 = vmatmul.mubr.f32.gmra.mrb[0].mxu0 %v215
    %v361 = vpop.f32.mrb[0].mxu0
    %v362 = vadd.f32 %v143, %v361
    %v363 = vpop.f32.mrb[0].mxu0
    %v364 = vadd.f32 %v147, %v363
    %365 = vmatprep.mubr.f32.mxu0 0.0
    %366 = vmatmul.mubr.f32.gmra.mrb[0].mxu0 %v218
    %v367 = vpop.f32.mrb[0].mxu0
    %v368 = vadd.f32 %v143, %v367
    %v369 = vpop.f32.mrb[0].mxu0
    %v370 = vadd.f32 %v147, %v369
    %371 = vmatprep.mubr.f32.mxu0 0.0
    %372 = vmatmul.mubr.f32.gmra.mrb[0].mxu0 %v221
    %v373 = vpop.f32.mrb[0].mxu0
    %v374 = vadd.f32 %v143, %v373
    %v375 = vpop.f32.mrb[0].mxu0
    %v376 = vadd.f32 %v147, %v375
    %377 = vmatprep.mubr.f32.mxu0 0.0
    %378 = vmatmul.mubr.f32.gmra.mrb[0].mxu0 %v224
    %v379 = vpop.f32.mrb[0].mxu0
    %v380 = vadd.f32 %v143, %v379
    %v381 = vpop.f32.mrb[0].mxu0
    %v382 = vadd.f32 %v147, %v381
    %383 = vmatprep.mubr.f32.mxu0 0.0
    %384 = vmatmul.mubr.f32.gmra.mrb[0].mxu0 %v227
    %v385 = vpop.f32.mrb[0].mxu0
    %v386 = vadd.f32 %v143, %v385
    %v387 = vpop.f32.mrb[0].mxu0
    %v388 = vadd.f32 %v147, %v387
    %389 = vdwg.mxu0
    %390 = vmatprep.subr.mxu0 %v115
    %391 = vmatpush1.msra.mxu0 %v114
    %392 = vmatprep.subr.mxu0 %v123
    %393 = vmatpush1.msra.mxu0 %v122
    %394 = vmatprep.subr.mxu0 %v131
    %395 = vmatpush1.msra.mxu0 %v130
    %396 = vmatprep.subr.mxu0 0.0
    %397 = vmatpush1.msra.mxu0 0.0
    %398 = vmatprep.subr.mxu0 0.0
    %399 = vmatpush1.msra.mxu0 0.0
    %400 = vmatprep.subr.mxu0 0.0
    %401 = vmatpush1.msra.mxu0 0.0
    %402 = vmatprep.subr.mxu0 0.0
    %403 = vmatpush1.msra.mxu0 0.0
    %404 = vmatprep.subr.mxu0 0.0
    %405 = vmatpush1.msra.mxu0 0.0
    %406 = vmatprep.subr.mxu0 0.0
    %407 = vmatpush1.msra.mxu0 0.0
    %408 = vmatprep.subr.mxu0 0.0
    %409 = vmatpush1.msra.mxu0 0.0
    %410 = vmatprep.subr.mxu0 0.0
    %411 = vmatpush1.msra.mxu0 0.0
    %412 = vmatprep.subr.mxu0 0.0
    %413 = vmatpush1.msra.mxu0 0.0
    %414 = vmatprep.subr.mxu0 0.0
    %415 = vmatpush1.msra.mxu0 0.0
    %416 = vmatprep.subr.mxu0 0.0
    %417 = vmatpush1.msra.mxu0 0.0
    %418 = vmatprep.subr.mxu0 0.0
    %419 = vmatpush1.msra.mxu0 0.0
    %420 = vmatprep.subr.mxu0 0.0
    %421 = vmatpush1.msra.mxu0 0.0
    %422 = vmatprep.subr.mxu0 0.0
    %423 = vmatpush1.msra.mxu0 0.0
    %424 = vmatprep.subr.mxu0 0.0
    %425 = vmatpush1.msra.mxu0 0.0
    %426 = vmatprep.subr.mxu0 0.0
    %427 = vmatpush1.msra.mxu0 0.0
    %428 = vmatprep.subr.mxu0 0.0
    %429 = vmatpush1.msra.mxu0 0.0
    %430 = vmatprep.subr.mxu0 0.0
    %431 = vmatpush1.msra.mxu0 0.0
    %432 = vmatprep.subr.mxu0 0.0
    %433 = vmatpush1.msra.mxu0 0.0
    %434 = vmatprep.subr.mxu0 0.0
    %435 = vmatpush1.msra.mxu0 0.0
    %436 = vmatprep.subr.mxu0 0.0
    %437 = vmatpush1.msra.mxu0 0.0
    %438 = vmatprep.subr.mxu0 0.0
    %439 = vmatpush1.msra.mxu0 0.0
    %440 = vmatprep.subr.mxu0 0.0
    %441 = vmatpush1.msra.mxu0 0.0
    %442 = vmatprep.subr.mxu0 0.0
    %443 = vmatpush1.msra.mxu0 0.0
    %444 = vmatprep.subr.mxu0 0.0
    %445 = vmatpush1.msra.mxu0 0.0
    %446 = vmatprep.subr.mxu0 0.0
    %447 = vmatpush1.msra.mxu0 0.0
    %448 = vmatprep.subr.mxu0 0.0
    %449 = vmatpush1.msra.mxu0 0.0
    %450 = vmatprep.subr.mxu0 0.0
    %451 = vmatpush1.msra.mxu0 0.0
    %452 = vmatprep.subr.mxu0 0.0
    %453 = vmatpush1.msra.mxu0 0.0
    %454 = vmatprep.mubr.f32.mxu0 0.0
    %455 = vmatmul.mubr.f32.gmra.mrb[0].mxu0 %v182
    %v456 = vpop.f32.mrb[0].mxu0
    %v457 = vadd.f32 %v151, %v456
    %v458 = vpop.f32.mrb[0].mxu0
    %v459 = vadd.f32 %v155, %v458
    %460 = vmatprep.mubr.f32.mxu0 0.0
    %461 = vmatmul.mubr.f32.gmra.mrb[0].mxu0 %v185
    %v462 = vpop.f32.mrb[0].mxu0
    %v463 = vadd.f32 %v151, %v462
    %v464 = vpop.f32.mrb[0].mxu0
    %v465 = vadd.f32 %v155, %v464
    %466 = vmatprep.mubr.f32.mxu0 0.0
    %467 = vmatmul.mubr.f32.gmra.mrb[0].mxu0 %v188
    %v468 = vpop.f32.mrb[0].mxu0
    %v469 = vadd.f32 %v151, %v468
    %v470 = vpop.f32.mrb[0].mxu0
    %v471 = vadd.f32 %v155, %v470
    %472 = vmatprep.mubr.f32.mxu0 0.0
    %473 = vmatmul.mubr.f32.gmra.mrb[0].mxu0 %v191
    %v474 = vpop.f32.mrb[0].mxu0
    %v475 = vadd.f32 %v151, %v474
    %v476 = vpop.f32.mrb[0].mxu0
    %v477 = vadd.f32 %v155, %v476
    %478 = vmatprep.mubr.f32.mxu0 0.0
    %479 = vmatmul.mubr.f32.gmra.mrb[0].mxu0 %v194
    %v480 = vpop.f32.mrb[0].mxu0
    %v481 = vadd.f32 %v151, %v480
    %v482 = vpop.f32.mrb[0].mxu0
    %v483 = vadd.f32 %v155, %v482
    %484 = vmatprep.mubr.f32.mxu0 0.0
    %485 = vmatmul.mubr.f32.gmra.mrb[0].mxu0 %v197
    %v486 = vpop.f32.mrb[0].mxu0
    %v487 = vadd.f32 %v151, %v486
    %v488 = vpop.f32.mrb[0].mxu0
    %v489 = vadd.f32 %v155, %v488
    %490 = vmatprep.mubr.f32.mxu0 0.0
    %491 = vmatmul.mubr.f32.gmra.mrb[0].mxu0 %v200
    %v492 = vpop.f32.mrb[0].mxu0
    %v493 = vadd.f32 %v151, %v492
    %v494 = vpop.f32.mrb[0].mxu0
    %v495 = vadd.f32 %v155, %v494
    %496 = vmatprep.mubr.f32.mxu0 0.0
    %497 = vmatmul.mubr.f32.gmra.mrb[0].mxu0 %v203
    %v498 = vpop.f32.mrb[0].mxu0
    %v499 = vadd.f32 %v151, %v498
    %v500 = vpop.f32.mrb[0].mxu0
    %v501 = vadd.f32 %v155, %v500
    %502 = vmatprep.mubr.f32.mxu0 0.0
    %503 = vmatmul.mubr.f32.gmra.mrb[0].mxu0 %v206
    %v504 = vpop.f32.mrb[0].mxu0
    %v505 = vadd.f32 %v151, %v504
    %v506 = vpop.f32.mrb[0].mxu0
    %v507 = vadd.f32 %v155, %v506
    %508 = vmatprep.mubr.f32.mxu0 0.0
    %509 = vmatmul.mubr.f32.gmra.mrb[0].mxu0 %v209
    %v510 = vpop.f32.mrb[0].mxu0
    %v511 = vadd.f32 %v151, %v510
    %v512 = vpop.f32.mrb[0].mxu0
    %v513 = vadd.f32 %v155, %v512
    %514 = vmatprep.mubr.f32.mxu0 0.0
    %515 = vmatmul.mubr.f32.gmra.mrb[0].mxu0 %v212
    %v516 = vpop.f32.mrb[0].mxu0
    %v517 = vadd.f32 %v151, %v516
    %v518 = vpop.f32.mrb[0].mxu0
    %v519 = vadd.f32 %v155, %v518
    %520 = vmatprep.mubr.f32.mxu0 0.0
    %521 = vmatmul.mubr.f32.gmra.mrb[0].mxu0 %v215
    %v522 = vpop.f32.mrb[0].mxu0
    %v523 = vadd.f32 %v151, %v522
    %v524 = vpop.f32.mrb[0].mxu0
    %v525 = vadd.f32 %v155, %v524
    %526 = vmatprep.mubr.f32.mxu0 0.0
    %527 = vmatmul.mubr.f32.gmra.mrb[0].mxu0 %v218
    %v528 = vpop.f32.mrb[0].mxu0
    %v529 = vadd.f32 %v151, %v528
    %v530 = vpop.f32.mrb[0].mxu0
    %v531 = vadd.f32 %v155, %v530
    %532 = vmatprep.mubr.f32.mxu0 0.0
    %533 = vmatmul.mubr.f32.gmra.mrb[0].mxu0 %v221
    %v534 = vpop.f32.mrb[0].mxu0
    %v535 = vadd.f32 %v151, %v534
    %v536 = vpop.f32.mrb[0].mxu0
    %v537 = vadd.f32 %v155, %v536
    %538 = vmatprep.mubr.f32.mxu0 0.0
    %539 = vmatmul.mubr.f32.gmra.mrb[0].mxu0 %v224
    %v540 = vpop.f32.mrb[0].mxu0
    %v541 = vadd.f32 %v151, %v540
    %v542 = vpop.f32.mrb[0].mxu0
    %v543 = vadd.f32 %v155, %v542
    %544 = vmatprep.mubr.f32.mxu0 0.0
    %545 = vmatmul.mubr.f32.gmra.mrb[0].mxu0 %v227
    %v546 = vpop.f32.mrb[0].mxu0
    %v547 = vadd.f32 %v151, %v546
    %v548 = vpop.f32.mrb[0].mxu0
    %v549 = vadd.f32 %v155, %v548
    %550 = vdwg.mxu0
    %551 = vmatprep.subr.mxu0 %v117
    %552 = vmatpush1.msra.mxu0 %v116
    %553 = vmatprep.subr.mxu0 %v125
    %554 = vmatpush1.msra.mxu0 %v124
    %555 = vmatprep.subr.mxu0 %v133
    %556 = vmatpush1.msra.mxu0 %v132
    %557 = vmatprep.subr.mxu0 0.0
    %558 = vmatpush1.msra.mxu0 0.0
    %559 = vmatprep.subr.mxu0 0.0
    %560 = vmatpush1.msra.mxu0 0.0
    %561 = vmatprep.subr.mxu0 0.0
    %562 = vmatpush1.msra.mxu0 0.0
    %563 = vmatprep.subr.mxu0 0.0
    %564 = vmatpush1.msra.mxu0 0.0
    %565 = vmatprep.subr.mxu0 0.0
    %566 = vmatpush1.msra.mxu0 0.0
    %567 = vmatprep.subr.mxu0 0.0
    %568 = vmatpush1.msra.mxu0 0.0
    %569 = vmatprep.subr.mxu0 0.0
    %570 = vmatpush1.msra.mxu0 0.0
    %571 = vmatprep.subr.mxu0 0.0
    %572 = vmatpush1.msra.mxu0 0.0
    %573 = vmatprep.subr.mxu0 0.0
    %574 = vmatpush1.msra.mxu0 0.0
    %575 = vmatprep.subr.mxu0 0.0
    %576 = vmatpush1.msra.mxu0 0.0
    %577 = vmatprep.subr.mxu0 0.0
    %578 = vmatpush1.msra.mxu0 0.0
    %579 = vmatprep.subr.mxu0 0.0
    %580 = vmatpush1.msra.mxu0 0.0
    %581 = vmatprep.subr.mxu0 0.0
    %582 = vmatpush1.msra.mxu0 0.0
    %583 = vmatprep.subr.mxu0 0.0
    %584 = vmatpush1.msra.mxu0 0.0
    %585 = vmatprep.subr.mxu0 0.0
    %586 = vmatpush1.msra.mxu0 0.0
    %587 = vmatprep.subr.mxu0 0.0
    %588 = vmatpush1.msra.mxu0 0.0
    %589 = vmatprep.subr.mxu0 0.0
    %590 = vmatpush1.msra.mxu0 0.0
    %591 = vmatprep.subr.mxu0 0.0
    %592 = vmatpush1.msra.mxu0 0.0
    %593 = vmatprep.subr.mxu0 0.0
    %594 = vmatpush1.msra.mxu0 0.0
    %595 = vmatprep.subr.mxu0 0.0
    %596 = vmatpush1.msra.mxu0 0.0
    %597 = vmatprep.subr.mxu0 0.0
    %598 = vmatpush1.msra.mxu0 0.0
    %599 = vmatprep.subr.mxu0 0.0
    %600 = vmatpush1.msra.mxu0 0.0
    %601 = vmatprep.subr.mxu0 0.0
    %602 = vmatpush1.msra.mxu0 0.0
    %603 = vmatprep.subr.mxu0 0.0
    %604 = vmatpush1.msra.mxu0 0.0
    %605 = vmatprep.subr.mxu0 0.0
    %606 = vmatpush1.msra.mxu0 0.0
    %607 = vmatprep.subr.mxu0 0.0
    %608 = vmatpush1.msra.mxu0 0.0
    %609 = vmatprep.subr.mxu0 0.0
    %610 = vmatpush1.msra.mxu0 0.0
    %611 = vmatprep.subr.mxu0 0.0
    %612 = vmatpush1.msra.mxu0 0.0
    %613 = vmatprep.subr.mxu0 0.0
    %614 = vmatpush1.msra.mxu0 0.0
    %615 = vmatprep.mubr.f32.mxu0 0.0
    %616 = vmatmul.mubr.f32.gmra.mrb[0].mxu0 %v182
    %v617 = vpop.f32.mrb[0].mxu0
    %v618 = vadd.f32 %v159, %v617
    %v619 = vpop.f32.mrb[0].mxu0
    %v620 = vadd.f32 %v163, %v619
    %621 = vmatprep.mubr.f32.mxu0 0.0
    %622 = vmatmul.mubr.f32.gmra.mrb[0].mxu0 %v185
    %v623 = vpop.f32.mrb[0].mxu0
    %v624 = vadd.f32 %v159, %v623
    %v625 = vpop.f32.mrb[0].mxu0
    %v626 = vadd.f32 %v163, %v625
    %627 = vmatprep.mubr.f32.mxu0 0.0
    %628 = vmatmul.mubr.f32.gmra.mrb[0].mxu0 %v188
    %v629 = vpop.f32.mrb[0].mxu0
    %v630 = vadd.f32 %v159, %v629
    %v631 = vpop.f32.mrb[0].mxu0
    %v632 = vadd.f32 %v163, %v631
    %633 = vmatprep.mubr.f32.mxu0 0.0
    %634 = vmatmul.mubr.f32.gmra.mrb[0].mxu0 %v191
    %v635 = vpop.f32.mrb[0].mxu0
    %v636 = vadd.f32 %v159, %v635
    %v637 = vpop.f32.mrb[0].mxu0
    %v638 = vadd.f32 %v163, %v637
    %639 = vmatprep.mubr.f32.mxu0 0.0
    %640 = vmatmul.mubr.f32.gmra.mrb[0].mxu0 %v194
    %v641 = vpop.f32.mrb[0].mxu0
    %v642 = vadd.f32 %v159, %v641
    %v643 = vpop.f32.mrb[0].mxu0
    %v644 = vadd.f32 %v163, %v643
    %645 = vmatprep.mubr.f32.mxu0 0.0
    %646 = vmatmul.mubr.f32.gmra.mrb[0].mxu0 %v197
    %v647 = vpop.f32.mrb[0].mxu0
    %v648 = vadd.f32 %v159, %v647
    %v649 = vpop.f32.mrb[0].mxu0
    %v650 = vadd.f32 %v163, %v649
    %651 = vmatprep.mubr.f32.mxu0 0.0
    %652 = vmatmul.mubr.f32.gmra.mrb[0].mxu0 %v200
    %v653 = vpop.f32.mrb[0].mxu0
    %v654 = vadd.f32 %v159, %v653
    %v655 = vpop.f32.mrb[0].mxu0
    %v656 = vadd.f32 %v163, %v655
    %657 = vmatprep.mubr.f32.mxu0 0.0
    %658 = vmatmul.mubr.f32.gmra.mrb[0].mxu0 %v203
    %v659 = vpop.f32.mrb[0].mxu0
    %v660 = vadd.f32 %v159, %v659
    %v661 = vpop.f32.mrb[0].mxu0
    %v662 = vadd.f32 %v163, %v661
    %663 = vmatprep.mubr.f32.mxu0 0.0
    %664 = vmatmul.mubr.f32.gmra.mrb[0].mxu0 %v206
    %v665 = vpop.f32.mrb[0].mxu0
    %v666 = vadd.f32 %v159, %v665
    %v667 = vpop.f32.mrb[0].mxu0
    %v668 = vadd.f32 %v163, %v667
    %669 = vmatprep.mubr.f32.mxu0 0.0
    %670 = vmatmul.mubr.f32.gmra.mrb[0].mxu0 %v209
    %v671 = vpop.f32.mrb[0].mxu0
    %v672 = vadd.f32 %v159, %v671
    %v673 = vpop.f32.mrb[0].mxu0
    %v674 = vadd.f32 %v163, %v673
    %675 = vmatprep.mubr.f32.mxu0 0.0
    %676 = vmatmul.mubr.f32.gmra.mrb[0].mxu0 %v212
    %v677 = vpop.f32.mrb[0].mxu0
    %v678 = vadd.f32 %v159, %v677
    %v679 = vpop.f32.mrb[0].mxu0
    %v680 = vadd.f32 %v163, %v679
    %681 = vmatprep.mubr.f32.mxu0 0.0
    %682 = vmatmul.mubr.f32.gmra.mrb[0].mxu0 %v215
    %v683 = vpop.f32.mrb[0].mxu0
    %v684 = vadd.f32 %v159, %v683
    %v685 = vpop.f32.mrb[0].mxu0
    %v686 = vadd.f32 %v163, %v685
    %687 = vmatprep.mubr.f32.mxu0 0.0
    %688 = vmatmul.mubr.f32.gmra.mrb[0].mxu0 %v218
    %v689 = vpop.f32.mrb[0].mxu0
    %v690 = vadd.f32 %v159, %v689
    %v691 = vpop.f32.mrb[0].mxu0
    %v692 = vadd.f32 %v163, %v691
    %693 = vmatprep.mubr.f32.mxu0 0.0
    %694 = vmatmul.mubr.f32.gmra.mrb[0].mxu0 %v221
    %v695 = vpop.f32.mrb[0].mxu0
    %v696 = vadd.f32 %v159, %v695
    %v697 = vpop.f32.mrb[0].mxu0
    %v698 = vadd.f32 %v163, %v697
    %699 = vmatprep.mubr.f32.mxu0 0.0
    %700 = vmatmul.mubr.f32.gmra.mrb[0].mxu0 %v224
    %v701 = vpop.f32.mrb[0].mxu0
    %v702 = vadd.f32 %v159, %v701
    %v703 = vpop.f32.mrb[0].mxu0
    %v704 = vadd.f32 %v163, %v703
    %705 = vmatprep.mubr.f32.mxu0 0.0
    %706 = vmatmul.mubr.f32.gmra.mrb[0].mxu0 %v227
    %v707 = vpop.f32.mrb[0].mxu0
    %v708 = vadd.f32 %v159, %v707
    %v709 = vpop.f32.mrb[0].mxu0
    %v710 = vadd.f32 %v163, %v709
    %711 = vdwg.mxu0
    %712 = vmatprep.subr.mxu0 %v119
    %713 = vmatpush1.msra.mxu0 %v118
    %714 = vmatprep.subr.mxu0 %v127
    %715 = vmatpush1.msra.mxu0 %v126
    %716 = vmatprep.subr.mxu0 %v135
    %717 = vmatpush1.msra.mxu0 %v134
    %718 = vmatprep.subr.mxu0 0.0
    %719 = vmatpush1.msra.mxu0 0.0
    %720 = vmatprep.subr.mxu0 0.0
    %721 = vmatpush1.msra.mxu0 0.0
    %722 = vmatprep.subr.mxu0 0.0
    %723 = vmatpush1.msra.mxu0 0.0
    %724 = vmatprep.subr.mxu0 0.0
    %725 = vmatpush1.msra.mxu0 0.0
    %726 = vmatprep.subr.mxu0 0.0
    %727 = vmatpush1.msra.mxu0 0.0
    %728 = vmatprep.subr.mxu0 0.0
    %729 = vmatpush1.msra.mxu0 0.0
    %730 = vmatprep.subr.mxu0 0.0
    %731 = vmatpush1.msra.mxu0 0.0
    %732 = vmatprep.subr.mxu0 0.0
    %733 = vmatpush1.msra.mxu0 0.0
    %734 = vmatprep.subr.mxu0 0.0
    %735 = vmatpush1.msra.mxu0 0.0
    %736 = vmatprep.subr.mxu0 0.0
    %737 = vmatpush1.msra.mxu0 0.0
    %738 = vmatprep.subr.mxu0 0.0
    %739 = vmatpush1.msra.mxu0 0.0
    %740 = vmatprep.subr.mxu0 0.0
    %741 = vmatpush1.msra.mxu0 0.0
    %742 = vmatprep.subr.mxu0 0.0
    %743 = vmatpush1.msra.mxu0 0.0
    %744 = vmatprep.subr.mxu0 0.0
    %745 = vmatpush1.msra.mxu0 0.0
    %746 = vmatprep.subr.mxu0 0.0
    %747 = vmatpush1.msra.mxu0 0.0
    %748 = vmatprep.subr.mxu0 0.0
    %749 = vmatpush1.msra.mxu0 0.0
    %750 = vmatprep.subr.mxu0 0.0
    %751 = vmatpush1.msra.mxu0 0.0
    %752 = vmatprep.subr.mxu0 0.0
    %753 = vmatpush1.msra.mxu0 0.0
    %754 = vmatprep.subr.mxu0 0.0
    %755 = vmatpush1.msra.mxu0 0.0
    %756 = vmatprep.subr.mxu0 0.0
    %757 = vmatpush1.msra.mxu0 0.0
    %758 = vmatprep.subr.mxu0 0.0
    %759 = vmatpush1.msra.mxu0 0.0
    %760 = vmatprep.subr.mxu0 0.0
    %761 = vmatpush1.msra.mxu0 0.0
    %762 = vmatprep.subr.mxu0 0.0
    %763 = vmatpush1.msra.mxu0 0.0
    %764 = vmatprep.subr.mxu0 0.0
    %765 = vmatpush1.msra.mxu0 0.0
    %766 = vmatprep.subr.mxu0 0.0
    %767 = vmatpush1.msra.mxu0 0.0
    %768 = vmatprep.subr.mxu0 0.0
    %769 = vmatpush1.msra.mxu0 0.0
    %770 = vmatprep.subr.mxu0 0.0
    %771 = vmatpush1.msra.mxu0 0.0
    %772 = vmatprep.subr.mxu0 0.0
    %773 = vmatpush1.msra.mxu0 0.0
    %774 = vmatprep.subr.mxu0 0.0
    %775 = vmatpush1.msra.mxu0 0.0
    %776 = vmatprep.mubr.f32.mxu0 0.0
    %777 = vmatmul.mubr.f32.gmra.mrb[0].mxu0 %v182
    %v778 = vpop.f32.mrb[0].mxu0
    %v779 = vadd.f32 %v167, %v778
    %v780 = vpop.f32.mrb[0].mxu0
    %v781 = vadd.f32 %v171, %v780
    %782 = vmatprep.mubr.f32.mxu0 0.0
    %783 = vmatmul.mubr.f32.gmra.mrb[0].mxu0 %v185
    %v784 = vpop.f32.mrb[0].mxu0
    %v785 = vadd.f32 %v167, %v784
    %v786 = vpop.f32.mrb[0].mxu0
    %v787 = vadd.f32 %v171, %v786
    %788 = vmatprep.mubr.f32.mxu0 0.0
    %789 = vmatmul.mubr.f32.gmra.mrb[0].mxu0 %v188
    %v790 = vpop.f32.mrb[0].mxu0
    %v791 = vadd.f32 %v167, %v790
    %v792 = vpop.f32.mrb[0].mxu0
    %v793 = vadd.f32 %v171, %v792
    %794 = vmatprep.mubr.f32.mxu0 0.0
    %795 = vmatmul.mubr.f32.gmra.mrb[0].mxu0 %v191
    %v796 = vpop.f32.mrb[0].mxu0
    %v797 = vadd.f32 %v167, %v796
    %v798 = vpop.f32.mrb[0].mxu0
    %v799 = vadd.f32 %v171, %v798
    %800 = vmatprep.mubr.f32.mxu0 0.0
    %801 = vmatmul.mubr.f32.gmra.mrb[0].mxu0 %v194
    %v802 = vpop.f32.mrb[0].mxu0
    %v803 = vadd.f32 %v167, %v802
    %v804 = vpop.f32.mrb[0].mxu0
    %v805 = vadd.f32 %v171, %v804
    %806 = vmatprep.mubr.f32.mxu0 0.0
    %807 = vmatmul.mubr.f32.gmra.mrb[0].mxu0 %v197
    %v808 = vpop.f32.mrb[0].mxu0
    %v809 = vadd.f32 %v167, %v808
    %v810 = vpop.f32.mrb[0].mxu0
    %v811 = vadd.f32 %v171, %v810
    %812 = vmatprep.mubr.f32.mxu0 0.0
    %813 = vmatmul.mubr.f32.gmra.mrb[0].mxu0 %v200
    %v814 = vpop.f32.mrb[0].mxu0
    %v815 = vadd.f32 %v167, %v814
    %v816 = vpop.f32.mrb[0].mxu0
    %v817 = vadd.f32 %v171, %v816
    %818 = vmatprep.mubr.f32.mxu0 0.0
    %819 = vmatmul.mubr.f32.gmra.mrb[0].mxu0 %v203
    %v820 = vpop.f32.mrb[0].mxu0
    %v821 = vadd.f32 %v167, %v820
    %v822 = vpop.f32.mrb[0].mxu0
    %v823 = vadd.f32 %v171, %v822
    %824 = vmatprep.mubr.f32.mxu0 0.0
    %825 = vmatmul.mubr.f32.gmra.mrb[0].mxu0 %v206
    %v826 = vpop.f32.mrb[0].mxu0
    %v827 = vadd.f32 %v167, %v826
    %v828 = vpop.f32.mrb[0].mxu0
    %v829 = vadd.f32 %v171, %v828
    %830 = vmatprep.mubr.f32.mxu0 0.0
    %831 = vmatmul.mubr.f32.gmra.mrb[0].mxu0 %v209
    %v832 = vpop.f32.mrb[0].mxu0
    %v833 = vadd.f32 %v167, %v832
    %v834 = vpop.f32.mrb[0].mxu0
    %v835 = vadd.f32 %v171, %v834
    %836 = vmatprep.mubr.f32.mxu0 0.0
    %837 = vmatmul.mubr.f32.gmra.mrb[0].mxu0 %v212
    %v838 = vpop.f32.mrb[0].mxu0
    %v839 = vadd.f32 %v167, %v838
    %v840 = vpop.f32.mrb[0].mxu0
    %v841 = vadd.f32 %v171, %v840
    %842 = vmatprep.mubr.f32.mxu0 0.0
    %843 = vmatmul.mubr.f32.gmra.mrb[0].mxu0 %v215
    %v844 = vpop.f32.mrb[0].mxu0
    %v845 = vadd.f32 %v167, %v844
    %v846 = vpop.f32.mrb[0].mxu0
    %v847 = vadd.f32 %v171, %v846
    %848 = vmatprep.mubr.f32.mxu0 0.0
    %849 = vmatmul.mubr.f32.gmra.mrb[0].mxu0 %v218
    %v850 = vpop.f32.mrb[0].mxu0
    %v851 = vadd.f32 %v167, %v850
    %v852 = vpop.f32.mrb[0].mxu0
    %v853 = vadd.f32 %v171, %v852
    %854 = vmatprep.mubr.f32.mxu0 0.0
    %855 = vmatmul.mubr.f32.gmra.mrb[0].mxu0 %v221
    %v856 = vpop.f32.mrb[0].mxu0
    %v857 = vadd.f32 %v167, %v856
    %v858 = vpop.f32.mrb[0].mxu0
    %v859 = vadd.f32 %v171, %v858
    %860 = vmatprep.mubr.f32.mxu0 0.0
    %861 = vmatmul.mubr.f32.gmra.mrb[0].mxu0 %v224
    %v862 = vpop.f32.mrb[0].mxu0
    %v863 = vadd.f32 %v167, %v862
    %v864 = vpop.f32.mrb[0].mxu0
    %v865 = vadd.f32 %v171, %v864
    %866 = vmatprep.mubr.f32.mxu0 0.0
    %867 = vmatmul.mubr.f32.gmra.mrb[0].mxu0 %v227
    %v868 = vpop.f32.mrb[0].mxu0
    %v869 = vadd.f32 %v167, %v868
    %v870 = vpop.f32.mrb[0].mxu0
    %v871 = vadd.f32 %v171, %v870
    %872 = vdwg.mxu0
    %v873 = vmax.f32 %v296, 0.0
    %v874 = vmax.f32 %v298, 0.0
    %v875 = vmax.f32 %v457, 0.0
    %v876 = vmax.f32 %v459, 0.0
    %v877 = vmax.f32 %v618, 0.0
    %v878 = vmax.f32 %v620, 0.0
    %v879 = vmax.f32 %v779, 0.0
    %v880 = vmax.f32 %v781, 0.0
    %v881 = vmax.f32 %v302, 0.0
    %v882 = vmax.f32 %v304, 0.0
    %v883 = vmax.f32 %v463, 0.0
    %v884 = vmax.f32 %v465, 0.0
    %v885 = vmax.f32 %v624, 0.0
    %v886 = vmax.f32 %v626, 0.0
    %v887 = vmax.f32 %v785, 0.0
    %v888 = vmax.f32 %v787, 0.0
    %v889 = vmax.f32 %v308, 0.0
    %v890 = vmax.f32 %v310, 0.0
    %v891 = vmax.f32 %v469, 0.0
    %v892 = vmax.f32 %v471, 0.0
    %v893 = vmax.f32 %v630, 0.0
    %v894 = vmax.f32 %v632, 0.0
    %v895 = vmax.f32 %v791, 0.0
    %v896 = vmax.f32 %v793, 0.0
    %v897 = vmax.f32 %v314, 0.0
    %v898 = vmax.f32 %v316, 0.0
    %v899 = vmax.f32 %v475, 0.0
    %v900 = vmax.f32 %v477, 0.0
    %v901 = vmax.f32 %v636, 0.0
    %v902 = vmax.f32 %v638, 0.0
    %v903 = vmax.f32 %v797, 0.0
    %v904 = vmax.f32 %v799, 0.0
    %v905 = vmax.f32 %v320, 0.0
    %v906 = vmax.f32 %v322, 0.0
    %v907 = vmax.f32 %v481, 0.0
    %v908 = vmax.f32 %v483, 0.0
    %v909 = vmax.f32 %v642, 0.0
    %v910 = vmax.f32 %v644, 0.0
    %v911 = vmax.f32 %v803, 0.0
    %v912 = vmax.f32 %v805, 0.0
    %v913 = vmax.f32 %v326, 0.0
    %v914 = vmax.f32 %v328, 0.0
    %v915 = vmax.f32 %v487, 0.0
    %v916 = vmax.f32 %v489, 0.0
    %v917 = vmax.f32 %v648, 0.0
    %v918 = vmax.f32 %v650, 0.0
    %v919 = vmax.f32 %v809, 0.0
    %v920 = vmax.f32 %v811, 0.0
    %v921 = vmax.f32 %v332, 0.0
    %v922 = vmax.f32 %v334, 0.0
    %v923 = vmax.f32 %v493, 0.0
    %v924 = vmax.f32 %v495, 0.0
    %v925 = vmax.f32 %v654, 0.0
    %v926 = vmax.f32 %v656, 0.0
    %v927 = vmax.f32 %v815, 0.0
    %v928 = vmax.f32 %v817, 0.0
    %v929 = vmax.f32 %v338, 0.0
    %v930 = vmax.f32 %v340, 0.0
    %v931 = vmax.f32 %v499, 0.0
    %v932 = vmax.f32 %v501, 0.0
    %v933 = vmax.f32 %v660, 0.0
    %v934 = vmax.f32 %v662, 0.0
    %v935 = vmax.f32 %v821, 0.0
    %v936 = vmax.f32 %v823, 0.0
    %v937 = vmax.f32 %v344, 0.0
    %v938 = vmax.f32 %v346, 0.0
    %v939 = vmax.f32 %v505, 0.0
    %v940 = vmax.f32 %v507, 0.0
    %v941 = vmax.f32 %v666, 0.0
    %v942 = vmax.f32 %v668, 0.0
    %v943 = vmax.f32 %v827, 0.0
    %v944 = vmax.f32 %v829, 0.0
    %v945 = vmax.f32 %v350, 0.0
    %v946 = vmax.f32 %v352, 0.0
    %v947 = vmax.f32 %v511, 0.0
    %v948 = vmax.f32 %v513, 0.0
    %v949 = vmax.f32 %v672, 0.0
    %v950 = vmax.f32 %v674, 0.0
    %v951 = vmax.f32 %v833, 0.0
    %v952 = vmax.f32 %v835, 0.0
    %v953 = vmax.f32 %v356, 0.0
    %v954 = vmax.f32 %v358, 0.0
    %v955 = vmax.f32 %v517, 0.0
    %v956 = vmax.f32 %v519, 0.0
    %v957 = vmax.f32 %v678, 0.0
    %v958 = vmax.f32 %v680, 0.0
    %v959 = vmax.f32 %v839, 0.0
    %v960 = vmax.f32 %v841, 0.0
    %v961 = vmax.f32 %v362, 0.0
    %v962 = vmax.f32 %v364, 0.0
    %v963 = vmax.f32 %v523, 0.0
    %v964 = vmax.f32 %v525, 0.0
    %v965 = vmax.f32 %v684, 0.0
    %v966 = vmax.f32 %v686, 0.0
    %v967 = vmax.f32 %v845, 0.0
    %v968 = vmax.f32 %v847, 0.0
    %v969 = vmax.f32 %v368, 0.0
    %v970 = vmax.f32 %v370, 0.0
    %v971 = vmax.f32 %v529, 0.0
    %v972 = vmax.f32 %v531, 0.0
    %v973 = vmax.f32 %v690, 0.0
    %v974 = vmax.f32 %v692, 0.0
    %v975 = vmax.f32 %v851, 0.0
    %v976 = vmax.f32 %v853, 0.0
    %v977 = vmax.f32 %v374, 0.0
    %v978 = vmax.f32 %v376, 0.0
    %v979 = vmax.f32 %v535, 0.0
    %v980 = vmax.f32 %v537, 0.0
    %v981 = vmax.f32 %v696, 0.0
    %v982 = vmax.f32 %v698, 0.0
    %v983 = vmax.f32 %v857, 0.0
    %v984 = vmax.f32 %v859, 0.0
    %v985 = vmax.f32 %v380, 0.0
    %v986 = vmax.f32 %v382, 0.0
    %v987 = vmax.f32 %v541, 0.0
    %v988 = vmax.f32 %v543, 0.0
    %v989 = vmax.f32 %v702, 0.0
    %v990 = vmax.f32 %v704, 0.0
    %v991 = vmax.f32 %v863, 0.0
    %v992 = vmax.f32 %v865, 0.0
    %v993 = vmax.f32 %v386, 0.0
    %v994 = vmax.f32 %v388, 0.0
    %v995 = vmax.f32 %v547, 0.0
    %v996 = vmax.f32 %v549, 0.0
    %v997 = vmax.f32 %v708, 0.0
    %v998 = vmax.f32 %v710, 0.0
    %v999 = vmax.f32 %v869, 0.0
    %v1000 = vmax.f32 %v871, 0.0
    %v1001 = vld [vmem:[#allocation5] sm:$0xff]
    %v1002 = vld [vmem:[#allocation5 + $0x8] sm:$0xff]
    %v1003 = vld [vmem:[#allocation5 + $0x10] sm:$0xff]
    %v1004 = vld [vmem:[#allocation5 + $0x18] sm:$0xff]
    %v1005 = vld [vmem:[#allocation5 + $0x20] sm:$0xff]
    %v1006 = vld [vmem:[#allocation5 + $0x28] sm:$0xff]
    %v1007 = vld [vmem:[#allocation5 + $0x30] sm:$0xff]
    %v1008 = vld [vmem:[#allocation5 + $0x38] sm:$0xff]
    %v1009 = vld [vmem:[#allocation5 + $0x40] sm:$0xff]
    %v1010 = vld [vmem:[#allocation5 + $0x48] sm:$0xff]
    %v1011 = vld [vmem:[#allocation5 + $0x50] sm:$0xff]
    %v1012 = vld [vmem:[#allocation5 + $0x58] sm:$0xff]
    %v1013 = vld [vmem:[#allocation5 + $0x60] sm:$0xff]
    %v1014 = vld [vmem:[#allocation5 + $0x68] sm:$0xff]
    %v1015 = vld [vmem:[#allocation5 + $0x70] sm:$0xff]
    %v1016 = vld [vmem:[#allocation5 + $0x78] sm:$0xff]
    %v1017 = vld [vmem:[#allocation5 + $0x80] sm:$0xff]
    %v1018 = vld [vmem:[#allocation5 + $0x88] sm:$0xff]
    %v1019 = vld [vmem:[#allocation5 + $0x90] sm:$0xff]
    %v1020 = vld [vmem:[#allocation5 + $0x98] sm:$0xff]
    %v1021 = vld [vmem:[#allocation5 + $0xa0] sm:$0xff]
    %v1022 = vld [vmem:[#allocation5 + $0xa8] sm:$0xff]
    %v1023 = vld [vmem:[#allocation5 + $0xb0] sm:$0xff]
    %v1024 = vld [vmem:[#allocation5 + $0xb8] sm:$0xff]
    %v1025 = vld [vmem:[#allocation5 + $0xc0] sm:$0xff]
    %v1026 = vld [vmem:[#allocation5 + $0xc8] sm:$0xff]
    %v1027 = vld [vmem:[#allocation5 + $0xd0] sm:$0xff]
    %v1028 = vld [vmem:[#allocation5 + $0xd8] sm:$0xff]
    %v1029 = vld [vmem:[#allocation5 + $0xe0] sm:$0xff]
    %v1030 = vld [vmem:[#allocation5 + $0xe8] sm:$0xff]
    %v1031 = vld [vmem:[#allocation5 + $0xf0] sm:$0xff]
    %v1032 = vld [vmem:[#allocation5 + $0xf8] sm:$0xff]
    %v1033 = vld [vmem:[#allocation5 + $0x100] sm:$0xff]
    %v1034 = vld [vmem:[#allocation5 + $0x108] sm:$0xff]
    %v1035 = vld [vmem:[#allocation5 + $0x110] sm:$0xff]
    %v1036 = vld [vmem:[#allocation5 + $0x118] sm:$0xff]
    %v1037 = vld [vmem:[#allocation5 + $0x120] sm:$0xff]
    %v1038 = vld [vmem:[#allocation5 + $0x128] sm:$0xff]
    %v1039 = vld [vmem:[#allocation5 + $0x130] sm:$0xff]
    %v1040 = vld [vmem:[#allocation5 + $0x138] sm:$0xff]
    %v1041 = vld [vmem:[#allocation5 + $0x140] sm:$0xff]
    %v1042 = vld [vmem:[#allocation5 + $0x148] sm:$0xff]
    %v1043 = vld [vmem:[#allocation5 + $0x150] sm:$0xff]
    %v1044 = vld [vmem:[#allocation5 + $0x158] sm:$0xff]
    %v1045 = vld [vmem:[#allocation5 + $0x160] sm:$0xff]
    %v1046 = vld [vmem:[#allocation5 + $0x168] sm:$0xff]
    %v1047 = vld [vmem:[#allocation5 + $0x170] sm:$0xff]
    %v1048 = vld [vmem:[#allocation5 + $0x178] sm:$0xff]
    %v1049 = vld [vmem:[#allocation5 + $0x180] sm:$0xff]
    %v1050 = vld [vmem:[#allocation5 + $0x188] sm:$0xff]
    %v1051 = vld [vmem:[#allocation5 + $0x190] sm:$0xff]
    %v1052 = vld [vmem:[#allocation5 + $0x198] sm:$0xff]
    %v1053 = vld [vmem:[#allocation5 + $0x1a0] sm:$0xff]
    %v1054 = vld [vmem:[#allocation5 + $0x1a8] sm:$0xff]
    %v1055 = vld [vmem:[#allocation5 + $0x1b0] sm:$0xff]
    %v1056 = vld [vmem:[#allocation5 + $0x1b8] sm:$0xff]
    %v1057 = vld [vmem:[#allocation5 + $0x1c0] sm:$0xff]
    %v1058 = vld [vmem:[#allocation5 + $0x1c8] sm:$0xff]
    %v1059 = vld [vmem:[#allocation5 + $0x1d0] sm:$0xff]
    %v1060 = vld [vmem:[#allocation5 + $0x1d8] sm:$0xff]
    %v1061 = vld [vmem:[#allocation5 + $0x1e0] sm:$0xff]
    %v1062 = vld [vmem:[#allocation5 + $0x1e8] sm:$0xff]
    %v1063 = vld [vmem:[#allocation5 + $0x1f0] sm:$0xff]
    %v1064 = vld [vmem:[#allocation5 + $0x1f8] sm:$0xff]
    %v1065 = vld [vmem:[#allocation5 + $0x200] sm:$0xff]
    %v1066 = vld [vmem:[#allocation5 + $0x208] sm:$0xff]
    %v1067 = vld [vmem:[#allocation5 + $0x210] sm:$0xff]
    %v1068 = vld [vmem:[#allocation5 + $0x218] sm:$0xff]
    %v1069 = vld [vmem:[#allocation5 + $0x220] sm:$0xff]
    %v1070 = vld [vmem:[#allocation5 + $0x228] sm:$0xff]
    %v1071 = vld [vmem:[#allocation5 + $0x230] sm:$0xff]
    %v1072 = vld [vmem:[#allocation5 + $0x238] sm:$0xff]
    %v1073 = vld [vmem:[#allocation5 + $0x240] sm:$0xff]
    %v1074 = vld [vmem:[#allocation5 + $0x248] sm:$0xff]
    %v1075 = vld [vmem:[#allocation5 + $0x250] sm:$0xff]
    %v1076 = vld [vmem:[#allocation5 + $0x258] sm:$0xff]
    %v1077 = vld [vmem:[#allocation5 + $0x260] sm:$0xff]
    %v1078 = vld [vmem:[#allocation5 + $0x268] sm:$0xff]
    %v1079 = vld [vmem:[#allocation5 + $0x270] sm:$0xff]
    %v1080 = vld [vmem:[#allocation5 + $0x278] sm:$0xff]
    %v1081 = vld [vmem:[#allocation5 + $0x280] sm:$0xff]
    %v1082 = vld [vmem:[#allocation5 + $0x288] sm:$0xff]
    %v1083 = vld [vmem:[#allocation5 + $0x290] sm:$0xff]
    %v1084 = vld [vmem:[#allocation5 + $0x298] sm:$0xff]
    %v1085 = vld [vmem:[#allocation5 + $0x2a0] sm:$0xff]
    %v1086 = vld [vmem:[#allocation5 + $0x2a8] sm:$0xff]
    %v1087 = vld [vmem:[#allocation5 + $0x2b0] sm:$0xff]
    %v1088 = vld [vmem:[#allocation5 + $0x2b8] sm:$0xff]
    %v1089 = vld [vmem:[#allocation5 + $0x2c0] sm:$0xff]
    %v1090 = vld [vmem:[#allocation5 + $0x2c8] sm:$0xff]
    %v1091 = vld [vmem:[#allocation5 + $0x2d0] sm:$0xff]
    %v1092 = vld [vmem:[#allocation5 + $0x2d8] sm:$0xff]
    %v1093 = vld [vmem:[#allocation5 + $0x2e0] sm:$0xff]
    %v1094 = vld [vmem:[#allocation5 + $0x2e8] sm:$0xff]
    %v1095 = vld [vmem:[#allocation5 + $0x2f0] sm:$0xff]
    %v1096 = vld [vmem:[#allocation5 + $0x2f8] sm:$0xff]
    %v1097 = vld [vmem:[#allocation5 + $0x300] sm:$0xff]
    %v1098 = vld [vmem:[#allocation5 + $0x308] sm:$0xff]
    %v1099 = vld [vmem:[#allocation5 + $0x310] sm:$0xff]
    %v1100 = vld [vmem:[#allocation5 + $0x318] sm:$0xff]
    %v1101 = vld [vmem:[#allocation5 + $0x320] sm:$0xff]
    %v1102 = vld [vmem:[#allocation5 + $0x328] sm:$0xff]
    %v1103 = vld [vmem:[#allocation5 + $0x330] sm:$0xff]
    %v1104 = vld [vmem:[#allocation5 + $0x338] sm:$0xff]
    %v1105 = vld [vmem:[#allocation5 + $0x340] sm:$0xff]
    %v1106 = vld [vmem:[#allocation5 + $0x348] sm:$0xff]
    %v1107 = vld [vmem:[#allocation5 + $0x350] sm:$0xff]
    %v1108 = vld [vmem:[#allocation5 + $0x358] sm:$0xff]
    %v1109 = vld [vmem:[#allocation5 + $0x360] sm:$0xff]
    %v1110 = vld [vmem:[#allocation5 + $0x368] sm:$0xff]
    %v1111 = vld [vmem:[#allocation5 + $0x370] sm:$0xff]
    %v1112 = vld [vmem:[#allocation5 + $0x378] sm:$0xff]
    %v1113 = vld [vmem:[#allocation5 + $0x380] sm:$0xff]
    %v1114 = vld [vmem:[#allocation5 + $0x388] sm:$0xff]
    %v1115 = vld [vmem:[#allocation5 + $0x390] sm:$0xff]
    %v1116 = vld [vmem:[#allocation5 + $0x398] sm:$0xff]
    %v1117 = vld [vmem:[#allocation5 + $0x3a0] sm:$0xff]
    %v1118 = vld [vmem:[#allocation5 + $0x3a8] sm:$0xff]
    %v1119 = vld [vmem:[#allocation5 + $0x3b0] sm:$0xff]
    %v1120 = vld [vmem:[#allocation5 + $0x3b8] sm:$0xff]
    %v1121 = vld [vmem:[#allocation5 + $0x3c0] sm:$0xff]
    %v1122 = vld [vmem:[#allocation5 + $0x3c8] sm:$0xff]
    %v1123 = vld [vmem:[#allocation5 + $0x3d0] sm:$0xff]
    %v1124 = vld [vmem:[#allocation5 + $0x3d8] sm:$0xff]
    %v1125 = vld [vmem:[#allocation5 + $0x3e0] sm:$0xff]
    %v1126 = vld [vmem:[#allocation5 + $0x3e8] sm:$0xff]
    %v1127 = vld [vmem:[#allocation5 + $0x3f0] sm:$0xff]
    %v1128 = vld [vmem:[#allocation5 + $0x3f8] sm:$0xff]
    %v1129 = vld [vmem:[#allocation5 + $0x400] sm:$0xff]
    %v1130 = vld [vmem:[#allocation5 + $0x408] sm:$0xff]
    %v1131 = vld [vmem:[#allocation5 + $0x410] sm:$0xff]
    %v1132 = vld [vmem:[#allocation5 + $0x418] sm:$0xff]
    %v1133 = vld [vmem:[#allocation5 + $0x420] sm:$0xff]
    %v1134 = vld [vmem:[#allocation5 + $0x428] sm:$0xff]
    %v1135 = vld [vmem:[#allocation5 + $0x430] sm:$0xff]
    %v1136 = vld [vmem:[#allocation5 + $0x438] sm:$0xff]
    %v1137 = vld [vmem:[#allocation5 + $0x440] sm:$0xff]
    %v1138 = vld [vmem:[#allocation5 + $0x448] sm:$0xff]
    %v1139 = vld [vmem:[#allocation5 + $0x450] sm:$0xff]
    %v1140 = vld [vmem:[#allocation5 + $0x458] sm:$0xff]
    %v1141 = vld [vmem:[#allocation5 + $0x460] sm:$0xff]
    %v1142 = vld [vmem:[#allocation5 + $0x468] sm:$0xff]
    %v1143 = vld [vmem:[#allocation5 + $0x470] sm:$0xff]
    %v1144 = vld [vmem:[#allocation5 + $0x478] sm:$0xff]
    %v1145 = vld [vmem:[#allocation5 + $0x480] sm:$0xff]
    %v1146 = vld [vmem:[#allocation5 + $0x488] sm:$0xff]
    %v1147 = vld [vmem:[#allocation5 + $0x490] sm:$0xff]
    %v1148 = vld [vmem:[#allocation5 + $0x498] sm:$0xff]
    %v1149 = vld [vmem:[#allocation5 + $0x4a0] sm:$0xff]
    %v1150 = vld [vmem:[#allocation5 + $0x4a8] sm:$0xff]
    %v1151 = vld [vmem:[#allocation5 + $0x4b0] sm:$0xff]
    %v1152 = vld [vmem:[#allocation5 + $0x4b8] sm:$0xff]
    %v1153 = vld [vmem:[#allocation5 + $0x4c0] sm:$0xff]
    %v1154 = vld [vmem:[#allocation5 + $0x4c8] sm:$0xff]
    %v1155 = vld [vmem:[#allocation5 + $0x4d0] sm:$0xff]
    %v1156 = vld [vmem:[#allocation5 + $0x4d8] sm:$0xff]
    %v1157 = vld [vmem:[#allocation5 + $0x4e0] sm:$0xff]
    %v1158 = vld [vmem:[#allocation5 + $0x4e8] sm:$0xff]
    %v1159 = vld [vmem:[#allocation5 + $0x4f0] sm:$0xff]
    %v1160 = vld [vmem:[#allocation5 + $0x4f8] sm:$0xff]
    %v1161 = vld [vmem:[#allocation5 + $0x500] sm:$0xff]
    %v1162 = vld [vmem:[#allocation5 + $0x508] sm:$0xff]
    %v1163 = vld [vmem:[#allocation5 + $0x510] sm:$0xff]
    %v1164 = vld [vmem:[#allocation5 + $0x518] sm:$0xff]
    %v1165 = vld [vmem:[#allocation5 + $0x520] sm:$0xff]
    %v1166 = vld [vmem:[#allocation5 + $0x528] sm:$0xff]
    %v1167 = vld [vmem:[#allocation5 + $0x530] sm:$0xff]
    %v1168 = vld [vmem:[#allocation5 + $0x538] sm:$0xff]
    %v1169 = vld [vmem:[#allocation5 + $0x540] sm:$0xff]
    %v1170 = vld [vmem:[#allocation5 + $0x548] sm:$0xff]
    %v1171 = vld [vmem:[#allocation5 + $0x550] sm:$0xff]
    %v1172 = vld [vmem:[#allocation5 + $0x558] sm:$0xff]
    %v1173 = vld [vmem:[#allocation5 + $0x560] sm:$0xff]
    %v1174 = vld [vmem:[#allocation5 + $0x568] sm:$0xff]
    %v1175 = vld [vmem:[#allocation5 + $0x570] sm:$0xff]
    %v1176 = vld [vmem:[#allocation5 + $0x578] sm:$0xff]
    %v1177 = vld [vmem:[#allocation5 + $0x580] sm:$0xff]
    %v1178 = vld [vmem:[#allocation5 + $0x588] sm:$0xff]
    %v1179 = vld [vmem:[#allocation5 + $0x590] sm:$0xff]
    %v1180 = vld [vmem:[#allocation5 + $0x598] sm:$0xff]
    %v1181 = vld [vmem:[#allocation5 + $0x5a0] sm:$0xff]
    %v1182 = vld [vmem:[#allocation5 + $0x5a8] sm:$0xff]
    %v1183 = vld [vmem:[#allocation5 + $0x5b0] sm:$0xff]
    %v1184 = vld [vmem:[#allocation5 + $0x5b8] sm:$0xff]
    %v1185 = vld [vmem:[#allocation5 + $0x5c0] sm:$0xff]
    %v1186 = vld [vmem:[#allocation5 + $0x5c8] sm:$0xff]
    %v1187 = vld [vmem:[#allocation5 + $0x5d0] sm:$0xff]
    %v1188 = vld [vmem:[#allocation5 + $0x5d8] sm:$0xff]
    %v1189 = vld [vmem:[#allocation5 + $0x5e0] sm:$0xff]
    %v1190 = vld [vmem:[#allocation5 + $0x5e8] sm:$0xff]
    %v1191 = vld [vmem:[#allocation5 + $0x5f0] sm:$0xff]
    %v1192 = vld [vmem:[#allocation5 + $0x5f8] sm:$0xff]
    %v1193 = vld [vmem:[#allocation5 + $0x600] sm:$0xff]
    %v1194 = vld [vmem:[#allocation5 + $0x608] sm:$0xff]
    %v1195 = vld [vmem:[#allocation5 + $0x610] sm:$0xff]
    %v1196 = vld [vmem:[#allocation5 + $0x618] sm:$0xff]
    %v1197 = vld [vmem:[#allocation5 + $0x620] sm:$0xff]
    %v1198 = vld [vmem:[#allocation5 + $0x628] sm:$0xff]
    %v1199 = vld [vmem:[#allocation5 + $0x630] sm:$0xff]
    %v1200 = vld [vmem:[#allocation5 + $0x638] sm:$0xff]
    %v1201 = vld [vmem:[#allocation5 + $0x640] sm:$0xff]
    %v1202 = vld [vmem:[#allocation5 + $0x648] sm:$0xff]
    %v1203 = vld [vmem:[#allocation5 + $0x650] sm:$0xff]
    %v1204 = vld [vmem:[#allocation5 + $0x658] sm:$0xff]
    %v1205 = vld [vmem:[#allocation5 + $0x660] sm:$0xff]
    %v1206 = vld [vmem:[#allocation5 + $0x668] sm:$0xff]
    %v1207 = vld [vmem:[#allocation5 + $0x670] sm:$0xff]
    %v1208 = vld [vmem:[#allocation5 + $0x678] sm:$0xff]
    %v1209 = vld [vmem:[#allocation5 + $0x680] sm:$0xff]
    %v1210 = vld [vmem:[#allocation5 + $0x688] sm:$0xff]
    %v1211 = vld [vmem:[#allocation5 + $0x690] sm:$0xff]
    %v1212 = vld [vmem:[#allocation5 + $0x698] sm:$0xff]
    %v1213 = vld [vmem:[#allocation5 + $0x6a0] sm:$0xff]
    %v1214 = vld [vmem:[#allocation5 + $0x6a8] sm:$0xff]
    %v1215 = vld [vmem:[#allocation5 + $0x6b0] sm:$0xff]
    %v1216 = vld [vmem:[#allocation5 + $0x6b8] sm:$0xff]
    %v1217 = vld [vmem:[#allocation5 + $0x6c0] sm:$0xff]
    %v1218 = vld [vmem:[#allocation5 + $0x6c8] sm:$0xff]
    %v1219 = vld [vmem:[#allocation5 + $0x6d0] sm:$0xff]
    %v1220 = vld [vmem:[#allocation5 + $0x6d8] sm:$0xff]
    %v1221 = vld [vmem:[#allocation5 + $0x6e0] sm:$0xff]
    %v1222 = vld [vmem:[#allocation5 + $0x6e8] sm:$0xff]
    %v1223 = vld [vmem:[#allocation5 + $0x6f0] sm:$0xff]
    %v1224 = vld [vmem:[#allocation5 + $0x6f8] sm:$0xff]
    %v1225 = vld [vmem:[#allocation5 + $0x700] sm:$0xff]
    %v1226 = vld [vmem:[#allocation5 + $0x708] sm:$0xff]
    %v1227 = vld [vmem:[#allocation5 + $0x710] sm:$0xff]
    %v1228 = vld [vmem:[#allocation5 + $0x718] sm:$0xff]
    %v1229 = vld [vmem:[#allocation5 + $0x720] sm:$0xff]
    %v1230 = vld [vmem:[#allocation5 + $0x728] sm:$0xff]
    %v1231 = vld [vmem:[#allocation5 + $0x730] sm:$0xff]
    %v1232 = vld [vmem:[#allocation5 + $0x738] sm:$0xff]
    %v1233 = vld [vmem:[#allocation5 + $0x740] sm:$0xff]
    %v1234 = vld [vmem:[#allocation5 + $0x748] sm:$0xff]
    %v1235 = vld [vmem:[#allocation5 + $0x750] sm:$0xff]
    %v1236 = vld [vmem:[#allocation5 + $0x758] sm:$0xff]
    %v1237 = vld [vmem:[#allocation5 + $0x760] sm:$0xff]
    %v1238 = vld [vmem:[#allocation5 + $0x768] sm:$0xff]
    %v1239 = vld [vmem:[#allocation5 + $0x770] sm:$0xff]
    %v1240 = vld [vmem:[#allocation5 + $0x778] sm:$0xff]
    %v1241 = vld [vmem:[#allocation5 + $0x780] sm:$0xff]
    %v1242 = vld [vmem:[#allocation5 + $0x788] sm:$0xff]
    %v1243 = vld [vmem:[#allocation5 + $0x790] sm:$0xff]
    %v1244 = vld [vmem:[#allocation5 + $0x798] sm:$0xff]
    %v1245 = vld [vmem:[#allocation5 + $0x7a0] sm:$0xff]
    %v1246 = vld [vmem:[#allocation5 + $0x7a8] sm:$0xff]
    %v1247 = vld [vmem:[#allocation5 + $0x7b0] sm:$0xff]
    %v1248 = vld [vmem:[#allocation5 + $0x7b8] sm:$0xff]
    %v1249 = vld [vmem:[#allocation5 + $0x7c0] sm:$0xff]
    %v1250 = vld [vmem:[#allocation5 + $0x7c8] sm:$0xff]
    %v1251 = vld [vmem:[#allocation5 + $0x7d0] sm:$0xff]
    %v1252 = vld [vmem:[#allocation5 + $0x7d8] sm:$0xff]
    %v1253 = vld [vmem:[#allocation5 + $0x7e0] sm:$0xff]
    %v1254 = vld [vmem:[#allocation5 + $0x7e8] sm:$0xff]
    %v1255 = vld [vmem:[#allocation5 + $0x7f0] sm:$0xff]
    %v1256 = vld [vmem:[#allocation5 + $0x7f8] sm:$0xff]
    %v1257 = vld [vmem:[#allocation5 + $0x800] sm:$0xff]
    %v1258 = vld [vmem:[#allocation5 + $0x808] sm:$0xff]
    %v1259 = vld [vmem:[#allocation5 + $0x810] sm:$0xff]
    %v1260 = vld [vmem:[#allocation5 + $0x818] sm:$0xff]
    %v1261 = vld [vmem:[#allocation5 + $0x820] sm:$0xff]
    %v1262 = vld [vmem:[#allocation5 + $0x828] sm:$0xff]
    %v1263 = vld [vmem:[#allocation5 + $0x830] sm:$0xff]
    %v1264 = vld [vmem:[#allocation5 + $0x838] sm:$0xff]
    %v1265 = vld [vmem:[#allocation5 + $0x840] sm:$0xff]
    %v1266 = vld [vmem:[#allocation5 + $0x848] sm:$0xff]
    %v1267 = vld [vmem:[#allocation5 + $0x850] sm:$0xff]
    %v1268 = vld [vmem:[#allocation5 + $0x858] sm:$0xff]
    %v1269 = vld [vmem:[#allocation5 + $0x860] sm:$0xff]
    %v1270 = vld [vmem:[#allocation5 + $0x868] sm:$0xff]
    %v1271 = vld [vmem:[#allocation5 + $0x870] sm:$0xff]
    %v1272 = vld [vmem:[#allocation5 + $0x878] sm:$0xff]
    %v1273 = vld [vmem:[#allocation5 + $0x880] sm:$0xff]
    %v1274 = vld [vmem:[#allocation5 + $0x888] sm:$0xff]
    %v1275 = vld [vmem:[#allocation5 + $0x890] sm:$0xff]
    %v1276 = vld [vmem:[#allocation5 + $0x898] sm:$0xff]
    %v1277 = vld [vmem:[#allocation5 + $0x8a0] sm:$0xff]
    %v1278 = vld [vmem:[#allocation5 + $0x8a8] sm:$0xff]
    %v1279 = vld [vmem:[#allocation5 + $0x8b0] sm:$0xff]
    %v1280 = vld [vmem:[#allocation5 + $0x8b8] sm:$0xff]
    %v1281 = vld [vmem:[#allocation5 + $0x8c0] sm:$0xff]
    %v1282 = vld [vmem:[#allocation5 + $0x8c8] sm:$0xff]
    %v1283 = vld [vmem:[#allocation5 + $0x8d0] sm:$0xff]
    %v1284 = vld [vmem:[#allocation5 + $0x8d8] sm:$0xff]
    %v1285 = vld [vmem:[#allocation5 + $0x8e0] sm:$0xff]
    %v1286 = vld [vmem:[#allocation5 + $0x8e8] sm:$0xff]
    %v1287 = vld [vmem:[#allocation5 + $0x8f0] sm:$0xff]
    %v1288 = vld [vmem:[#allocation5 + $0x8f8] sm:$0xff]
    %v1289 = vld [vmem:[#allocation5 + $0x900] sm:$0xff]
    %v1290 = vld [vmem:[#allocation5 + $0x908] sm:$0xff]
    %v1291 = vld [vmem:[#allocation5 + $0x910] sm:$0xff]
    %v1292 = vld [vmem:[#allocation5 + $0x918] sm:$0xff]
    %v1293 = vld [vmem:[#allocation5 + $0x920] sm:$0xff]
    %v1294 = vld [vmem:[#allocation5 + $0x928] sm:$0xff]
    %v1295 = vld [vmem:[#allocation5 + $0x930] sm:$0xff]
    %v1296 = vld [vmem:[#allocation5 + $0x938] sm:$0xff]
    %v1297 = vld [vmem:[#allocation5 + $0x940] sm:$0xff]
    %v1298 = vld [vmem:[#allocation5 + $0x948] sm:$0xff]
    %v1299 = vld [vmem:[#allocation5 + $0x950] sm:$0xff]
    %v1300 = vld [vmem:[#allocation5 + $0x958] sm:$0xff]
    %v1301 = vld [vmem:[#allocation5 + $0x960] sm:$0xff]
    %v1302 = vld [vmem:[#allocation5 + $0x968] sm:$0xff]
    %v1303 = vld [vmem:[#allocation5 + $0x970] sm:$0xff]
    %v1304 = vld [vmem:[#allocation5 + $0x978] sm:$0xff]
    %v1305 = vld [vmem:[#allocation5 + $0x980] sm:$0xff]
    %v1306 = vld [vmem:[#allocation5 + $0x988] sm:$0xff]
    %v1307 = vld [vmem:[#allocation5 + $0x990] sm:$0xff]
    %v1308 = vld [vmem:[#allocation5 + $0x998] sm:$0xff]
    %v1309 = vld [vmem:[#allocation5 + $0x9a0] sm:$0xff]
    %v1310 = vld [vmem:[#allocation5 + $0x9a8] sm:$0xff]
    %v1311 = vld [vmem:[#allocation5 + $0x9b0] sm:$0xff]
    %v1312 = vld [vmem:[#allocation5 + $0x9b8] sm:$0xff]
    %v1313 = vld [vmem:[#allocation5 + $0x9c0] sm:$0xff]
    %v1314 = vld [vmem:[#allocation5 + $0x9c8] sm:$0xff]
    %v1315 = vld [vmem:[#allocation5 + $0x9d0] sm:$0xff]
    %v1316 = vld [vmem:[#allocation5 + $0x9d8] sm:$0xff]
    %v1317 = vld [vmem:[#allocation5 + $0x9e0] sm:$0xff]
    %v1318 = vld [vmem:[#allocation5 + $0x9e8] sm:$0xff]
    %v1319 = vld [vmem:[#allocation5 + $0x9f0] sm:$0xff]
    %v1320 = vld [vmem:[#allocation5 + $0x9f8] sm:$0xff]
    %v1321 = vld [vmem:[#allocation5 + $0xa00] sm:$0xff]
    %v1322 = vld [vmem:[#allocation5 + $0xa08] sm:$0xff]
    %v1323 = vld [vmem:[#allocation5 + $0xa10] sm:$0xff]
    %v1324 = vld [vmem:[#allocation5 + $0xa18] sm:$0xff]
    %v1325 = vld [vmem:[#allocation5 + $0xa20] sm:$0xff]
    %v1326 = vld [vmem:[#allocation5 + $0xa28] sm:$0xff]
    %v1327 = vld [vmem:[#allocation5 + $0xa30] sm:$0xff]
    %v1328 = vld [vmem:[#allocation5 + $0xa38] sm:$0xff]
    %v1329 = vld [vmem:[#allocation5 + $0xa40] sm:$0xff]
    %v1330 = vld [vmem:[#allocation5 + $0xa48] sm:$0xff]
    %v1331 = vld [vmem:[#allocation5 + $0xa50] sm:$0xff]
    %v1332 = vld [vmem:[#allocation5 + $0xa58] sm:$0xff]
    %v1333 = vld [vmem:[#allocation5 + $0xa60] sm:$0xff]
    %v1334 = vld [vmem:[#allocation5 + $0xa68] sm:$0xff]
    %v1335 = vld [vmem:[#allocation5 + $0xa70] sm:$0xff]
    %v1336 = vld [vmem:[#allocation5 + $0xa78] sm:$0xff]
    %v1337 = vld [vmem:[#allocation5 + $0xa80] sm:$0xff]
    %v1338 = vld [vmem:[#allocation5 + $0xa88] sm:$0xff]
    %v1339 = vld [vmem:[#allocation5 + $0xa90] sm:$0xff]
    %v1340 = vld [vmem:[#allocation5 + $0xa98] sm:$0xff]
    %v1341 = vld [vmem:[#allocation5 + $0xaa0] sm:$0xff]
    %v1342 = vld [vmem:[#allocation5 + $0xaa8] sm:$0xff]
    %v1343 = vld [vmem:[#allocation5 + $0xab0] sm:$0xff]
    %v1344 = vld [vmem:[#allocation5 + $0xab8] sm:$0xff]
    %v1345 = vld [vmem:[#allocation5 + $0xac0] sm:$0xff]
    %v1346 = vld [vmem:[#allocation5 + $0xac8] sm:$0xff]
    %v1347 = vld [vmem:[#allocation5 + $0xad0] sm:$0xff]
    %v1348 = vld [vmem:[#allocation5 + $0xad8] sm:$0xff]
    %v1349 = vld [vmem:[#allocation5 + $0xae0] sm:$0xff]
    %v1350 = vld [vmem:[#allocation5 + $0xae8] sm:$0xff]
    %v1351 = vld [vmem:[#allocation5 + $0xaf0] sm:$0xff]
    %v1352 = vld [vmem:[#allocation5 + $0xaf8] sm:$0xff]
    %v1353 = vld [vmem:[#allocation5 + $0xb00] sm:$0xff]
    %v1354 = vld [vmem:[#allocation5 + $0xb08] sm:$0xff]
    %v1355 = vld [vmem:[#allocation5 + $0xb10] sm:$0xff]
    %v1356 = vld [vmem:[#allocation5 + $0xb18] sm:$0xff]
    %v1357 = vld [vmem:[#allocation5 + $0xb20] sm:$0xff]
    %v1358 = vld [vmem:[#allocation5 + $0xb28] sm:$0xff]
    %v1359 = vld [vmem:[#allocation5 + $0xb30] sm:$0xff]
    %v1360 = vld [vmem:[#allocation5 + $0xb38] sm:$0xff]
    %v1361 = vld [vmem:[#allocation5 + $0xb40] sm:$0xff]
    %v1362 = vld [vmem:[#allocation5 + $0xb48] sm:$0xff]
    %v1363 = vld [vmem:[#allocation5 + $0xb50] sm:$0xff]
    %v1364 = vld [vmem:[#allocation5 + $0xb58] sm:$0xff]
    %v1365 = vld [vmem:[#allocation5 + $0xb60] sm:$0xff]
    %v1366 = vld [vmem:[#allocation5 + $0xb68] sm:$0xff]
    %v1367 = vld [vmem:[#allocation5 + $0xb70] sm:$0xff]
    %v1368 = vld [vmem:[#allocation5 + $0xb78] sm:$0xff]
    %v1369 = vld [vmem:[#allocation5 + $0xb80] sm:$0xff]
    %v1370 = vld [vmem:[#allocation5 + $0xb88] sm:$0xff]
    %v1371 = vld [vmem:[#allocation5 + $0xb90] sm:$0xff]
    %v1372 = vld [vmem:[#allocation5 + $0xb98] sm:$0xff]
    %v1373 = vld [vmem:[#allocation5 + $0xba0] sm:$0xff]
    %v1374 = vld [vmem:[#allocation5 + $0xba8] sm:$0xff]
    %v1375 = vld [vmem:[#allocation5 + $0xbb0] sm:$0xff]
    %v1376 = vld [vmem:[#allocation5 + $0xbb8] sm:$0xff]
    %v1377 = vld [vmem:[#allocation5 + $0xbc0] sm:$0xff]
    %v1378 = vld [vmem:[#allocation5 + $0xbc8] sm:$0xff]
    %v1379 = vld [vmem:[#allocation5 + $0xbd0] sm:$0xff]
    %v1380 = vld [vmem:[#allocation5 + $0xbd8] sm:$0xff]
    %v1381 = vld [vmem:[#allocation5 + $0xbe0] sm:$0xff]
    %v1382 = vld [vmem:[#allocation5 + $0xbe8] sm:$0xff]
    %v1383 = vld [vmem:[#allocation5 + $0xbf0] sm:$0xff]
    %v1384 = vld [vmem:[#allocation5 + $0xbf8] sm:$0xff]
    %v1385 = vld [vmem:[#allocation5 + $0xc00] sm:$0xff]
    %v1386 = vld [vmem:[#allocation5 + $0xc08] sm:$0xff]
    %v1387 = vld [vmem:[#allocation5 + $0xc10] sm:$0xff]
    %v1388 = vld [vmem:[#allocation5 + $0xc18] sm:$0xff]
    %v1389 = vld [vmem:[#allocation5 + $0xc20] sm:$0xff]
    %v1390 = vld [vmem:[#allocation5 + $0xc28] sm:$0xff]
    %v1391 = vld [vmem:[#allocation5 + $0xc30] sm:$0xff]
    %v1392 = vld [vmem:[#allocation5 + $0xc38] sm:$0xff]
    %v1393 = vld [vmem:[#allocation5 + $0xc40] sm:$0xff]
    %v1394 = vld [vmem:[#allocation5 + $0xc48] sm:$0xff]
    %v1395 = vld [vmem:[#allocation5 + $0xc50] sm:$0xff]
    %v1396 = vld [vmem:[#allocation5 + $0xc58] sm:$0xff]
    %v1397 = vld [vmem:[#allocation5 + $0xc60] sm:$0xff]
    %v1398 = vld [vmem:[#allocation5 + $0xc68] sm:$0xff]
    %v1399 = vld [vmem:[#allocation5 + $0xc70] sm:$0xff]
    %v1400 = vld [vmem:[#allocation5 + $0xc78] sm:$0xff]
    %v1401 = vld [vmem:[#allocation5 + $0xc80] sm:$0xff]
    %v1402 = vld [vmem:[#allocation5 + $0xc88] sm:$0xff]
    %v1403 = vld [vmem:[#allocation5 + $0xc90] sm:$0xff]
    %v1404 = vld [vmem:[#allocation5 + $0xc98] sm:$0xff]
    %v1405 = vld [vmem:[#allocation5 + $0xca0] sm:$0xff]
    %v1406 = vld [vmem:[#allocation5 + $0xca8] sm:$0xff]
    %v1407 = vld [vmem:[#allocation5 + $0xcb0] sm:$0xff]
    %v1408 = vld [vmem:[#allocation5 + $0xcb8] sm:$0xff]
    %v1409 = vld [vmem:[#allocation5 + $0xcc0] sm:$0xff]
    %v1410 = vld [vmem:[#allocation5 + $0xcc8] sm:$0xff]
    %v1411 = vld [vmem:[#allocation5 + $0xcd0] sm:$0xff]
    %v1412 = vld [vmem:[#allocation5 + $0xcd8] sm:$0xff]
    %v1413 = vld [vmem:[#allocation5 + $0xce0] sm:$0xff]
    %v1414 = vld [vmem:[#allocation5 + $0xce8] sm:$0xff]
    %v1415 = vld [vmem:[#allocation5 + $0xcf0] sm:$0xff]
    %v1416 = vld [vmem:[#allocation5 + $0xcf8] sm:$0xff]
    %v1417 = vld [vmem:[#allocation5 + $0xd00] sm:$0xff]
    %v1418 = vld [vmem:[#allocation5 + $0xd08] sm:$0xff]
    %v1419 = vld [vmem:[#allocation5 + $0xd10] sm:$0xff]
    %v1420 = vld [vmem:[#allocation5 + $0xd18] sm:$0xff]
    %v1421 = vld [vmem:[#allocation5 + $0xd20] sm:$0xff]
    %v1422 = vld [vmem:[#allocation5 + $0xd28] sm:$0xff]
    %v1423 = vld [vmem:[#allocation5 + $0xd30] sm:$0xff]
    %v1424 = vld [vmem:[#allocation5 + $0xd38] sm:$0xff]
    %v1425 = vld [vmem:[#allocation5 + $0xd40] sm:$0xff]
    %v1426 = vld [vmem:[#allocation5 + $0xd48] sm:$0xff]
    %v1427 = vld [vmem:[#allocation5 + $0xd50] sm:$0xff]
    %v1428 = vld [vmem:[#allocation5 + $0xd58] sm:$0xff]
    %v1429 = vld [vmem:[#allocation5 + $0xd60] sm:$0xff]
    %v1430 = vld [vmem:[#allocation5 + $0xd68] sm:$0xff]
    %v1431 = vld [vmem:[#allocation5 + $0xd70] sm:$0xff]
    %v1432 = vld [vmem:[#allocation5 + $0xd78] sm:$0xff]
    %v1433 = vld [vmem:[#allocation5 + $0xd80] sm:$0xff]
    %v1434 = vld [vmem:[#allocation5 + $0xd88] sm:$0xff]
    %v1435 = vld [vmem:[#allocation5 + $0xd90] sm:$0xff]
    %v1436 = vld [vmem:[#allocation5 + $0xd98] sm:$0xff]
    %v1437 = vld [vmem:[#allocation5 + $0xda0] sm:$0xff]
    %v1438 = vld [vmem:[#allocation5 + $0xda8] sm:$0xff]
    %v1439 = vld [vmem:[#allocation5 + $0xdb0] sm:$0xff]
    %v1440 = vld [vmem:[#allocation5 + $0xdb8] sm:$0xff]
    %v1441 = vld [vmem:[#allocation5 + $0xdc0] sm:$0xff]
    %v1442 = vld [vmem:[#allocation5 + $0xdc8] sm:$0xff]
    %v1443 = vld [vmem:[#allocation5 + $0xdd0] sm:$0xff]
    %v1444 = vld [vmem:[#allocation5 + $0xdd8] sm:$0xff]
    %v1445 = vld [vmem:[#allocation5 + $0xde0] sm:$0xff]
    %v1446 = vld [vmem:[#allocation5 + $0xde8] sm:$0xff]
    %v1447 = vld [vmem:[#allocation5 + $0xdf0] sm:$0xff]
    %v1448 = vld [vmem:[#allocation5 + $0xdf8] sm:$0xff]
    %v1449 = vld [vmem:[#allocation5 + $0xe00] sm:$0xff]
    %v1450 = vld [vmem:[#allocation5 + $0xe08] sm:$0xff]
    %v1451 = vld [vmem:[#allocation5 + $0xe10] sm:$0xff]
    %v1452 = vld [vmem:[#allocation5 + $0xe18] sm:$0xff]
    %v1453 = vld [vmem:[#allocation5 + $0xe20] sm:$0xff]
    %v1454 = vld [vmem:[#allocation5 + $0xe28] sm:$0xff]
    %v1455 = vld [vmem:[#allocation5 + $0xe30] sm:$0xff]
    %v1456 = vld [vmem:[#allocation5 + $0xe38] sm:$0xff]
    %v1457 = vld [vmem:[#allocation5 + $0xe40] sm:$0xff]
    %v1458 = vld [vmem:[#allocation5 + $0xe48] sm:$0xff]
    %v1459 = vld [vmem:[#allocation5 + $0xe50] sm:$0xff]
    %v1460 = vld [vmem:[#allocation5 + $0xe58] sm:$0xff]
    %v1461 = vld [vmem:[#allocation5 + $0xe60] sm:$0xff]
    %v1462 = vld [vmem:[#allocation5 + $0xe68] sm:$0xff]
    %v1463 = vld [vmem:[#allocation5 + $0xe70] sm:$0xff]
    %v1464 = vld [vmem:[#allocation5 + $0xe78] sm:$0xff]
    %v1465 = vld [vmem:[#allocation5 + $0xe80] sm:$0xff]
    %v1466 = vld [vmem:[#allocation5 + $0xe88] sm:$0xff]
    %v1467 = vld [vmem:[#allocation5 + $0xe90] sm:$0xff]
    %v1468 = vld [vmem:[#allocation5 + $0xe98] sm:$0xff]
    %v1469 = vld [vmem:[#allocation5 + $0xea0] sm:$0xff]
    %v1470 = vld [vmem:[#allocation5 + $0xea8] sm:$0xff]
    %v1471 = vld [vmem:[#allocation5 + $0xeb0] sm:$0xff]
    %v1472 = vld [vmem:[#allocation5 + $0xeb8] sm:$0xff]
    %v1473 = vld [vmem:[#allocation5 + $0xec0] sm:$0xff]
    %v1474 = vld [vmem:[#allocation5 + $0xec8] sm:$0xff]
    %v1475 = vld [vmem:[#allocation5 + $0xed0] sm:$0xff]
    %v1476 = vld [vmem:[#allocation5 + $0xed8] sm:$0xff]
    %v1477 = vld [vmem:[#allocation5 + $0xee0] sm:$0xff]
    %v1478 = vld [vmem:[#allocation5 + $0xee8] sm:$0xff]
    %v1479 = vld [vmem:[#allocation5 + $0xef0] sm:$0xff]
    %v1480 = vld [vmem:[#allocation5 + $0xef8] sm:$0xff]
    %v1481 = vld [vmem:[#allocation5 + $0xf00] sm:$0xff]
    %v1482 = vld [vmem:[#allocation5 + $0xf08] sm:$0xff]
    %v1483 = vld [vmem:[#allocation5 + $0xf10] sm:$0xff]
    %v1484 = vld [vmem:[#allocation5 + $0xf18] sm:$0xff]
    %v1485 = vld [vmem:[#allocation5 + $0xf20] sm:$0xff]
    %v1486 = vld [vmem:[#allocation5 + $0xf28] sm:$0xff]
    %v1487 = vld [vmem:[#allocation5 + $0xf30] sm:$0xff]
    %v1488 = vld [vmem:[#allocation5 + $0xf38] sm:$0xff]
    %v1489 = vld [vmem:[#allocation5 + $0xf40] sm:$0xff]
    %v1490 = vld [vmem:[#allocation5 + $0xf48] sm:$0xff]
    %v1491 = vld [vmem:[#allocation5 + $0xf50] sm:$0xff]
    %v1492 = vld [vmem:[#allocation5 + $0xf58] sm:$0xff]
    %v1493 = vld [vmem:[#allocation5 + $0xf60] sm:$0xff]
    %v1494 = vld [vmem:[#allocation5 + $0xf68] sm:$0xff]
    %v1495 = vld [vmem:[#allocation5 + $0xf70] sm:$0xff]
    %v1496 = vld [vmem:[#allocation5 + $0xf78] sm:$0xff]
    %v1497 = vld [vmem:[#allocation5 + $0xf80] sm:$0xff]
    %v1498 = vld [vmem:[#allocation5 + $0xf88] sm:$0xff]
    %v1499 = vld [vmem:[#allocation5 + $0xf90] sm:$0xff]
    %v1500 = vld [vmem:[#allocation5 + $0xf98] sm:$0xff]
    %v1501 = vld [vmem:[#allocation5 + $0xfa0] sm:$0xff]
    %v1502 = vld [vmem:[#allocation5 + $0xfa8] sm:$0xff]
    %v1503 = vld [vmem:[#allocation5 + $0xfb0] sm:$0xff]
    %v1504 = vld [vmem:[#allocation5 + $0xfb8] sm:$0xff]
    %v1505 = vld [vmem:[#allocation5 + $0xfc0] sm:$0xff]
    %v1506 = vld [vmem:[#allocation5 + $0xfc8] sm:$0xff]
    %v1507 = vld [vmem:[#allocation5 + $0xfd0] sm:$0xff]
    %v1508 = vld [vmem:[#allocation5 + $0xfd8] sm:$0xff]
    %v1509 = vld [vmem:[#allocation5 + $0xfe0] sm:$0xff]
    %v1510 = vld [vmem:[#allocation5 + $0xfe8] sm:$0xff]
    %v1511 = vld [vmem:[#allocation5 + $0xff0] sm:$0xff]
    %v1512 = vld [vmem:[#allocation5 + $0xff8] sm:$0xff]
    %s1513 = scalar_lea.vmem [#allocation10], 1
    %v1514 = vld [vmem:[%s1513] ss:$8 sm:$0xf]
    %v1516 = vlaneseq
    %v1517 = vshrl.u32 %v1516, 7
    %v1518 = vsub.s32 0, %v1517
    %v1519 = vrot.slane %v1514, %v1518
    %v1520 = vlaneseq
    %v1521 = vshrl.u32 %v1520, 7
    %v1522 = vsub.s32 1, %v1521
    %v1523 = vrot.slane %v1514, %v1522
    %v1524 = vlaneseq
    %v1525 = vshrl.u32 %v1524, 7
    %v1526 = vsub.s32 2, %v1525
    %v1527 = vrot.slane %v1514, %v1526
    %v1528 = vlaneseq
    %v1529 = vshrl.u32 %v1528, 7
    %v1530 = vsub.s32 3, %v1529
    %v1531 = vrot.slane %v1514, %v1530
    %1536 = vmatprep.subr.mxu0 %v1002
    %1537 = vmatpush1.msra.mxu0 %v1001
    %1538 = vmatprep.subr.mxu0 %v1006
    %1539 = vmatpush1.msra.mxu0 %v1005
    %1540 = vmatprep.subr.mxu0 %v1010
    %1541 = vmatpush1.msra.mxu0 %v1009
    %1542 = vmatprep.subr.mxu0 %v1014
    %1543 = vmatpush1.msra.mxu0 %v1013
    %1544 = vmatprep.subr.mxu0 %v1018
    %1545 = vmatpush1.msra.mxu0 %v1017
    %1546 = vmatprep.subr.mxu0 %v1022
    %1547 = vmatpush1.msra.mxu0 %v1021
    %1548 = vmatprep.subr.mxu0 %v1026
    %1549 = vmatpush1.msra.mxu0 %v1025
    %1550 = vmatprep.subr.mxu0 %v1030
    %1551 = vmatpush1.msra.mxu0 %v1029
    %1552 = vmatprep.subr.mxu0 %v1034
    %1553 = vmatpush1.msra.mxu0 %v1033
    %1554 = vmatprep.subr.mxu0 %v1038
    %1555 = vmatpush1.msra.mxu0 %v1037
    %1556 = vmatprep.subr.mxu0 %v1042
    %1557 = vmatpush1.msra.mxu0 %v1041
    %1558 = vmatprep.subr.mxu0 %v1046
    %1559 = vmatpush1.msra.mxu0 %v1045
    %1560 = vmatprep.subr.mxu0 %v1050
    %1561 = vmatpush1.msra.mxu0 %v1049
    %1562 = vmatprep.subr.mxu0 %v1054
    %1563 = vmatpush1.msra.mxu0 %v1053
    %1564 = vmatprep.subr.mxu0 %v1058
    %1565 = vmatpush1.msra.mxu0 %v1057
    %1566 = vmatprep.subr.mxu0 %v1062
    %1567 = vmatpush1.msra.mxu0 %v1061
    %1568 = vmatprep.subr.mxu0 %v1066
    %1569 = vmatpush1.msra.mxu0 %v1065
    %1570 = vmatprep.subr.mxu0 %v1070
    %1571 = vmatpush1.msra.mxu0 %v1069
    %1572 = vmatprep.subr.mxu0 %v1074
    %1573 = vmatpush1.msra.mxu0 %v1073
    %1574 = vmatprep.subr.mxu0 %v1078
    %1575 = vmatpush1.msra.mxu0 %v1077
    %1576 = vmatprep.subr.mxu0 %v1082
    %1577 = vmatpush1.msra.mxu0 %v1081
    %1578 = vmatprep.subr.mxu0 %v1086
    %1579 = vmatpush1.msra.mxu0 %v1085
    %1580 = vmatprep.subr.mxu0 %v1090
    %1581 = vmatpush1.msra.mxu0 %v1089
    %1582 = vmatprep.subr.mxu0 %v1094
    %1583 = vmatpush1.msra.mxu0 %v1093
    %1584 = vmatprep.subr.mxu0 %v1098
    %1585 = vmatpush1.msra.mxu0 %v1097
    %1586 = vmatprep.subr.mxu0 %v1102
    %1587 = vmatpush1.msra.mxu0 %v1101
    %1588 = vmatprep.subr.mxu0 %v1106
    %1589 = vmatpush1.msra.mxu0 %v1105
    %1590 = vmatprep.subr.mxu0 %v1110
    %1591 = vmatpush1.msra.mxu0 %v1109
    %1592 = vmatprep.subr.mxu0 %v1114
    %1593 = vmatpush1.msra.mxu0 %v1113
    %1594 = vmatprep.subr.mxu0 %v1118
    %1595 = vmatpush1.msra.mxu0 %v1117
    %1596 = vmatprep.subr.mxu0 %v1122
    %1597 = vmatpush1.msra.mxu0 %v1121
    %1598 = vmatprep.subr.mxu0 %v1126
    %1599 = vmatpush1.msra.mxu0 %v1125
    %1600 = vmatprep.mubr.f32.mxu0 %v874
    %1601 = vmatmul.mubr.f32.gmra.mrb[0].mxu0 %v873
    %v1602 = vpop.f32.mrb[0].mxu0
    %v1603 = vadd.f32 %v1519, %v1602
    %v1604 = vpop.f32.mrb[0].mxu0
    %v1605 = vadd.f32 %v1523, %v1604
    %1606 = vmatprep.mubr.f32.mxu0 %v882
    %1607 = vmatmul.mubr.f32.gmra.mrb[0].mxu0 %v881
    %v1608 = vpop.f32.mrb[0].mxu0
    %v1609 = vadd.f32 %v1519, %v1608
    %v1610 = vpop.f32.mrb[0].mxu0
    %v1611 = vadd.f32 %v1523, %v1610
    %1612 = vmatprep.mubr.f32.mxu0 %v890
    %1613 = vmatmul.mubr.f32.gmra.mrb[0].mxu0 %v889
    %v1614 = vpop.f32.mrb[0].mxu0
    %v1615 = vadd.f32 %v1519, %v1614
    %v1616 = vpop.f32.mrb[0].mxu0
    %v1617 = vadd.f32 %v1523, %v1616
    %1618 = vmatprep.mubr.f32.mxu0 %v898
    %1619 = vmatmul.mubr.f32.gmra.mrb[0].mxu0 %v897
    %v1620 = vpop.f32.mrb[0].mxu0
    %v1621 = vadd.f32 %v1519, %v1620
    %v1622 = vpop.f32.mrb[0].mxu0
    %v1623 = vadd.f32 %v1523, %v1622
    %1624 = vmatprep.mubr.f32.mxu0 %v906
    %1625 = vmatmul.mubr.f32.gmra.mrb[0].mxu0 %v905
    %v1626 = vpop.f32.mrb[0].mxu0
    %v1627 = vadd.f32 %v1519, %v1626
    %v1628 = vpop.f32.mrb[0].mxu0
    %v1629 = vadd.f32 %v1523, %v1628
    %1630 = vmatprep.mubr.f32.mxu0 %v914
    %1631 = vmatmul.mubr.f32.gmra.mrb[0].mxu0 %v913
    %v1632 = vpop.f32.mrb[0].mxu0
    %v1633 = vadd.f32 %v1519, %v1632
    %v1634 = vpop.f32.mrb[0].mxu0
    %v1635 = vadd.f32 %v1523, %v1634
    %1636 = vmatprep.mubr.f32.mxu0 %v922
    %1637 = vmatmul.mubr.f32.gmra.mrb[0].mxu0 %v921
    %v1638 = vpop.f32.mrb[0].mxu0
    %v1639 = vadd.f32 %v1519, %v1638
    %v1640 = vpop.f32.mrb[0].mxu0
    %v1641 = vadd.f32 %v1523, %v1640
    %1642 = vmatprep.mubr.f32.mxu0 %v930
    %1643 = vmatmul.mubr.f32.gmra.mrb[0].mxu0 %v929
    %v1644 = vpop.f32.mrb[0].mxu0
    %v1645 = vadd.f32 %v1519, %v1644
    %v1646 = vpop.f32.mrb[0].mxu0
    %v1647 = vadd.f32 %v1523, %v1646
    %1648 = vmatprep.mubr.f32.mxu0 %v938
    %1649 = vmatmul.mubr.f32.gmra.mrb[0].mxu0 %v937
    %v1650 = vpop.f32.mrb[0].mxu0
    %v1651 = vadd.f32 %v1519, %v1650
    %v1652 = vpop.f32.mrb[0].mxu0
    %v1653 = vadd.f32 %v1523, %v1652
    %1654 = vmatprep.mubr.f32.mxu0 %v946
    %1655 = vmatmul.mubr.f32.gmra.mrb[0].mxu0 %v945
    %v1656 = vpop.f32.mrb[0].mxu0
    %v1657 = vadd.f32 %v1519, %v1656
    %v1658 = vpop.f32.mrb[0].mxu0
    %v1659 = vadd.f32 %v1523, %v1658
    %1660 = vmatprep.mubr.f32.mxu0 %v954
    %1661 = vmatmul.mubr.f32.gmra.mrb[0].mxu0 %v953
    %v1662 = vpop.f32.mrb[0].mxu0
    %v1663 = vadd.f32 %v1519, %v1662
    %v1664 = vpop.f32.mrb[0].mxu0
    %v1665 = vadd.f32 %v1523, %v1664
    %1666 = vmatprep.mubr.f32.mxu0 %v962
    %1667 = vmatmul.mubr.f32.gmra.mrb[0].mxu0 %v961
    %v1668 = vpop.f32.mrb[0].mxu0
    %v1669 = vadd.f32 %v1519, %v1668
    %v1670 = vpop.f32.mrb[0].mxu0
    %v1671 = vadd.f32 %v1523, %v1670
    %1672 = vmatprep.mubr.f32.mxu0 %v970
    %1673 = vmatmul.mubr.f32.gmra.mrb[0].mxu0 %v969
    %v1674 = vpop.f32.mrb[0].mxu0
    %v1675 = vadd.f32 %v1519, %v1674
    %v1676 = vpop.f32.mrb[0].mxu0
    %v1677 = vadd.f32 %v1523, %v1676
    %1678 = vmatprep.mubr.f32.mxu0 %v978
    %1679 = vmatmul.mubr.f32.gmra.mrb[0].mxu0 %v977
    %v1680 = vpop.f32.mrb[0].mxu0
    %v1681 = vadd.f32 %v1519, %v1680
    %v1682 = vpop.f32.mrb[0].mxu0
    %v1683 = vadd.f32 %v1523, %v1682
    %1684 = vmatprep.mubr.f32.mxu0 %v986
    %1685 = vmatmul.mubr.f32.gmra.mrb[0].mxu0 %v985
    %v1686 = vpop.f32.mrb[0].mxu0
    %v1687 = vadd.f32 %v1519, %v1686
    %v1688 = vpop.f32.mrb[0].mxu0
    %v1689 = vadd.f32 %v1523, %v1688
    %1690 = vmatprep.mubr.f32.mxu0 %v994
    %1691 = vmatmul.mubr.f32.gmra.mrb[0].mxu0 %v993
    %v1692 = vpop.f32.mrb[0].mxu0
    %v1693 = vadd.f32 %v1519, %v1692
    %v1694 = vpop.f32.mrb[0].mxu0
    %v1695 = vadd.f32 %v1523, %v1694
    %1696 = vdwg.mxu0
    %1697 = vmatprep.subr.mxu0 %v1130
    %1698 = vmatpush1.msra.mxu0 %v1129
    %1699 = vmatprep.subr.mxu0 %v1134
    %1700 = vmatpush1.msra.mxu0 %v1133
    %1701 = vmatprep.subr.mxu0 %v1138
    %1702 = vmatpush1.msra.mxu0 %v1137
    %1703 = vmatprep.subr.mxu0 %v1142
    %1704 = vmatpush1.msra.mxu0 %v1141
    %1705 = vmatprep.subr.mxu0 %v1146
    %1706 = vmatpush1.msra.mxu0 %v1145
    %1707 = vmatprep.subr.mxu0 %v1150
    %1708 = vmatpush1.msra.mxu0 %v1149
    %1709 = vmatprep.subr.mxu0 %v1154
    %1710 = vmatpush1.msra.mxu0 %v1153
    %1711 = vmatprep.subr.mxu0 %v1158
    %1712 = vmatpush1.msra.mxu0 %v1157
    %1713 = vmatprep.subr.mxu0 %v1162
    %1714 = vmatpush1.msra.mxu0 %v1161
    %1715 = vmatprep.subr.mxu0 %v1166
    %1716 = vmatpush1.msra.mxu0 %v1165
    %1717 = vmatprep.subr.mxu0 %v1170
    %1718 = vmatpush1.msra.mxu0 %v1169
    %1719 = vmatprep.subr.mxu0 %v1174
    %1720 = vmatpush1.msra.mxu0 %v1173
    %1721 = vmatprep.subr.mxu0 %v1178
    %1722 = vmatpush1.msra.mxu0 %v1177
    %1723 = vmatprep.subr.mxu0 %v1182
    %1724 = vmatpush1.msra.mxu0 %v1181
    %1725 = vmatprep.subr.mxu0 %v1186
    %1726 = vmatpush1.msra.mxu0 %v1185
    %1727 = vmatprep.subr.mxu0 %v1190
    %1728 = vmatpush1.msra.mxu0 %v1189
    %1729 = vmatprep.subr.mxu0 %v1194
    %1730 = vmatpush1.msra.mxu0 %v1193
    %1731 = vmatprep.subr.mxu0 %v1198
    %1732 = vmatpush1.msra.mxu0 %v1197
    %1733 = vmatprep.subr.mxu0 %v1202
    %1734 = vmatpush1.msra.mxu0 %v1201
    %1735 = vmatprep.subr.mxu0 %v1206
    %1736 = vmatpush1.msra.mxu0 %v1205
    %1737 = vmatprep.subr.mxu0 %v1210
    %1738 = vmatpush1.msra.mxu0 %v1209
    %1739 = vmatprep.subr.mxu0 %v1214
    %1740 = vmatpush1.msra.mxu0 %v1213
    %1741 = vmatprep.subr.mxu0 %v1218
    %1742 = vmatpush1.msra.mxu0 %v1217
    %1743 = vmatprep.subr.mxu0 %v1222
    %1744 = vmatpush1.msra.mxu0 %v1221
    %1745 = vmatprep.subr.mxu0 %v1226
    %1746 = vmatpush1.msra.mxu0 %v1225
    %1747 = vmatprep.subr.mxu0 %v1230
    %1748 = vmatpush1.msra.mxu0 %v1229
    %1749 = vmatprep.subr.mxu0 %v1234
    %1750 = vmatpush1.msra.mxu0 %v1233
    %1751 = vmatprep.subr.mxu0 %v1238
    %1752 = vmatpush1.msra.mxu0 %v1237
    %1753 = vmatprep.subr.mxu0 %v1242
    %1754 = vmatpush1.msra.mxu0 %v1241
    %1755 = vmatprep.subr.mxu0 %v1246
    %1756 = vmatpush1.msra.mxu0 %v1245
    %1757 = vmatprep.subr.mxu0 %v1250
    %1758 = vmatpush1.msra.mxu0 %v1249
    %1759 = vmatprep.subr.mxu0 %v1254
    %1760 = vmatpush1.msra.mxu0 %v1253
    %1761 = vmatprep.mubr.f32.mxu0 %v876
    %1762 = vmatmul.mubr.f32.gmra.mrb[0].mxu0 %v875
    %v1763 = vpop.f32.mrb[0].mxu0
    %v1764 = vadd.f32 %v1603, %v1763
    %v1765 = vpop.f32.mrb[0].mxu0
    %v1766 = vadd.f32 %v1605, %v1765
    %1767 = vmatprep.mubr.f32.mxu0 %v884
    %1768 = vmatmul.mubr.f32.gmra.mrb[0].mxu0 %v883
    %v1769 = vpop.f32.mrb[0].mxu0
    %v1770 = vadd.f32 %v1609, %v1769
    %v1771 = vpop.f32.mrb[0].mxu0
    %v1772 = vadd.f32 %v1611, %v1771
    %1773 = vmatprep.mubr.f32.mxu0 %v892
    %1774 = vmatmul.mubr.f32.gmra.mrb[0].mxu0 %v891
    %v1775 = vpop.f32.mrb[0].mxu0
    %v1776 = vadd.f32 %v1615, %v1775
    %v1777 = vpop.f32.mrb[0].mxu0
    %v1778 = vadd.f32 %v1617, %v1777
    %1779 = vmatprep.mubr.f32.mxu0 %v900
    %1780 = vmatmul.mubr.f32.gmra.mrb[0].mxu0 %v899
    %v1781 = vpop.f32.mrb[0].mxu0
    %v1782 = vadd.f32 %v1621, %v1781
    %v1783 = vpop.f32.mrb[0].mxu0
    %v1784 = vadd.f32 %v1623, %v1783
    %1785 = vmatprep.mubr.f32.mxu0 %v908
    %1786 = vmatmul.mubr.f32.gmra.mrb[0].mxu0 %v907
    %v1787 = vpop.f32.mrb[0].mxu0
    %v1788 = vadd.f32 %v1627, %v1787
    %v1789 = vpop.f32.mrb[0].mxu0
    %v1790 = vadd.f32 %v1629, %v1789
    %1791 = vmatprep.mubr.f32.mxu0 %v916
    %1792 = vmatmul.mubr.f32.gmra.mrb[0].mxu0 %v915
    %v1793 = vpop.f32.mrb[0].mxu0
    %v1794 = vadd.f32 %v1633, %v1793
    %v1795 = vpop.f32.mrb[0].mxu0
    %v1796 = vadd.f32 %v1635, %v1795
    %1797 = vmatprep.mubr.f32.mxu0 %v924
    %1798 = vmatmul.mubr.f32.gmra.mrb[0].mxu0 %v923
    %v1799 = vpop.f32.mrb[0].mxu0
    %v1800 = vadd.f32 %v1639, %v1799
    %v1801 = vpop.f32.mrb[0].mxu0
    %v1802 = vadd.f32 %v1641, %v1801
    %1803 = vmatprep.mubr.f32.mxu0 %v932
    %1804 = vmatmul.mubr.f32.gmra.mrb[0].mxu0 %v931
    %v1805 = vpop.f32.mrb[0].mxu0
    %v1806 = vadd.f32 %v1645, %v1805
    %v1807 = vpop.f32.mrb[0].mxu0
    %v1808 = vadd.f32 %v1647, %v1807
    %1809 = vmatprep.mubr.f32.mxu0 %v940
    %1810 = vmatmul.mubr.f32.gmra.mrb[0].mxu0 %v939
    %v1811 = vpop.f32.mrb[0].mxu0
    %v1812 = vadd.f32 %v1651, %v1811
    %v1813 = vpop.f32.mrb[0].mxu0
    %v1814 = vadd.f32 %v1653, %v1813
    %1815 = vmatprep.mubr.f32.mxu0 %v948
    %1816 = vmatmul.mubr.f32.gmra.mrb[0].mxu0 %v947
    %v1817 = vpop.f32.mrb[0].mxu0
    %v1818 = vadd.f32 %v1657, %v1817
    %v1819 = vpop.f32.mrb[0].mxu0
    %v1820 = vadd.f32 %v1659, %v1819
    %1821 = vmatprep.mubr.f32.mxu0 %v956
    %1822 = vmatmul.mubr.f32.gmra.mrb[0].mxu0 %v955
    %v1823 = vpop.f32.mrb[0].mxu0
    %v1824 = vadd.f32 %v1663, %v1823
    %v1825 = vpop.f32.mrb[0].mxu0
    %v1826 = vadd.f32 %v1665, %v1825
    %1827 = vmatprep.mubr.f32.mxu0 %v964
    %1828 = vmatmul.mubr.f32.gmra.mrb[0].mxu0 %v963
    %v1829 = vpop.f32.mrb[0].mxu0
    %v1830 = vadd.f32 %v1669, %v1829
    %v1831 = vpop.f32.mrb[0].mxu0
    %v1832 = vadd.f32 %v1671, %v1831
    %1833 = vmatprep.mubr.f32.mxu0 %v972
    %1834 = vmatmul.mubr.f32.gmra.mrb[0].mxu0 %v971
    %v1835 = vpop.f32.mrb[0].mxu0
    %v1836 = vadd.f32 %v1675, %v1835
    %v1837 = vpop.f32.mrb[0].mxu0
    %v1838 = vadd.f32 %v1677, %v1837
    %1839 = vmatprep.mubr.f32.mxu0 %v980
    %1840 = vmatmul.mubr.f32.gmra.mrb[0].mxu0 %v979
    %v1841 = vpop.f32.mrb[0].mxu0
    %v1842 = vadd.f32 %v1681, %v1841
    %v1843 = vpop.f32.mrb[0].mxu0
    %v1844 = vadd.f32 %v1683, %v1843
    %1845 = vmatprep.mubr.f32.mxu0 %v988
    %1846 = vmatmul.mubr.f32.gmra.mrb[0].mxu0 %v987
    %v1847 = vpop.f32.mrb[0].mxu0
    %v1848 = vadd.f32 %v1687, %v1847
    %v1849 = vpop.f32.mrb[0].mxu0
    %v1850 = vadd.f32 %v1689, %v1849
    %1851 = vmatprep.mubr.f32.mxu0 %v996
    %1852 = vmatmul.mubr.f32.gmra.mrb[0].mxu0 %v995
    %v1853 = vpop.f32.mrb[0].mxu0
    %v1854 = vadd.f32 %v1693, %v1853
    %v1855 = vpop.f32.mrb[0].mxu0
    %v1856 = vadd.f32 %v1695, %v1855
    %1857 = vdwg.mxu0
    %1858 = vmatprep.subr.mxu0 %v1258
    %1859 = vmatpush1.msra.mxu0 %v1257
    %1860 = vmatprep.subr.mxu0 %v1262
    %1861 = vmatpush1.msra.mxu0 %v1261
    %1862 = vmatprep.subr.mxu0 %v1266
    %1863 = vmatpush1.msra.mxu0 %v1265
    %1864 = vmatprep.subr.mxu0 %v1270
    %1865 = vmatpush1.msra.mxu0 %v1269
    %1866 = vmatprep.subr.mxu0 %v1274
    %1867 = vmatpush1.msra.mxu0 %v1273
    %1868 = vmatprep.subr.mxu0 %v1278
    %1869 = vmatpush1.msra.mxu0 %v1277
    %1870 = vmatprep.subr.mxu0 %v1282
    %1871 = vmatpush1.msra.mxu0 %v1281
    %1872 = vmatprep.subr.mxu0 %v1286
    %1873 = vmatpush1.msra.mxu0 %v1285
    %1874 = vmatprep.subr.mxu0 %v1290
    %1875 = vmatpush1.msra.mxu0 %v1289
    %1876 = vmatprep.subr.mxu0 %v1294
    %1877 = vmatpush1.msra.mxu0 %v1293
    %1878 = vmatprep.subr.mxu0 %v1298
    %1879 = vmatpush1.msra.mxu0 %v1297
    %1880 = vmatprep.subr.mxu0 %v1302
    %1881 = vmatpush1.msra.mxu0 %v1301
    %1882 = vmatprep.subr.mxu0 %v1306
    %1883 = vmatpush1.msra.mxu0 %v1305
    %1884 = vmatprep.subr.mxu0 %v1310
    %1885 = vmatpush1.msra.mxu0 %v1309
    %1886 = vmatprep.subr.mxu0 %v1314
    %1887 = vmatpush1.msra.mxu0 %v1313
    %1888 = vmatprep.subr.mxu0 %v1318
    %1889 = vmatpush1.msra.mxu0 %v1317
    %1890 = vmatprep.subr.mxu0 %v1322
    %1891 = vmatpush1.msra.mxu0 %v1321
    %1892 = vmatprep.subr.mxu0 %v1326
    %1893 = vmatpush1.msra.mxu0 %v1325
    %1894 = vmatprep.subr.mxu0 %v1330
    %1895 = vmatpush1.msra.mxu0 %v1329
    %1896 = vmatprep.subr.mxu0 %v1334
    %1897 = vmatpush1.msra.mxu0 %v1333
    %1898 = vmatprep.subr.mxu0 %v1338
    %1899 = vmatpush1.msra.mxu0 %v1337
    %1900 = vmatprep.subr.mxu0 %v1342
    %1901 = vmatpush1.msra.mxu0 %v1341
    %1902 = vmatprep.subr.mxu0 %v1346
    %1903 = vmatpush1.msra.mxu0 %v1345
    %1904 = vmatprep.subr.mxu0 %v1350
    %1905 = vmatpush1.msra.mxu0 %v1349
    %1906 = vmatprep.subr.mxu0 %v1354
    %1907 = vmatpush1.msra.mxu0 %v1353
    %1908 = vmatprep.subr.mxu0 %v1358
    %1909 = vmatpush1.msra.mxu0 %v1357
    %1910 = vmatprep.subr.mxu0 %v1362
    %1911 = vmatpush1.msra.mxu0 %v1361
    %1912 = vmatprep.subr.mxu0 %v1366
    %1913 = vmatpush1.msra.mxu0 %v1365
    %1914 = vmatprep.subr.mxu0 %v1370
    %1915 = vmatpush1.msra.mxu0 %v1369
    %1916 = vmatprep.subr.mxu0 %v1374
    %1917 = vmatpush1.msra.mxu0 %v1373
    %1918 = vmatprep.subr.mxu0 %v1378
    %1919 = vmatpush1.msra.mxu0 %v1377
    %1920 = vmatprep.subr.mxu0 %v1382
    %1921 = vmatpush1.msra.mxu0 %v1381
    %1922 = vmatprep.mubr.f32.mxu0 %v878
    %1923 = vmatmul.mubr.f32.gmra.mrb[0].mxu0 %v877
    %v1924 = vpop.f32.mrb[0].mxu0
    %v1925 = vadd.f32 %v1764, %v1924
    %v1926 = vpop.f32.mrb[0].mxu0
    %v1927 = vadd.f32 %v1766, %v1926
    %1928 = vmatprep.mubr.f32.mxu0 %v886
    %1929 = vmatmul.mubr.f32.gmra.mrb[0].mxu0 %v885
    %v1930 = vpop.f32.mrb[0].mxu0
    %v1931 = vadd.f32 %v1770, %v1930
    %v1932 = vpop.f32.mrb[0].mxu0
    %v1933 = vadd.f32 %v1772, %v1932
    %1934 = vmatprep.mubr.f32.mxu0 %v894
    %1935 = vmatmul.mubr.f32.gmra.mrb[0].mxu0 %v893
    %v1936 = vpop.f32.mrb[0].mxu0
    %v1937 = vadd.f32 %v1776, %v1936
    %v1938 = vpop.f32.mrb[0].mxu0
    %v1939 = vadd.f32 %v1778, %v1938
    %1940 = vmatprep.mubr.f32.mxu0 %v902
    %1941 = vmatmul.mubr.f32.gmra.mrb[0].mxu0 %v901
    %v1942 = vpop.f32.mrb[0].mxu0
    %v1943 = vadd.f32 %v1782, %v1942
    %v1944 = vpop.f32.mrb[0].mxu0
    %v1945 = vadd.f32 %v1784, %v1944
    %1946 = vmatprep.mubr.f32.mxu0 %v910
    %1947 = vmatmul.mubr.f32.gmra.mrb[0].mxu0 %v909
    %v1948 = vpop.f32.mrb[0].mxu0
    %v1949 = vadd.f32 %v1788, %v1948
    %v1950 = vpop.f32.mrb[0].mxu0
    %v1951 = vadd.f32 %v1790, %v1950
    %1952 = vmatprep.mubr.f32.mxu0 %v918
    %1953 = vmatmul.mubr.f32.gmra.mrb[0].mxu0 %v917
    %v1954 = vpop.f32.mrb[0].mxu0
    %v1955 = vadd.f32 %v1794, %v1954
    %v1956 = vpop.f32.mrb[0].mxu0
    %v1957 = vadd.f32 %v1796, %v1956
    %1958 = vmatprep.mubr.f32.mxu0 %v926
    %1959 = vmatmul.mubr.f32.gmra.mrb[0].mxu0 %v925
    %v1960 = vpop.f32.mrb[0].mxu0
    %v1961 = vadd.f32 %v1800, %v1960
    %v1962 = vpop.f32.mrb[0].mxu0
    %v1963 = vadd.f32 %v1802, %v1962
    %1964 = vmatprep.mubr.f32.mxu0 %v934
    %1965 = vmatmul.mubr.f32.gmra.mrb[0].mxu0 %v933
    %v1966 = vpop.f32.mrb[0].mxu0
    %v1967 = vadd.f32 %v1806, %v1966
    %v1968 = vpop.f32.mrb[0].mxu0
    %v1969 = vadd.f32 %v1808, %v1968
    %1970 = vmatprep.mubr.f32.mxu0 %v942
    %1971 = vmatmul.mubr.f32.gmra.mrb[0].mxu0 %v941
    %v1972 = vpop.f32.mrb[0].mxu0
    %v1973 = vadd.f32 %v1812, %v1972
    %v1974 = vpop.f32.mrb[0].mxu0
    %v1975 = vadd.f32 %v1814, %v1974
    %1976 = vmatprep.mubr.f32.mxu0 %v950
    %1977 = vmatmul.mubr.f32.gmra.mrb[0].mxu0 %v949
    %v1978 = vpop.f32.mrb[0].mxu0
    %v1979 = vadd.f32 %v1818, %v1978
    %v1980 = vpop.f32.mrb[0].mxu0
    %v1981 = vadd.f32 %v1820, %v1980
    %1982 = vmatprep.mubr.f32.mxu0 %v958
    %1983 = vmatmul.mubr.f32.gmra.mrb[0].mxu0 %v957
    %v1984 = vpop.f32.mrb[0].mxu0
    %v1985 = vadd.f32 %v1824, %v1984
    %v1986 = vpop.f32.mrb[0].mxu0
    %v1987 = vadd.f32 %v1826, %v1986
    %1988 = vmatprep.mubr.f32.mxu0 %v966
    %1989 = vmatmul.mubr.f32.gmra.mrb[0].mxu0 %v965
    %v1990 = vpop.f32.mrb[0].mxu0
    %v1991 = vadd.f32 %v1830, %v1990
    %v1992 = vpop.f32.mrb[0].mxu0
    %v1993 = vadd.f32 %v1832, %v1992
    %1994 = vmatprep.mubr.f32.mxu0 %v974
    %1995 = vmatmul.mubr.f32.gmra.mrb[0].mxu0 %v973
    %v1996 = vpop.f32.mrb[0].mxu0
    %v1997 = vadd.f32 %v1836, %v1996
    %v1998 = vpop.f32.mrb[0].mxu0
    %v1999 = vadd.f32 %v1838, %v1998
    %2000 = vmatprep.mubr.f32.mxu0 %v982
    %2001 = vmatmul.mubr.f32.gmra.mrb[0].mxu0 %v981
    %v2002 = vpop.f32.mrb[0].mxu0
    %v2003 = vadd.f32 %v1842, %v2002
    %v2004 = vpop.f32.mrb[0].mxu0
    %v2005 = vadd.f32 %v1844, %v2004
    %2006 = vmatprep.mubr.f32.mxu0 %v990
    %2007 = vmatmul.mubr.f32.gmra.mrb[0].mxu0 %v989
    %v2008 = vpop.f32.mrb[0].mxu0
    %v2009 = vadd.f32 %v1848, %v2008
    %v2010 = vpop.f32.mrb[0].mxu0
    %v2011 = vadd.f32 %v1850, %v2010
    %2012 = vmatprep.mubr.f32.mxu0 %v998
    %2013 = vmatmul.mubr.f32.gmra.mrb[0].mxu0 %v997
    %v2014 = vpop.f32.mrb[0].mxu0
    %v2015 = vadd.f32 %v1854, %v2014
    %v2016 = vpop.f32.mrb[0].mxu0
    %v2017 = vadd.f32 %v1856, %v2016
    %2018 = vdwg.mxu0
    %2019 = vmatprep.subr.mxu0 %v1386
    %2020 = vmatpush1.msra.mxu0 %v1385
    %2021 = vmatprep.subr.mxu0 %v1390
    %2022 = vmatpush1.msra.mxu0 %v1389
    %2023 = vmatprep.subr.mxu0 %v1394
    %2024 = vmatpush1.msra.mxu0 %v1393
    %2025 = vmatprep.subr.mxu0 %v1398
    %2026 = vmatpush1.msra.mxu0 %v1397
    %2027 = vmatprep.subr.mxu0 %v1402
    %2028 = vmatpush1.msra.mxu0 %v1401
    %2029 = vmatprep.subr.mxu0 %v1406
    %2030 = vmatpush1.msra.mxu0 %v1405
    %2031 = vmatprep.subr.mxu0 %v1410
    %2032 = vmatpush1.msra.mxu0 %v1409
    %2033 = vmatprep.subr.mxu0 %v1414
    %2034 = vmatpush1.msra.mxu0 %v1413
    %2035 = vmatprep.subr.mxu0 %v1418
    %2036 = vmatpush1.msra.mxu0 %v1417
    %2037 = vmatprep.subr.mxu0 %v1422
    %2038 = vmatpush1.msra.mxu0 %v1421
    %2039 = vmatprep.subr.mxu0 %v1426
    %2040 = vmatpush1.msra.mxu0 %v1425
    %2041 = vmatprep.subr.mxu0 %v1430
    %2042 = vmatpush1.msra.mxu0 %v1429
    %2043 = vmatprep.subr.mxu0 %v1434
    %2044 = vmatpush1.msra.mxu0 %v1433
    %2045 = vmatprep.subr.mxu0 %v1438
    %2046 = vmatpush1.msra.mxu0 %v1437
    %2047 = vmatprep.subr.mxu0 %v1442
    %2048 = vmatpush1.msra.mxu0 %v1441
    %2049 = vmatprep.subr.mxu0 %v1446
    %2050 = vmatpush1.msra.mxu0 %v1445
    %2051 = vmatprep.subr.mxu0 %v1450
    %2052 = vmatpush1.msra.mxu0 %v1449
    %2053 = vmatprep.subr.mxu0 %v1454
    %2054 = vmatpush1.msra.mxu0 %v1453
    %2055 = vmatprep.subr.mxu0 %v1458
    %2056 = vmatpush1.msra.mxu0 %v1457
    %2057 = vmatprep.subr.mxu0 %v1462
    %2058 = vmatpush1.msra.mxu0 %v1461
    %2059 = vmatprep.subr.mxu0 %v1466
    %2060 = vmatpush1.msra.mxu0 %v1465
    %2061 = vmatprep.subr.mxu0 %v1470
    %2062 = vmatpush1.msra.mxu0 %v1469
    %2063 = vmatprep.subr.mxu0 %v1474
    %2064 = vmatpush1.msra.mxu0 %v1473
    %2065 = vmatprep.subr.mxu0 %v1478
    %2066 = vmatpush1.msra.mxu0 %v1477
    %2067 = vmatprep.subr.mxu0 %v1482
    %2068 = vmatpush1.msra.mxu0 %v1481
    %2069 = vmatprep.subr.mxu0 %v1486
    %2070 = vmatpush1.msra.mxu0 %v1485
    %2071 = vmatprep.subr.mxu0 %v1490
    %2072 = vmatpush1.msra.mxu0 %v1489
    %2073 = vmatprep.subr.mxu0 %v1494
    %2074 = vmatpush1.msra.mxu0 %v1493
    %2075 = vmatprep.subr.mxu0 %v1498
    %2076 = vmatpush1.msra.mxu0 %v1497
    %2077 = vmatprep.subr.mxu0 %v1502
    %2078 = vmatpush1.msra.mxu0 %v1501
    %2079 = vmatprep.subr.mxu0 %v1506
    %2080 = vmatpush1.msra.mxu0 %v1505
    %2081 = vmatprep.subr.mxu0 %v1510
    %2082 = vmatpush1.msra.mxu0 %v1509
    %2083 = vmatprep.mubr.f32.mxu0 %v880
    %2084 = vmatmul.mubr.f32.gmra.mrb[0].mxu0 %v879
    %v2085 = vpop.f32.mrb[0].mxu0
    %v2086 = vadd.f32 %v1925, %v2085
    %v2087 = vpop.f32.mrb[0].mxu0
    %v2088 = vadd.f32 %v1927, %v2087
    %2089 = vmatprep.mubr.f32.mxu0 %v888
    %2090 = vmatmul.mubr.f32.gmra.mrb[0].mxu0 %v887
    %v2091 = vpop.f32.mrb[0].mxu0
    %v2092 = vadd.f32 %v1931, %v2091
    %v2093 = vpop.f32.mrb[0].mxu0
    %v2094 = vadd.f32 %v1933, %v2093
    %2095 = vmatprep.mubr.f32.mxu0 %v896
    %2096 = vmatmul.mubr.f32.gmra.mrb[0].mxu0 %v895
    %v2097 = vpop.f32.mrb[0].mxu0
    %v2098 = vadd.f32 %v1937, %v2097
    %v2099 = vpop.f32.mrb[0].mxu0
    %v2100 = vadd.f32 %v1939, %v2099
    %2101 = vmatprep.mubr.f32.mxu0 %v904
    %2102 = vmatmul.mubr.f32.gmra.mrb[0].mxu0 %v903
    %v2103 = vpop.f32.mrb[0].mxu0
    %v2104 = vadd.f32 %v1943, %v2103
    %v2105 = vpop.f32.mrb[0].mxu0
    %v2106 = vadd.f32 %v1945, %v2105
    %2107 = vmatprep.mubr.f32.mxu0 %v912
    %2108 = vmatmul.mubr.f32.gmra.mrb[0].mxu0 %v911
    %v2109 = vpop.f32.mrb[0].mxu0
    %v2110 = vadd.f32 %v1949, %v2109
    %v2111 = vpop.f32.mrb[0].mxu0
    %v2112 = vadd.f32 %v1951, %v2111
    %2113 = vmatprep.mubr.f32.mxu0 %v920
    %2114 = vmatmul.mubr.f32.gmra.mrb[0].mxu0 %v919
    %v2115 = vpop.f32.mrb[0].mxu0
    %v2116 = vadd.f32 %v1955, %v2115
    %v2117 = vpop.f32.mrb[0].mxu0
    %v2118 = vadd.f32 %v1957, %v2117
    %2119 = vmatprep.mubr.f32.mxu0 %v928
    %2120 = vmatmul.mubr.f32.gmra.mrb[0].mxu0 %v927
    %v2121 = vpop.f32.mrb[0].mxu0
    %v2122 = vadd.f32 %v1961, %v2121
    %v2123 = vpop.f32.mrb[0].mxu0
    %v2124 = vadd.f32 %v1963, %v2123
    %2125 = vmatprep.mubr.f32.mxu0 %v936
    %2126 = vmatmul.mubr.f32.gmra.mrb[0].mxu0 %v935
    %v2127 = vpop.f32.mrb[0].mxu0
    %v2128 = vadd.f32 %v1967, %v2127
    %v2129 = vpop.f32.mrb[0].mxu0
    %v2130 = vadd.f32 %v1969, %v2129
    %2131 = vmatprep.mubr.f32.mxu0 %v944
    %2132 = vmatmul.mubr.f32.gmra.mrb[0].mxu0 %v943
    %v2133 = vpop.f32.mrb[0].mxu0
    %v2134 = vadd.f32 %v1973, %v2133
    %v2135 = vpop.f32.mrb[0].mxu0
    %v2136 = vadd.f32 %v1975, %v2135
    %2137 = vmatprep.mubr.f32.mxu0 %v952
    %2138 = vmatmul.mubr.f32.gmra.mrb[0].mxu0 %v951
    %v2139 = vpop.f32.mrb[0].mxu0
    %v2140 = vadd.f32 %v1979, %v2139
    %v2141 = vpop.f32.mrb[0].mxu0
    %v2142 = vadd.f32 %v1981, %v2141
    %2143 = vmatprep.mubr.f32.mxu0 %v960
    %2144 = vmatmul.mubr.f32.gmra.mrb[0].mxu0 %v959
    %v2145 = vpop.f32.mrb[0].mxu0
    %v2146 = vadd.f32 %v1985, %v2145
    %v2147 = vpop.f32.mrb[0].mxu0
    %v2148 = vadd.f32 %v1987, %v2147
    %2149 = vmatprep.mubr.f32.mxu0 %v968
    %2150 = vmatmul.mubr.f32.gmra.mrb[0].mxu0 %v967
    %v2151 = vpop.f32.mrb[0].mxu0
    %v2152 = vadd.f32 %v1991, %v2151
    %v2153 = vpop.f32.mrb[0].mxu0
    %v2154 = vadd.f32 %v1993, %v2153
    %2155 = vmatprep.mubr.f32.mxu0 %v976
    %2156 = vmatmul.mubr.f32.gmra.mrb[0].mxu0 %v975
    %v2157 = vpop.f32.mrb[0].mxu0
    %v2158 = vadd.f32 %v1997, %v2157
    %v2159 = vpop.f32.mrb[0].mxu0
    %v2160 = vadd.f32 %v1999, %v2159
    %2161 = vmatprep.mubr.f32.mxu0 %v984
    %2162 = vmatmul.mubr.f32.gmra.mrb[0].mxu0 %v983
    %v2163 = vpop.f32.mrb[0].mxu0
    %v2164 = vadd.f32 %v2003, %v2163
    %v2165 = vpop.f32.mrb[0].mxu0
    %v2166 = vadd.f32 %v2005, %v2165
    %2167 = vmatprep.mubr.f32.mxu0 %v992
    %2168 = vmatmul.mubr.f32.gmra.mrb[0].mxu0 %v991
    %v2169 = vpop.f32.mrb[0].mxu0
    %v2170 = vadd.f32 %v2009, %v2169
    %v2171 = vpop.f32.mrb[0].mxu0
    %v2172 = vadd.f32 %v2011, %v2171
    %2173 = vmatprep.mubr.f32.mxu0 %v1000
    %2174 = vmatmul.mubr.f32.gmra.mrb[0].mxu0 %v999
    %v2175 = vpop.f32.mrb[0].mxu0
    %v2176 = vadd.f32 %v2015, %v2175
    %v2177 = vpop.f32.mrb[0].mxu0
    %v2178 = vadd.f32 %v2017, %v2177
    %2179 = vdwg.mxu0
    %2180 = vmatprep.subr.mxu0 %v1004
    %2181 = vmatpush1.msra.mxu0 %v1003
    %2182 = vmatprep.subr.mxu0 %v1008
    %2183 = vmatpush1.msra.mxu0 %v1007
    %2184 = vmatprep.subr.mxu0 %v1012
    %2185 = vmatpush1.msra.mxu0 %v1011
    %2186 = vmatprep.subr.mxu0 %v1016
    %2187 = vmatpush1.msra.mxu0 %v1015
    %2188 = vmatprep.subr.mxu0 %v1020
    %2189 = vmatpush1.msra.mxu0 %v1019
    %2190 = vmatprep.subr.mxu0 %v1024
    %2191 = vmatpush1.msra.mxu0 %v1023
    %2192 = vmatprep.subr.mxu0 %v1028
    %2193 = vmatpush1.msra.mxu0 %v1027
    %2194 = vmatprep.subr.mxu0 %v1032
    %2195 = vmatpush1.msra.mxu0 %v1031
    %2196 = vmatprep.subr.mxu0 %v1036
    %2197 = vmatpush1.msra.mxu0 %v1035
    %2198 = vmatprep.subr.mxu0 %v1040
    %2199 = vmatpush1.msra.mxu0 %v1039
    %2200 = vmatprep.subr.mxu0 %v1044
    %2201 = vmatpush1.msra.mxu0 %v1043
    %2202 = vmatprep.subr.mxu0 %v1048
    %2203 = vmatpush1.msra.mxu0 %v1047
    %2204 = vmatprep.subr.mxu0 %v1052
    %2205 = vmatpush1.msra.mxu0 %v1051
    %2206 = vmatprep.subr.mxu0 %v1056
    %2207 = vmatpush1.msra.mxu0 %v1055
    %2208 = vmatprep.subr.mxu0 %v1060
    %2209 = vmatpush1.msra.mxu0 %v1059
    %2210 = vmatprep.subr.mxu0 %v1064
    %2211 = vmatpush1.msra.mxu0 %v1063
    %2212 = vmatprep.subr.mxu0 %v1068
    %2213 = vmatpush1.msra.mxu0 %v1067
    %2214 = vmatprep.subr.mxu0 %v1072
    %2215 = vmatpush1.msra.mxu0 %v1071
    %2216 = vmatprep.subr.mxu0 %v1076
    %2217 = vmatpush1.msra.mxu0 %v1075
    %2218 = vmatprep.subr.mxu0 %v1080
    %2219 = vmatpush1.msra.mxu0 %v1079
    %2220 = vmatprep.subr.mxu0 %v1084
    %2221 = vmatpush1.msra.mxu0 %v1083
    %2222 = vmatprep.subr.mxu0 %v1088
    %2223 = vmatpush1.msra.mxu0 %v1087
    %2224 = vmatprep.subr.mxu0 %v1092
    %2225 = vmatpush1.msra.mxu0 %v1091
    %2226 = vmatprep.subr.mxu0 %v1096
    %2227 = vmatpush1.msra.mxu0 %v1095
    %2228 = vmatprep.subr.mxu0 %v1100
    %2229 = vmatpush1.msra.mxu0 %v1099
    %2230 = vmatprep.subr.mxu0 %v1104
    %2231 = vmatpush1.msra.mxu0 %v1103
    %2232 = vmatprep.subr.mxu0 %v1108
    %2233 = vmatpush1.msra.mxu0 %v1107
    %2234 = vmatprep.subr.mxu0 %v1112
    %2235 = vmatpush1.msra.mxu0 %v1111
    %2236 = vmatprep.subr.mxu0 %v1116
    %2237 = vmatpush1.msra.mxu0 %v1115
    %2238 = vmatprep.subr.mxu0 %v1120
    %2239 = vmatpush1.msra.mxu0 %v1119
    %2240 = vmatprep.subr.mxu0 %v1124
    %2241 = vmatpush1.msra.mxu0 %v1123
    %2242 = vmatprep.subr.mxu0 %v1128
    %2243 = vmatpush1.msra.mxu0 %v1127
    %2244 = vmatprep.mubr.f32.mxu0 %v874
    %2245 = vmatmul.mubr.f32.gmra.mrb[0].mxu0 %v873
    %v2246 = vpop.f32.mrb[0].mxu0
    %v2247 = vadd.f32 %v1527, %v2246
    %v2248 = vpop.f32.mrb[0].mxu0
    %v2249 = vadd.f32 %v1531, %v2248
    %2250 = vmatprep.mubr.f32.mxu0 %v882
    %2251 = vmatmul.mubr.f32.gmra.mrb[0].mxu0 %v881
    %v2252 = vpop.f32.mrb[0].mxu0
    %v2253 = vadd.f32 %v1527, %v2252
    %v2254 = vpop.f32.mrb[0].mxu0
    %v2255 = vadd.f32 %v1531, %v2254
    %2256 = vmatprep.mubr.f32.mxu0 %v890
    %2257 = vmatmul.mubr.f32.gmra.mrb[0].mxu0 %v889
    %v2258 = vpop.f32.mrb[0].mxu0
    %v2259 = vadd.f32 %v1527, %v2258
    %v2260 = vpop.f32.mrb[0].mxu0
    %v2261 = vadd.f32 %v1531, %v2260
    %2262 = vmatprep.mubr.f32.mxu0 %v898
    %2263 = vmatmul.mubr.f32.gmra.mrb[0].mxu0 %v897
    %v2264 = vpop.f32.mrb[0].mxu0
    %v2265 = vadd.f32 %v1527, %v2264
    %v2266 = vpop.f32.mrb[0].mxu0
    %v2267 = vadd.f32 %v1531, %v2266
    %2268 = vmatprep.mubr.f32.mxu0 %v906
    %2269 = vmatmul.mubr.f32.gmra.mrb[0].mxu0 %v905
    %v2270 = vpop.f32.mrb[0].mxu0
    %v2271 = vadd.f32 %v1527, %v2270
    %v2272 = vpop.f32.mrb[0].mxu0
    %v2273 = vadd.f32 %v1531, %v2272
    %2274 = vmatprep.mubr.f32.mxu0 %v914
    %2275 = vmatmul.mubr.f32.gmra.mrb[0].mxu0 %v913
    %v2276 = vpop.f32.mrb[0].mxu0
    %v2277 = vadd.f32 %v1527, %v2276
    %v2278 = vpop.f32.mrb[0].mxu0
    %v2279 = vadd.f32 %v1531, %v2278
    %2280 = vmatprep.mubr.f32.mxu0 %v922
    %2281 = vmatmul.mubr.f32.gmra.mrb[0].mxu0 %v921
    %v2282 = vpop.f32.mrb[0].mxu0
    %v2283 = vadd.f32 %v1527, %v2282
    %v2284 = vpop.f32.mrb[0].mxu0
    %v2285 = vadd.f32 %v1531, %v2284
    %2286 = vmatprep.mubr.f32.mxu0 %v930
    %2287 = vmatmul.mubr.f32.gmra.mrb[0].mxu0 %v929
    %v2288 = vpop.f32.mrb[0].mxu0
    %v2289 = vadd.f32 %v1527, %v2288
    %v2290 = vpop.f32.mrb[0].mxu0
    %v2291 = vadd.f32 %v1531, %v2290
    %2292 = vmatprep.mubr.f32.mxu0 %v938
    %2293 = vmatmul.mubr.f32.gmra.mrb[0].mxu0 %v937
    %v2294 = vpop.f32.mrb[0].mxu0
    %v2295 = vadd.f32 %v1527, %v2294
    %v2296 = vpop.f32.mrb[0].mxu0
    %v2297 = vadd.f32 %v1531, %v2296
    %2298 = vmatprep.mubr.f32.mxu0 %v946
    %2299 = vmatmul.mubr.f32.gmra.mrb[0].mxu0 %v945
    %v2300 = vpop.f32.mrb[0].mxu0
    %v2301 = vadd.f32 %v1527, %v2300
    %v2302 = vpop.f32.mrb[0].mxu0
    %v2303 = vadd.f32 %v1531, %v2302
    %2304 = vmatprep.mubr.f32.mxu0 %v954
    %2305 = vmatmul.mubr.f32.gmra.mrb[0].mxu0 %v953
    %v2306 = vpop.f32.mrb[0].mxu0
    %v2307 = vadd.f32 %v1527, %v2306
    %v2308 = vpop.f32.mrb[0].mxu0
    %v2309 = vadd.f32 %v1531, %v2308
    %2310 = vmatprep.mubr.f32.mxu0 %v962
    %2311 = vmatmul.mubr.f32.gmra.mrb[0].mxu0 %v961
    %v2312 = vpop.f32.mrb[0].mxu0
    %v2313 = vadd.f32 %v1527, %v2312
    %v2314 = vpop.f32.mrb[0].mxu0
    %v2315 = vadd.f32 %v1531, %v2314
    %2316 = vmatprep.mubr.f32.mxu0 %v970
    %2317 = vmatmul.mubr.f32.gmra.mrb[0].mxu0 %v969
    %v2318 = vpop.f32.mrb[0].mxu0
    %v2319 = vadd.f32 %v1527, %v2318
    %v2320 = vpop.f32.mrb[0].mxu0
    %v2321 = vadd.f32 %v1531, %v2320
    %2322 = vmatprep.mubr.f32.mxu0 %v978
    %2323 = vmatmul.mubr.f32.gmra.mrb[0].mxu0 %v977
    %v2324 = vpop.f32.mrb[0].mxu0
    %v2325 = vadd.f32 %v1527, %v2324
    %v2326 = vpop.f32.mrb[0].mxu0
    %v2327 = vadd.f32 %v1531, %v2326
    %2328 = vmatprep.mubr.f32.mxu0 %v986
    %2329 = vmatmul.mubr.f32.gmra.mrb[0].mxu0 %v985
    %v2330 = vpop.f32.mrb[0].mxu0
    %v2331 = vadd.f32 %v1527, %v2330
    %v2332 = vpop.f32.mrb[0].mxu0
    %v2333 = vadd.f32 %v1531, %v2332
    %2334 = vmatprep.mubr.f32.mxu0 %v994
    %2335 = vmatmul.mubr.f32.gmra.mrb[0].mxu0 %v993
    %v2336 = vpop.f32.mrb[0].mxu0
    %v2337 = vadd.f32 %v1527, %v2336
    %v2338 = vpop.f32.mrb[0].mxu0
    %v2339 = vadd.f32 %v1531, %v2338
    %2340 = vdwg.mxu0
    %2341 = vmatprep.subr.mxu0 %v1132
    %2342 = vmatpush1.msra.mxu0 %v1131
    %2343 = vmatprep.subr.mxu0 %v1136
    %2344 = vmatpush1.msra.mxu0 %v1135
    %2345 = vmatprep.subr.mxu0 %v1140
    %2346 = vmatpush1.msra.mxu0 %v1139
    %2347 = vmatprep.subr.mxu0 %v1144
    %2348 = vmatpush1.msra.mxu0 %v1143
    %2349 = vmatprep.subr.mxu0 %v1148
    %2350 = vmatpush1.msra.mxu0 %v1147
    %2351 = vmatprep.subr.mxu0 %v1152
    %2352 = vmatpush1.msra.mxu0 %v1151
    %2353 = vmatprep.subr.mxu0 %v1156
    %2354 = vmatpush1.msra.mxu0 %v1155
    %2355 = vmatprep.subr.mxu0 %v1160
    %2356 = vmatpush1.msra.mxu0 %v1159
    %2357 = vmatprep.subr.mxu0 %v1164
    %2358 = vmatpush1.msra.mxu0 %v1163
    %2359 = vmatprep.subr.mxu0 %v1168
    %2360 = vmatpush1.msra.mxu0 %v1167
    %2361 = vmatprep.subr.mxu0 %v1172
    %2362 = vmatpush1.msra.mxu0 %v1171
    %2363 = vmatprep.subr.mxu0 %v1176
    %2364 = vmatpush1.msra.mxu0 %v1175
    %2365 = vmatprep.subr.mxu0 %v1180
    %2366 = vmatpush1.msra.mxu0 %v1179
    %2367 = vmatprep.subr.mxu0 %v1184
    %2368 = vmatpush1.msra.mxu0 %v1183
    %2369 = vmatprep.subr.mxu0 %v1188
    %2370 = vmatpush1.msra.mxu0 %v1187
    %2371 = vmatprep.subr.mxu0 %v1192
    %2372 = vmatpush1.msra.mxu0 %v1191
    %2373 = vmatprep.subr.mxu0 %v1196
    %2374 = vmatpush1.msra.mxu0 %v1195
    %2375 = vmatprep.subr.mxu0 %v1200
    %2376 = vmatpush1.msra.mxu0 %v1199
    %2377 = vmatprep.subr.mxu0 %v1204
    %2378 = vmatpush1.msra.mxu0 %v1203
    %2379 = vmatprep.subr.mxu0 %v1208
    %2380 = vmatpush1.msra.mxu0 %v1207
    %2381 = vmatprep.subr.mxu0 %v1212
    %2382 = vmatpush1.msra.mxu0 %v1211
    %2383 = vmatprep.subr.mxu0 %v1216
    %2384 = vmatpush1.msra.mxu0 %v1215
    %2385 = vmatprep.subr.mxu0 %v1220
    %2386 = vmatpush1.msra.mxu0 %v1219
    %2387 = vmatprep.subr.mxu0 %v1224
    %2388 = vmatpush1.msra.mxu0 %v1223
    %2389 = vmatprep.subr.mxu0 %v1228
    %2390 = vmatpush1.msra.mxu0 %v1227
    %2391 = vmatprep.subr.mxu0 %v1232
    %2392 = vmatpush1.msra.mxu0 %v1231
    %2393 = vmatprep.subr.mxu0 %v1236
    %2394 = vmatpush1.msra.mxu0 %v1235
    %2395 = vmatprep.subr.mxu0 %v1240
    %2396 = vmatpush1.msra.mxu0 %v1239
    %2397 = vmatprep.subr.mxu0 %v1244
    %2398 = vmatpush1.msra.mxu0 %v1243
    %2399 = vmatprep.subr.mxu0 %v1248
    %2400 = vmatpush1.msra.mxu0 %v1247
    %2401 = vmatprep.subr.mxu0 %v1252
    %2402 = vmatpush1.msra.mxu0 %v1251
    %2403 = vmatprep.subr.mxu0 %v1256
    %2404 = vmatpush1.msra.mxu0 %v1255
    %2405 = vmatprep.mubr.f32.mxu0 %v876
    %2406 = vmatmul.mubr.f32.gmra.mrb[0].mxu0 %v875
    %v2407 = vpop.f32.mrb[0].mxu0
    %v2408 = vadd.f32 %v2247, %v2407
    %v2409 = vpop.f32.mrb[0].mxu0
    %v2410 = vadd.f32 %v2249, %v2409
    %2411 = vmatprep.mubr.f32.mxu0 %v884
    %2412 = vmatmul.mubr.f32.gmra.mrb[0].mxu0 %v883
    %v2413 = vpop.f32.mrb[0].mxu0
    %v2414 = vadd.f32 %v2253, %v2413
    %v2415 = vpop.f32.mrb[0].mxu0
    %v2416 = vadd.f32 %v2255, %v2415
    %2417 = vmatprep.mubr.f32.mxu0 %v892
    %2418 = vmatmul.mubr.f32.gmra.mrb[0].mxu0 %v891
    %v2419 = vpop.f32.mrb[0].mxu0
    %v2420 = vadd.f32 %v2259, %v2419
    %v2421 = vpop.f32.mrb[0].mxu0
    %v2422 = vadd.f32 %v2261, %v2421
    %2423 = vmatprep.mubr.f32.mxu0 %v900
    %2424 = vmatmul.mubr.f32.gmra.mrb[0].mxu0 %v899
    %v2425 = vpop.f32.mrb[0].mxu0
    %v2426 = vadd.f32 %v2265, %v2425
    %v2427 = vpop.f32.mrb[0].mxu0
    %v2428 = vadd.f32 %v2267, %v2427
    %2429 = vmatprep.mubr.f32.mxu0 %v908
    %2430 = vmatmul.mubr.f32.gmra.mrb[0].mxu0 %v907
    %v2431 = vpop.f32.mrb[0].mxu0
    %v2432 = vadd.f32 %v2271, %v2431
    %v2433 = vpop.f32.mrb[0].mxu0
    %v2434 = vadd.f32 %v2273, %v2433
    %2435 = vmatprep.mubr.f32.mxu0 %v916
    %2436 = vmatmul.mubr.f32.gmra.mrb[0].mxu0 %v915
    %v2437 = vpop.f32.mrb[0].mxu0
    %v2438 = vadd.f32 %v2277, %v2437
    %v2439 = vpop.f32.mrb[0].mxu0
    %v2440 = vadd.f32 %v2279, %v2439
    %2441 = vmatprep.mubr.f32.mxu0 %v924
    %2442 = vmatmul.mubr.f32.gmra.mrb[0].mxu0 %v923
    %v2443 = vpop.f32.mrb[0].mxu0
    %v2444 = vadd.f32 %v2283, %v2443
    %v2445 = vpop.f32.mrb[0].mxu0
    %v2446 = vadd.f32 %v2285, %v2445
    %2447 = vmatprep.mubr.f32.mxu0 %v932
    %2448 = vmatmul.mubr.f32.gmra.mrb[0].mxu0 %v931
    %v2449 = vpop.f32.mrb[0].mxu0
    %v2450 = vadd.f32 %v2289, %v2449
    %v2451 = vpop.f32.mrb[0].mxu0
    %v2452 = vadd.f32 %v2291, %v2451
    %2453 = vmatprep.mubr.f32.mxu0 %v940
    %2454 = vmatmul.mubr.f32.gmra.mrb[0].mxu0 %v939
    %v2455 = vpop.f32.mrb[0].mxu0
    %v2456 = vadd.f32 %v2295, %v2455
    %v2457 = vpop.f32.mrb[0].mxu0
    %v2458 = vadd.f32 %v2297, %v2457
    %2459 = vmatprep.mubr.f32.mxu0 %v948
    %2460 = vmatmul.mubr.f32.gmra.mrb[0].mxu0 %v947
    %v2461 = vpop.f32.mrb[0].mxu0
    %v2462 = vadd.f32 %v2301, %v2461
    %v2463 = vpop.f32.mrb[0].mxu0
    %v2464 = vadd.f32 %v2303, %v2463
    %2465 = vmatprep.mubr.f32.mxu0 %v956
    %2466 = vmatmul.mubr.f32.gmra.mrb[0].mxu0 %v955
    %v2467 = vpop.f32.mrb[0].mxu0
    %v2468 = vadd.f32 %v2307, %v2467
    %v2469 = vpop.f32.mrb[0].mxu0
    %v2470 = vadd.f32 %v2309, %v2469
    %2471 = vmatprep.mubr.f32.mxu0 %v964
    %2472 = vmatmul.mubr.f32.gmra.mrb[0].mxu0 %v963
    %v2473 = vpop.f32.mrb[0].mxu0
    %v2474 = vadd.f32 %v2313, %v2473
    %v2475 = vpop.f32.mrb[0].mxu0
    %v2476 = vadd.f32 %v2315, %v2475
    %2477 = vmatprep.mubr.f32.mxu0 %v972
    %2478 = vmatmul.mubr.f32.gmra.mrb[0].mxu0 %v971
    %v2479 = vpop.f32.mrb[0].mxu0
    %v2480 = vadd.f32 %v2319, %v2479
    %v2481 = vpop.f32.mrb[0].mxu0
    %v2482 = vadd.f32 %v2321, %v2481
    %2483 = vmatprep.mubr.f32.mxu0 %v980
    %2484 = vmatmul.mubr.f32.gmra.mrb[0].mxu0 %v979
    %v2485 = vpop.f32.mrb[0].mxu0
    %v2486 = vadd.f32 %v2325, %v2485
    %v2487 = vpop.f32.mrb[0].mxu0
    %v2488 = vadd.f32 %v2327, %v2487
    %2489 = vmatprep.mubr.f32.mxu0 %v988
    %2490 = vmatmul.mubr.f32.gmra.mrb[0].mxu0 %v987
    %v2491 = vpop.f32.mrb[0].mxu0
    %v2492 = vadd.f32 %v2331, %v2491
    %v2493 = vpop.f32.mrb[0].mxu0
    %v2494 = vadd.f32 %v2333, %v2493
    %2495 = vmatprep.mubr.f32.mxu0 %v996
    %2496 = vmatmul.mubr.f32.gmra.mrb[0].mxu0 %v995
    %v2497 = vpop.f32.mrb[0].mxu0
    %v2498 = vadd.f32 %v2337, %v2497
    %v2499 = vpop.f32.mrb[0].mxu0
    %v2500 = vadd.f32 %v2339, %v2499
    %2501 = vdwg.mxu0
    %2502 = vmatprep.subr.mxu0 %v1260
    %2503 = vmatpush1.msra.mxu0 %v1259
    %2504 = vmatprep.subr.mxu0 %v1264
    %2505 = vmatpush1.msra.mxu0 %v1263
    %2506 = vmatprep.subr.mxu0 %v1268
    %2507 = vmatpush1.msra.mxu0 %v1267
    %2508 = vmatprep.subr.mxu0 %v1272
    %2509 = vmatpush1.msra.mxu0 %v1271
    %2510 = vmatprep.subr.mxu0 %v1276
    %2511 = vmatpush1.msra.mxu0 %v1275
    %2512 = vmatprep.subr.mxu0 %v1280
    %2513 = vmatpush1.msra.mxu0 %v1279
    %2514 = vmatprep.subr.mxu0 %v1284
    %2515 = vmatpush1.msra.mxu0 %v1283
    %2516 = vmatprep.subr.mxu0 %v1288
    %2517 = vmatpush1.msra.mxu0 %v1287
    %2518 = vmatprep.subr.mxu0 %v1292
    %2519 = vmatpush1.msra.mxu0 %v1291
    %2520 = vmatprep.subr.mxu0 %v1296
    %2521 = vmatpush1.msra.mxu0 %v1295
    %2522 = vmatprep.subr.mxu0 %v1300
    %2523 = vmatpush1.msra.mxu0 %v1299
    %2524 = vmatprep.subr.mxu0 %v1304
    %2525 = vmatpush1.msra.mxu0 %v1303
    %2526 = vmatprep.subr.mxu0 %v1308
    %2527 = vmatpush1.msra.mxu0 %v1307
    %2528 = vmatprep.subr.mxu0 %v1312
    %2529 = vmatpush1.msra.mxu0 %v1311
    %2530 = vmatprep.subr.mxu0 %v1316
    %2531 = vmatpush1.msra.mxu0 %v1315
    %2532 = vmatprep.subr.mxu0 %v1320
    %2533 = vmatpush1.msra.mxu0 %v1319
    %2534 = vmatprep.subr.mxu0 %v1324
    %2535 = vmatpush1.msra.mxu0 %v1323
    %2536 = vmatprep.subr.mxu0 %v1328
    %2537 = vmatpush1.msra.mxu0 %v1327
    %2538 = vmatprep.subr.mxu0 %v1332
    %2539 = vmatpush1.msra.mxu0 %v1331
    %2540 = vmatprep.subr.mxu0 %v1336
    %2541 = vmatpush1.msra.mxu0 %v1335
    %2542 = vmatprep.subr.mxu0 %v1340
    %2543 = vmatpush1.msra.mxu0 %v1339
    %2544 = vmatprep.subr.mxu0 %v1344
    %2545 = vmatpush1.msra.mxu0 %v1343
    %2546 = vmatprep.subr.mxu0 %v1348
    %2547 = vmatpush1.msra.mxu0 %v1347
    %2548 = vmatprep.subr.mxu0 %v1352
    %2549 = vmatpush1.msra.mxu0 %v1351
    %2550 = vmatprep.subr.mxu0 %v1356
    %2551 = vmatpush1.msra.mxu0 %v1355
    %2552 = vmatprep.subr.mxu0 %v1360
    %2553 = vmatpush1.msra.mxu0 %v1359
    %2554 = vmatprep.subr.mxu0 %v1364
    %2555 = vmatpush1.msra.mxu0 %v1363
    %2556 = vmatprep.subr.mxu0 %v1368
    %2557 = vmatpush1.msra.mxu0 %v1367
    %2558 = vmatprep.subr.mxu0 %v1372
    %2559 = vmatpush1.msra.mxu0 %v1371
    %2560 = vmatprep.subr.mxu0 %v1376
    %2561 = vmatpush1.msra.mxu0 %v1375
    %2562 = vmatprep.subr.mxu0 %v1380
    %2563 = vmatpush1.msra.mxu0 %v1379
    %2564 = vmatprep.subr.mxu0 %v1384
    %2565 = vmatpush1.msra.mxu0 %v1383
    %2566 = vmatprep.mubr.f32.mxu0 %v878
    %2567 = vmatmul.mubr.f32.gmra.mrb[0].mxu0 %v877
    %v2568 = vpop.f32.mrb[0].mxu0
    %v2569 = vadd.f32 %v2408, %v2568
    %v2570 = vpop.f32.mrb[0].mxu0
    %v2571 = vadd.f32 %v2410, %v2570
    %2572 = vmatprep.mubr.f32.mxu0 %v886
    %2573 = vmatmul.mubr.f32.gmra.mrb[0].mxu0 %v885
    %v2574 = vpop.f32.mrb[0].mxu0
    %v2575 = vadd.f32 %v2414, %v2574
    %v2576 = vpop.f32.mrb[0].mxu0
    %v2577 = vadd.f32 %v2416, %v2576
    %2578 = vmatprep.mubr.f32.mxu0 %v894
    %2579 = vmatmul.mubr.f32.gmra.mrb[0].mxu0 %v893
    %v2580 = vpop.f32.mrb[0].mxu0
    %v2581 = vadd.f32 %v2420, %v2580
    %v2582 = vpop.f32.mrb[0].mxu0
    %v2583 = vadd.f32 %v2422, %v2582
    %2584 = vmatprep.mubr.f32.mxu0 %v902
    %2585 = vmatmul.mubr.f32.gmra.mrb[0].mxu0 %v901
    %v2586 = vpop.f32.mrb[0].mxu0
    %v2587 = vadd.f32 %v2426, %v2586
    %v2588 = vpop.f32.mrb[0].mxu0
    %v2589 = vadd.f32 %v2428, %v2588
    %2590 = vmatprep.mubr.f32.mxu0 %v910
    %2591 = vmatmul.mubr.f32.gmra.mrb[0].mxu0 %v909
    %v2592 = vpop.f32.mrb[0].mxu0
    %v2593 = vadd.f32 %v2432, %v2592
    %v2594 = vpop.f32.mrb[0].mxu0
    %v2595 = vadd.f32 %v2434, %v2594
    %2596 = vmatprep.mubr.f32.mxu0 %v918
    %2597 = vmatmul.mubr.f32.gmra.mrb[0].mxu0 %v917
    %v2598 = vpop.f32.mrb[0].mxu0
    %v2599 = vadd.f32 %v2438, %v2598
    %v2600 = vpop.f32.mrb[0].mxu0
    %v2601 = vadd.f32 %v2440, %v2600
    %2602 = vmatprep.mubr.f32.mxu0 %v926
    %2603 = vmatmul.mubr.f32.gmra.mrb[0].mxu0 %v925
    %v2604 = vpop.f32.mrb[0].mxu0
    %v2605 = vadd.f32 %v2444, %v2604
    %v2606 = vpop.f32.mrb[0].mxu0
    %v2607 = vadd.f32 %v2446, %v2606
    %2608 = vmatprep.mubr.f32.mxu0 %v934
    %2609 = vmatmul.mubr.f32.gmra.mrb[0].mxu0 %v933
    %v2610 = vpop.f32.mrb[0].mxu0
    %v2611 = vadd.f32 %v2450, %v2610
    %v2612 = vpop.f32.mrb[0].mxu0
    %v2613 = vadd.f32 %v2452, %v2612
    %2614 = vmatprep.mubr.f32.mxu0 %v942
    %2615 = vmatmul.mubr.f32.gmra.mrb[0].mxu0 %v941
    %v2616 = vpop.f32.mrb[0].mxu0
    %v2617 = vadd.f32 %v2456, %v2616
    %v2618 = vpop.f32.mrb[0].mxu0
    %v2619 = vadd.f32 %v2458, %v2618
    %2620 = vmatprep.mubr.f32.mxu0 %v950
    %2621 = vmatmul.mubr.f32.gmra.mrb[0].mxu0 %v949
    %v2622 = vpop.f32.mrb[0].mxu0
    %v2623 = vadd.f32 %v2462, %v2622
    %v2624 = vpop.f32.mrb[0].mxu0
    %v2625 = vadd.f32 %v2464, %v2624
    %2626 = vmatprep.mubr.f32.mxu0 %v958
    %2627 = vmatmul.mubr.f32.gmra.mrb[0].mxu0 %v957
    %v2628 = vpop.f32.mrb[0].mxu0
    %v2629 = vadd.f32 %v2468, %v2628
    %v2630 = vpop.f32.mrb[0].mxu0
    %v2631 = vadd.f32 %v2470, %v2630
    %2632 = vmatprep.mubr.f32.mxu0 %v966
    %2633 = vmatmul.mubr.f32.gmra.mrb[0].mxu0 %v965
    %v2634 = vpop.f32.mrb[0].mxu0
    %v2635 = vadd.f32 %v2474, %v2634
    %v2636 = vpop.f32.mrb[0].mxu0
    %v2637 = vadd.f32 %v2476, %v2636
    %2638 = vmatprep.mubr.f32.mxu0 %v974
    %2639 = vmatmul.mubr.f32.gmra.mrb[0].mxu0 %v973
    %v2640 = vpop.f32.mrb[0].mxu0
    %v2641 = vadd.f32 %v2480, %v2640
    %v2642 = vpop.f32.mrb[0].mxu0
    %v2643 = vadd.f32 %v2482, %v2642
    %2644 = vmatprep.mubr.f32.mxu0 %v982
    %2645 = vmatmul.mubr.f32.gmra.mrb[0].mxu0 %v981
    %v2646 = vpop.f32.mrb[0].mxu0
    %v2647 = vadd.f32 %v2486, %v2646
    %v2648 = vpop.f32.mrb[0].mxu0
    %v2649 = vadd.f32 %v2488, %v2648
    %2650 = vmatprep.mubr.f32.mxu0 %v990
    %2651 = vmatmul.mubr.f32.gmra.mrb[0].mxu0 %v989
    %v2652 = vpop.f32.mrb[0].mxu0
    %v2653 = vadd.f32 %v2492, %v2652
    %v2654 = vpop.f32.mrb[0].mxu0
    %v2655 = vadd.f32 %v2494, %v2654
    %2656 = vmatprep.mubr.f32.mxu0 %v998
    %2657 = vmatmul.mubr.f32.gmra.mrb[0].mxu0 %v997
    %v2658 = vpop.f32.mrb[0].mxu0
    %v2659 = vadd.f32 %v2498, %v2658
    %v2660 = vpop.f32.mrb[0].mxu0
    %v2661 = vadd.f32 %v2500, %v2660
    %2662 = vdwg.mxu0
    %2663 = vmatprep.subr.mxu0 %v1388
    %2664 = vmatpush1.msra.mxu0 %v1387
    %2665 = vmatprep.subr.mxu0 %v1392
    %2666 = vmatpush1.msra.mxu0 %v1391
    %2667 = vmatprep.subr.mxu0 %v1396
    %2668 = vmatpush1.msra.mxu0 %v1395
    %2669 = vmatprep.subr.mxu0 %v1400
    %2670 = vmatpush1.msra.mxu0 %v1399
    %2671 = vmatprep.subr.mxu0 %v1404
    %2672 = vmatpush1.msra.mxu0 %v1403
    %2673 = vmatprep.subr.mxu0 %v1408
    %2674 = vmatpush1.msra.mxu0 %v1407
    %2675 = vmatprep.subr.mxu0 %v1412
    %2676 = vmatpush1.msra.mxu0 %v1411
    %2677 = vmatprep.subr.mxu0 %v1416
    %2678 = vmatpush1.msra.mxu0 %v1415
    %2679 = vmatprep.subr.mxu0 %v1420
    %2680 = vmatpush1.msra.mxu0 %v1419
    %2681 = vmatprep.subr.mxu0 %v1424
    %2682 = vmatpush1.msra.mxu0 %v1423
    %2683 = vmatprep.subr.mxu0 %v1428
    %2684 = vmatpush1.msra.mxu0 %v1427
    %2685 = vmatprep.subr.mxu0 %v1432
    %2686 = vmatpush1.msra.mxu0 %v1431
    %2687 = vmatprep.subr.mxu0 %v1436
    %2688 = vmatpush1.msra.mxu0 %v1435
    %2689 = vmatprep.subr.mxu0 %v1440
    %2690 = vmatpush1.msra.mxu0 %v1439
    %2691 = vmatprep.subr.mxu0 %v1444
    %2692 = vmatpush1.msra.mxu0 %v1443
    %2693 = vmatprep.subr.mxu0 %v1448
    %2694 = vmatpush1.msra.mxu0 %v1447
    %2695 = vmatprep.subr.mxu0 %v1452
    %2696 = vmatpush1.msra.mxu0 %v1451
    %2697 = vmatprep.subr.mxu0 %v1456
    %2698 = vmatpush1.msra.mxu0 %v1455
    %2699 = vmatprep.subr.mxu0 %v1460
    %2700 = vmatpush1.msra.mxu0 %v1459
    %2701 = vmatprep.subr.mxu0 %v1464
    %2702 = vmatpush1.msra.mxu0 %v1463
    %2703 = vmatprep.subr.mxu0 %v1468
    %2704 = vmatpush1.msra.mxu0 %v1467
    %2705 = vmatprep.subr.mxu0 %v1472
    %2706 = vmatpush1.msra.mxu0 %v1471
    %2707 = vmatprep.subr.mxu0 %v1476
    %2708 = vmatpush1.msra.mxu0 %v1475
    %2709 = vmatprep.subr.mxu0 %v1480
    %2710 = vmatpush1.msra.mxu0 %v1479
    %2711 = vmatprep.subr.mxu0 %v1484
    %2712 = vmatpush1.msra.mxu0 %v1483
    %2713 = vmatprep.subr.mxu0 %v1488
    %2714 = vmatpush1.msra.mxu0 %v1487
    %2715 = vmatprep.subr.mxu0 %v1492
    %2716 = vmatpush1.msra.mxu0 %v1491
    %2717 = vmatprep.subr.mxu0 %v1496
    %2718 = vmatpush1.msra.mxu0 %v1495
    %2719 = vmatprep.subr.mxu0 %v1500
    %2720 = vmatpush1.msra.mxu0 %v1499
    %2721 = vmatprep.subr.mxu0 %v1504
    %2722 = vmatpush1.msra.mxu0 %v1503
    %2723 = vmatprep.subr.mxu0 %v1508
    %2724 = vmatpush1.msra.mxu0 %v1507
    %2725 = vmatprep.subr.mxu0 %v1512
    %2726 = vmatpush1.msra.mxu0 %v1511
    %2727 = vmatprep.mubr.f32.mxu0 %v880
    %2728 = vmatmul.mubr.f32.gmra.mrb[0].mxu0 %v879
    %v2729 = vpop.f32.mrb[0].mxu0
    %v2730 = vadd.f32 %v2569, %v2729
    %v2731 = vpop.f32.mrb[0].mxu0
    %v2732 = vadd.f32 %v2571, %v2731
    %2733 = vmatprep.mubr.f32.mxu0 %v888
    %2734 = vmatmul.mubr.f32.gmra.mrb[0].mxu0 %v887
    %v2735 = vpop.f32.mrb[0].mxu0
    %v2736 = vadd.f32 %v2575, %v2735
    %v2737 = vpop.f32.mrb[0].mxu0
    %v2738 = vadd.f32 %v2577, %v2737
    %2739 = vmatprep.mubr.f32.mxu0 %v896
    %2740 = vmatmul.mubr.f32.gmra.mrb[0].mxu0 %v895
    %v2741 = vpop.f32.mrb[0].mxu0
    %v2742 = vadd.f32 %v2581, %v2741
    %v2743 = vpop.f32.mrb[0].mxu0
    %v2744 = vadd.f32 %v2583, %v2743
    %2745 = vmatprep.mubr.f32.mxu0 %v904
    %2746 = vmatmul.mubr.f32.gmra.mrb[0].mxu0 %v903
    %v2747 = vpop.f32.mrb[0].mxu0
    %v2748 = vadd.f32 %v2587, %v2747
    %v2749 = vpop.f32.mrb[0].mxu0
    %v2750 = vadd.f32 %v2589, %v2749
    %2751 = vmatprep.mubr.f32.mxu0 %v912
    %2752 = vmatmul.mubr.f32.gmra.mrb[0].mxu0 %v911
    %v2753 = vpop.f32.mrb[0].mxu0
    %v2754 = vadd.f32 %v2593, %v2753
    %v2755 = vpop.f32.mrb[0].mxu0
    %v2756 = vadd.f32 %v2595, %v2755
    %2757 = vmatprep.mubr.f32.mxu0 %v920
    %2758 = vmatmul.mubr.f32.gmra.mrb[0].mxu0 %v919
    %v2759 = vpop.f32.mrb[0].mxu0
    %v2760 = vadd.f32 %v2599, %v2759
    %v2761 = vpop.f32.mrb[0].mxu0
    %v2762 = vadd.f32 %v2601, %v2761
    %2763 = vmatprep.mubr.f32.mxu0 %v928
    %2764 = vmatmul.mubr.f32.gmra.mrb[0].mxu0 %v927
    %v2765 = vpop.f32.mrb[0].mxu0
    %v2766 = vadd.f32 %v2605, %v2765
    %v2767 = vpop.f32.mrb[0].mxu0
    %v2768 = vadd.f32 %v2607, %v2767
    %2769 = vmatprep.mubr.f32.mxu0 %v936
    %2770 = vmatmul.mubr.f32.gmra.mrb[0].mxu0 %v935
    %v2771 = vpop.f32.mrb[0].mxu0
    %v2772 = vadd.f32 %v2611, %v2771
    %v2773 = vpop.f32.mrb[0].mxu0
    %v2774 = vadd.f32 %v2613, %v2773
    %2775 = vmatprep.mubr.f32.mxu0 %v944
    %2776 = vmatmul.mubr.f32.gmra.mrb[0].mxu0 %v943
    %v2777 = vpop.f32.mrb[0].mxu0
    %v2778 = vadd.f32 %v2617, %v2777
    %v2779 = vpop.f32.mrb[0].mxu0
    %v2780 = vadd.f32 %v2619, %v2779
    %2781 = vmatprep.mubr.f32.mxu0 %v952
    %2782 = vmatmul.mubr.f32.gmra.mrb[0].mxu0 %v951
    %v2783 = vpop.f32.mrb[0].mxu0
    %v2784 = vadd.f32 %v2623, %v2783
    %v2785 = vpop.f32.mrb[0].mxu0
    %v2786 = vadd.f32 %v2625, %v2785
    %2787 = vmatprep.mubr.f32.mxu0 %v960
    %2788 = vmatmul.mubr.f32.gmra.mrb[0].mxu0 %v959
    %v2789 = vpop.f32.mrb[0].mxu0
    %v2790 = vadd.f32 %v2629, %v2789
    %v2791 = vpop.f32.mrb[0].mxu0
    %v2792 = vadd.f32 %v2631, %v2791
    %2793 = vmatprep.mubr.f32.mxu0 %v968
    %2794 = vmatmul.mubr.f32.gmra.mrb[0].mxu0 %v967
    %v2795 = vpop.f32.mrb[0].mxu0
    %v2796 = vadd.f32 %v2635, %v2795
    %v2797 = vpop.f32.mrb[0].mxu0
    %v2798 = vadd.f32 %v2637, %v2797
    %2799 = vmatprep.mubr.f32.mxu0 %v976
    %2800 = vmatmul.mubr.f32.gmra.mrb[0].mxu0 %v975
    %v2801 = vpop.f32.mrb[0].mxu0
    %v2802 = vadd.f32 %v2641, %v2801
    %v2803 = vpop.f32.mrb[0].mxu0
    %v2804 = vadd.f32 %v2643, %v2803
    %2805 = vmatprep.mubr.f32.mxu0 %v984
    %2806 = vmatmul.mubr.f32.gmra.mrb[0].mxu0 %v983
    %v2807 = vpop.f32.mrb[0].mxu0
    %v2808 = vadd.f32 %v2647, %v2807
    %v2809 = vpop.f32.mrb[0].mxu0
    %v2810 = vadd.f32 %v2649, %v2809
    %2811 = vmatprep.mubr.f32.mxu0 %v992
    %2812 = vmatmul.mubr.f32.gmra.mrb[0].mxu0 %v991
    %v2813 = vpop.f32.mrb[0].mxu0
    %v2814 = vadd.f32 %v2653, %v2813
    %v2815 = vpop.f32.mrb[0].mxu0
    %v2816 = vadd.f32 %v2655, %v2815
    %2817 = vmatprep.mubr.f32.mxu0 %v1000
    %2818 = vmatmul.mubr.f32.gmra.mrb[0].mxu0 %v999
    %v2819 = vpop.f32.mrb[0].mxu0
    %v2820 = vadd.f32 %v2659, %v2819
    %v2821 = vpop.f32.mrb[0].mxu0
    %v2822 = vadd.f32 %v2661, %v2821
    %2823 = vdwg.mxu0
    %v2824 = vmax.f32 %v2086, 0.0
    %v2825 = vmax.f32 %v2088, 0.0
    %v2826 = vmax.f32 %v2730, 0.0
    %v2827 = vmax.f32 %v2732, 0.0
    %v2828 = vmax.f32 %v2092, 0.0
    %v2829 = vmax.f32 %v2094, 0.0
    %v2830 = vmax.f32 %v2736, 0.0
    %v2831 = vmax.f32 %v2738, 0.0
    %v2832 = vmax.f32 %v2098, 0.0
    %v2833 = vmax.f32 %v2100, 0.0
    %v2834 = vmax.f32 %v2742, 0.0
    %v2835 = vmax.f32 %v2744, 0.0
    %v2836 = vmax.f32 %v2104, 0.0
    %v2837 = vmax.f32 %v2106, 0.0
    %v2838 = vmax.f32 %v2748, 0.0
    %v2839 = vmax.f32 %v2750, 0.0
    %v2840 = vmax.f32 %v2110, 0.0
    %v2841 = vmax.f32 %v2112, 0.0
    %v2842 = vmax.f32 %v2754, 0.0
    %v2843 = vmax.f32 %v2756, 0.0
    %v2844 = vmax.f32 %v2116, 0.0
    %v2845 = vmax.f32 %v2118, 0.0
    %v2846 = vmax.f32 %v2760, 0.0
    %v2847 = vmax.f32 %v2762, 0.0
    %v2848 = vmax.f32 %v2122, 0.0
    %v2849 = vmax.f32 %v2124, 0.0
    %v2850 = vmax.f32 %v2766, 0.0
    %v2851 = vmax.f32 %v2768, 0.0
    %v2852 = vmax.f32 %v2128, 0.0
    %v2853 = vmax.f32 %v2130, 0.0
    %v2854 = vmax.f32 %v2772, 0.0
    %v2855 = vmax.f32 %v2774, 0.0
    %v2856 = vmax.f32 %v2134, 0.0
    %v2857 = vmax.f32 %v2136, 0.0
    %v2858 = vmax.f32 %v2778, 0.0
    %v2859 = vmax.f32 %v2780, 0.0
    %v2860 = vmax.f32 %v2140, 0.0
    %v2861 = vmax.f32 %v2142, 0.0
    %v2862 = vmax.f32 %v2784, 0.0
    %v2863 = vmax.f32 %v2786, 0.0
    %v2864 = vmax.f32 %v2146, 0.0
    %v2865 = vmax.f32 %v2148, 0.0
    %v2866 = vmax.f32 %v2790, 0.0
    %v2867 = vmax.f32 %v2792, 0.0
    %v2868 = vmax.f32 %v2152, 0.0
    %v2869 = vmax.f32 %v2154, 0.0
    %v2870 = vmax.f32 %v2796, 0.0
    %v2871 = vmax.f32 %v2798, 0.0
    %v2872 = vmax.f32 %v2158, 0.0
    %v2873 = vmax.f32 %v2160, 0.0
    %v2874 = vmax.f32 %v2802, 0.0
    %v2875 = vmax.f32 %v2804, 0.0
    %v2876 = vmax.f32 %v2164, 0.0
    %v2877 = vmax.f32 %v2166, 0.0
    %v2878 = vmax.f32 %v2808, 0.0
    %v2879 = vmax.f32 %v2810, 0.0
    %v2880 = vmax.f32 %v2170, 0.0
    %v2881 = vmax.f32 %v2172, 0.0
    %v2882 = vmax.f32 %v2814, 0.0
    %v2883 = vmax.f32 %v2816, 0.0
    %v2884 = vmax.f32 %v2176, 0.0
    %v2885 = vmax.f32 %v2178, 0.0
    %v2886 = vmax.f32 %v2820, 0.0
    %v2887 = vmax.f32 %v2822, 0.0
    %v2888 = vld [vmem:[#allocation7] sm:$0xff]
    %v2889 = vld [vmem:[#allocation7 + $0x8] sm:$0xff]
    %v2890 = vld [vmem:[#allocation7 + $0x10] sm:$0xff]
    %v2891 = vld [vmem:[#allocation7 + $0x18] sm:$0xff]
    %v2892 = vld [vmem:[#allocation7 + $0x20] sm:$0xff]
    %v2893 = vld [vmem:[#allocation7 + $0x28] sm:$0xff]
    %v2894 = vld [vmem:[#allocation7 + $0x30] sm:$0xff]
    %v2895 = vld [vmem:[#allocation7 + $0x38] sm:$0xff]
    %v2896 = vld [vmem:[#allocation7 + $0x40] sm:$0xff]
    %v2897 = vld [vmem:[#allocation7 + $0x48] sm:$0xff]
    %v2898 = vld [vmem:[#allocation7 + $0x50] sm:$0xff]
    %v2899 = vld [vmem:[#allocation7 + $0x58] sm:$0xff]
    %v2900 = vld [vmem:[#allocation7 + $0x60] sm:$0xff]
    %v2901 = vld [vmem:[#allocation7 + $0x68] sm:$0xff]
    %v2902 = vld [vmem:[#allocation7 + $0x70] sm:$0xff]
    %v2903 = vld [vmem:[#allocation7 + $0x78] sm:$0xff]
    %v2904 = vld [vmem:[#allocation7 + $0x80] sm:$0xff]
    %v2905 = vld [vmem:[#allocation7 + $0x88] sm:$0xff]
    %v2906 = vld [vmem:[#allocation7 + $0x90] sm:$0xff]
    %v2907 = vld [vmem:[#allocation7 + $0x98] sm:$0xff]
    %v2908 = vld [vmem:[#allocation7 + $0xa0] sm:$0xff]
    %v2909 = vld [vmem:[#allocation7 + $0xa8] sm:$0xff]
    %v2910 = vld [vmem:[#allocation7 + $0xb0] sm:$0xff]
    %v2911 = vld [vmem:[#allocation7 + $0xb8] sm:$0xff]
    %v2912 = vld [vmem:[#allocation7 + $0xc0] sm:$0xff]
    %v2913 = vld [vmem:[#allocation7 + $0xc8] sm:$0xff]
    %v2914 = vld [vmem:[#allocation7 + $0xd0] sm:$0xff]
    %v2915 = vld [vmem:[#allocation7 + $0xd8] sm:$0xff]
    %v2916 = vld [vmem:[#allocation7 + $0xe0] sm:$0xff]
    %v2917 = vld [vmem:[#allocation7 + $0xe8] sm:$0xff]
    %v2918 = vld [vmem:[#allocation7 + $0xf0] sm:$0xff]
    %v2919 = vld [vmem:[#allocation7 + $0xf8] sm:$0xff]
    %v2920 = vld [vmem:[#allocation7 + $0x100] sm:$0xff]
    %v2921 = vld [vmem:[#allocation7 + $0x108] sm:$0xff]
    %v2922 = vld [vmem:[#allocation7 + $0x110] sm:$0xff]
    %v2923 = vld [vmem:[#allocation7 + $0x118] sm:$0xff]
    %v2924 = vld [vmem:[#allocation7 + $0x120] sm:$0xff]
    %v2925 = vld [vmem:[#allocation7 + $0x128] sm:$0xff]
    %v2926 = vld [vmem:[#allocation7 + $0x130] sm:$0xff]
    %v2927 = vld [vmem:[#allocation7 + $0x138] sm:$0xff]
    %v2928 = vld [vmem:[#allocation7 + $0x140] sm:$0xff]
    %v2929 = vld [vmem:[#allocation7 + $0x148] sm:$0xff]
    %v2930 = vld [vmem:[#allocation7 + $0x150] sm:$0xff]
    %v2931 = vld [vmem:[#allocation7 + $0x158] sm:$0xff]
    %v2932 = vld [vmem:[#allocation7 + $0x160] sm:$0xff]
    %v2933 = vld [vmem:[#allocation7 + $0x168] sm:$0xff]
    %v2934 = vld [vmem:[#allocation7 + $0x170] sm:$0xff]
    %v2935 = vld [vmem:[#allocation7 + $0x178] sm:$0xff]
    %v2936 = vld [vmem:[#allocation7 + $0x180] sm:$0xff]
    %v2937 = vld [vmem:[#allocation7 + $0x188] sm:$0xff]
    %v2938 = vld [vmem:[#allocation7 + $0x190] sm:$0xff]
    %v2939 = vld [vmem:[#allocation7 + $0x198] sm:$0xff]
    %v2940 = vld [vmem:[#allocation7 + $0x1a0] sm:$0xff]
    %v2941 = vld [vmem:[#allocation7 + $0x1a8] sm:$0xff]
    %v2942 = vld [vmem:[#allocation7 + $0x1b0] sm:$0xff]
    %v2943 = vld [vmem:[#allocation7 + $0x1b8] sm:$0xff]
    %v2944 = vld [vmem:[#allocation7 + $0x1c0] sm:$0xff]
    %v2945 = vld [vmem:[#allocation7 + $0x1c8] sm:$0xff]
    %v2946 = vld [vmem:[#allocation7 + $0x1d0] sm:$0xff]
    %v2947 = vld [vmem:[#allocation7 + $0x1d8] sm:$0xff]
    %v2948 = vld [vmem:[#allocation7 + $0x1e0] sm:$0xff]
    %v2949 = vld [vmem:[#allocation7 + $0x1e8] sm:$0xff]
    %v2950 = vld [vmem:[#allocation7 + $0x1f0] sm:$0xff]
    %v2951 = vld [vmem:[#allocation7 + $0x1f8] sm:$0xff]
    %v2952 = vld [vmem:[#allocation10 + $0x2] ss:$0 sm:$0xff]
    %2953 = vmatprep.subr.mxu0 0.0
    %2954 = vmatpush1.msra.mxu0 %v2888
    %2955 = vmatprep.subr.mxu0 0.0
    %2956 = vmatpush1.msra.mxu0 %v2889
    %2957 = vmatprep.subr.mxu0 0.0
    %2958 = vmatpush1.msra.mxu0 %v2890
    %2959 = vmatprep.subr.mxu0 0.0
    %2960 = vmatpush1.msra.mxu0 %v2891
    %2961 = vmatprep.subr.mxu0 0.0
    %2962 = vmatpush1.msra.mxu0 %v2892
    %2963 = vmatprep.subr.mxu0 0.0
    %2964 = vmatpush1.msra.mxu0 %v2893
    %2965 = vmatprep.subr.mxu0 0.0
    %2966 = vmatpush1.msra.mxu0 %v2894
    %2967 = vmatprep.subr.mxu0 0.0
    %2968 = vmatpush1.msra.mxu0 %v2895
    %2969 = vmatprep.subr.mxu0 0.0
    %2970 = vmatpush1.msra.mxu0 %v2896
    %2971 = vmatprep.subr.mxu0 0.0
    %2972 = vmatpush1.msra.mxu0 %v2897
    %2973 = vmatprep.subr.mxu0 0.0
    %2974 = vmatpush1.msra.mxu0 %v2898
    %2975 = vmatprep.subr.mxu0 0.0
    %2976 = vmatpush1.msra.mxu0 %v2899
    %2977 = vmatprep.subr.mxu0 0.0
    %2978 = vmatpush1.msra.mxu0 %v2900
    %2979 = vmatprep.subr.mxu0 0.0
    %2980 = vmatpush1.msra.mxu0 %v2901
    %2981 = vmatprep.subr.mxu0 0.0
    %2982 = vmatpush1.msra.mxu0 %v2902
    %2983 = vmatprep.subr.mxu0 0.0
    %2984 = vmatpush1.msra.mxu0 %v2903
    %2985 = vmatprep.subr.mxu0 0.0
    %2986 = vmatpush1.msra.mxu0 %v2904
    %2987 = vmatprep.subr.mxu0 0.0
    %2988 = vmatpush1.msra.mxu0 %v2905
    %2989 = vmatprep.subr.mxu0 0.0
    %2990 = vmatpush1.msra.mxu0 %v2906
    %2991 = vmatprep.subr.mxu0 0.0
    %2992 = vmatpush1.msra.mxu0 %v2907
    %2993 = vmatprep.subr.mxu0 0.0
    %2994 = vmatpush1.msra.mxu0 %v2908
    %2995 = vmatprep.subr.mxu0 0.0
    %2996 = vmatpush1.msra.mxu0 %v2909
    %2997 = vmatprep.subr.mxu0 0.0
    %2998 = vmatpush1.msra.mxu0 %v2910
    %2999 = vmatprep.subr.mxu0 0.0
    %3000 = vmatpush1.msra.mxu0 %v2911
    %3001 = vmatprep.subr.mxu0 0.0
    %3002 = vmatpush1.msra.mxu0 %v2912
    %3003 = vmatprep.subr.mxu0 0.0
    %3004 = vmatpush1.msra.mxu0 %v2913
    %3005 = vmatprep.subr.mxu0 0.0
    %3006 = vmatpush1.msra.mxu0 %v2914
    %3007 = vmatprep.subr.mxu0 0.0
    %3008 = vmatpush1.msra.mxu0 %v2915
    %3009 = vmatprep.subr.mxu0 0.0
    %3010 = vmatpush1.msra.mxu0 %v2916
    %3011 = vmatprep.subr.mxu0 0.0
    %3012 = vmatpush1.msra.mxu0 %v2917
    %3013 = vmatprep.subr.mxu0 0.0
    %3014 = vmatpush1.msra.mxu0 %v2918
    %3015 = vmatprep.subr.mxu0 0.0
    %3016 = vmatpush1.msra.mxu0 %v2919
    %3017 = vmatprep.mubr.f32.mxu0 %v2825
    %3018 = vmatmul.mubr.f32.gmra.mrb[0].mxu0 %v2824
    %v3019 = vpop.f32.mrb[0].mxu0
    %v3020 = vadd.f32 %v2952, %v3019
    %v3021 = vpop.f32.mrb[0].mxu0
    %3022 = vmatprep.mubr.f32.mxu0 %v2829
    %3023 = vmatmul.mubr.f32.gmra.mrb[0].mxu0 %v2828
    %v3024 = vpop.f32.mrb[0].mxu0
    %v3025 = vadd.f32 %v2952, %v3024
    %v3026 = vpop.f32.mrb[0].mxu0
    %3027 = vmatprep.mubr.f32.mxu0 %v2833
    %3028 = vmatmul.mubr.f32.gmra.mrb[0].mxu0 %v2832
    %v3029 = vpop.f32.mrb[0].mxu0
    %v3030 = vadd.f32 %v2952, %v3029
    %v3031 = vpop.f32.mrb[0].mxu0
    %3032 = vmatprep.mubr.f32.mxu0 %v2837
    %3033 = vmatmul.mubr.f32.gmra.mrb[0].mxu0 %v2836
    %v3034 = vpop.f32.mrb[0].mxu0
    %v3035 = vadd.f32 %v2952, %v3034
    %v3036 = vpop.f32.mrb[0].mxu0
    %3037 = vmatprep.mubr.f32.mxu0 %v2841
    %3038 = vmatmul.mubr.f32.gmra.mrb[0].mxu0 %v2840
    %v3039 = vpop.f32.mrb[0].mxu0
    %v3040 = vadd.f32 %v2952, %v3039
    %v3041 = vpop.f32.mrb[0].mxu0
    %3042 = vmatprep.mubr.f32.mxu0 %v2845
    %3043 = vmatmul.mubr.f32.gmra.mrb[0].mxu0 %v2844
    %v3044 = vpop.f32.mrb[0].mxu0
    %v3045 = vadd.f32 %v2952, %v3044
    %v3046 = vpop.f32.mrb[0].mxu0
    %3047 = vmatprep.mubr.f32.mxu0 %v2849
    %3048 = vmatmul.mubr.f32.gmra.mrb[0].mxu0 %v2848
    %v3049 = vpop.f32.mrb[0].mxu0
    %v3050 = vadd.f32 %v2952, %v3049
    %v3051 = vpop.f32.mrb[0].mxu0
    %3052 = vmatprep.mubr.f32.mxu0 %v2853
    %3053 = vmatmul.mubr.f32.gmra.mrb[0].mxu0 %v2852
    %v3054 = vpop.f32.mrb[0].mxu0
    %v3055 = vadd.f32 %v2952, %v3054
    %v3056 = vpop.f32.mrb[0].mxu0
    %3057 = vmatprep.mubr.f32.mxu0 %v2857
    %3058 = vmatmul.mubr.f32.gmra.mrb[0].mxu0 %v2856
    %v3059 = vpop.f32.mrb[0].mxu0
    %v3060 = vadd.f32 %v2952, %v3059
    %v3061 = vpop.f32.mrb[0].mxu0
    %3062 = vmatprep.mubr.f32.mxu0 %v2861
    %3063 = vmatmul.mubr.f32.gmra.mrb[0].mxu0 %v2860
    %v3064 = vpop.f32.mrb[0].mxu0
    %v3065 = vadd.f32 %v2952, %v3064
    %v3066 = vpop.f32.mrb[0].mxu0
    %3067 = vmatprep.mubr.f32.mxu0 %v2865
    %3068 = vmatmul.mubr.f32.gmra.mrb[0].mxu0 %v2864
    %v3069 = vpop.f32.mrb[0].mxu0
    %v3070 = vadd.f32 %v2952, %v3069
    %v3071 = vpop.f32.mrb[0].mxu0
    %3072 = vmatprep.mubr.f32.mxu0 %v2869
    %3073 = vmatmul.mubr.f32.gmra.mrb[0].mxu0 %v2868
    %v3074 = vpop.f32.mrb[0].mxu0
    %v3075 = vadd.f32 %v2952, %v3074
    %v3076 = vpop.f32.mrb[0].mxu0
    %3077 = vmatprep.mubr.f32.mxu0 %v2873
    %3078 = vmatmul.mubr.f32.gmra.mrb[0].mxu0 %v2872
    %v3079 = vpop.f32.mrb[0].mxu0
    %v3080 = vadd.f32 %v2952, %v3079
    %v3081 = vpop.f32.mrb[0].mxu0
    %3082 = vmatprep.mubr.f32.mxu0 %v2877
    %3083 = vmatmul.mubr.f32.gmra.mrb[0].mxu0 %v2876
    %v3084 = vpop.f32.mrb[0].mxu0
    %v3085 = vadd.f32 %v2952, %v3084
    %v3086 = vpop.f32.mrb[0].mxu0
    %3087 = vmatprep.mubr.f32.mxu0 %v2881
    %3088 = vmatmul.mubr.f32.gmra.mrb[0].mxu0 %v2880
    %v3089 = vpop.f32.mrb[0].mxu0
    %v3090 = vadd.f32 %v2952, %v3089
    %v3091 = vpop.f32.mrb[0].mxu0
    %3092 = vmatprep.mubr.f32.mxu0 %v2885
    %3093 = vmatmul.mubr.f32.gmra.mrb[0].mxu0 %v2884
    %v3094 = vpop.f32.mrb[0].mxu0
    %v3095 = vadd.f32 %v2952, %v3094
    %v3096 = vpop.f32.mrb[0].mxu0
    %3097 = vdwg.mxu0
    %3098 = vmatprep.subr.mxu0 0.0
    %3099 = vmatpush1.msra.mxu0 %v2920
    %3100 = vmatprep.subr.mxu0 0.0
    %3101 = vmatpush1.msra.mxu0 %v2921
    %3102 = vmatprep.subr.mxu0 0.0
    %3103 = vmatpush1.msra.mxu0 %v2922
    %3104 = vmatprep.subr.mxu0 0.0
    %3105 = vmatpush1.msra.mxu0 %v2923
    %3106 = vmatprep.subr.mxu0 0.0
    %3107 = vmatpush1.msra.mxu0 %v2924
    %3108 = vmatprep.subr.mxu0 0.0
    %3109 = vmatpush1.msra.mxu0 %v2925
    %3110 = vmatprep.subr.mxu0 0.0
    %3111 = vmatpush1.msra.mxu0 %v2926
    %3112 = vmatprep.subr.mxu0 0.0
    %3113 = vmatpush1.msra.mxu0 %v2927
    %3114 = vmatprep.subr.mxu0 0.0
    %3115 = vmatpush1.msra.mxu0 %v2928
    %3116 = vmatprep.subr.mxu0 0.0
    %3117 = vmatpush1.msra.mxu0 %v2929
    %3118 = vmatprep.subr.mxu0 0.0
    %3119 = vmatpush1.msra.mxu0 %v2930
    %3120 = vmatprep.subr.mxu0 0.0
    %3121 = vmatpush1.msra.mxu0 %v2931
    %3122 = vmatprep.subr.mxu0 0.0
    %3123 = vmatpush1.msra.mxu0 %v2932
    %3124 = vmatprep.subr.mxu0 0.0
    %3125 = vmatpush1.msra.mxu0 %v2933
    %3126 = vmatprep.subr.mxu0 0.0
    %3127 = vmatpush1.msra.mxu0 %v2934
    %3128 = vmatprep.subr.mxu0 0.0
    %3129 = vmatpush1.msra.mxu0 %v2935
    %3130 = vmatprep.subr.mxu0 0.0
    %3131 = vmatpush1.msra.mxu0 %v2936
    %3132 = vmatprep.subr.mxu0 0.0
    %3133 = vmatpush1.msra.mxu0 %v2937
    %3134 = vmatprep.subr.mxu0 0.0
    %3135 = vmatpush1.msra.mxu0 %v2938
    %3136 = vmatprep.subr.mxu0 0.0
    %3137 = vmatpush1.msra.mxu0 %v2939
    %3138 = vmatprep.subr.mxu0 0.0
    %3139 = vmatpush1.msra.mxu0 %v2940
    %3140 = vmatprep.subr.mxu0 0.0
    %3141 = vmatpush1.msra.mxu0 %v2941
    %3142 = vmatprep.subr.mxu0 0.0
    %3143 = vmatpush1.msra.mxu0 %v2942
    %3144 = vmatprep.subr.mxu0 0.0
    %3145 = vmatpush1.msra.mxu0 %v2943
    %3146 = vmatprep.subr.mxu0 0.0
    %3147 = vmatpush1.msra.mxu0 %v2944
    %3148 = vmatprep.subr.mxu0 0.0
    %3149 = vmatpush1.msra.mxu0 %v2945
    %3150 = vmatprep.subr.mxu0 0.0
    %3151 = vmatpush1.msra.mxu0 %v2946
    %3152 = vmatprep.subr.mxu0 0.0
    %3153 = vmatpush1.msra.mxu0 %v2947
    %3154 = vmatprep.subr.mxu0 0.0
    %3155 = vmatpush1.msra.mxu0 %v2948
    %3156 = vmatprep.subr.mxu0 0.0
    %3157 = vmatpush1.msra.mxu0 %v2949
    %3158 = vmatprep.subr.mxu0 0.0
    %3159 = vmatpush1.msra.mxu0 %v2950
    %3160 = vmatprep.subr.mxu0 0.0
    %3161 = vmatpush1.msra.mxu0 %v2951
    %3162 = vmatprep.mubr.f32.mxu0 %v2827
    %3163 = vmatmul.mubr.f32.gmra.mrb[0].mxu0 %v2826
    %v3164 = vpop.f32.mrb[0].mxu0
    %v3165 = vadd.f32 %v3020, %v3164
    %v3166 = vpop.f32.mrb[0].mxu0
    %3167 = vmatprep.mubr.f32.mxu0 %v2831
    %3168 = vmatmul.mubr.f32.gmra.mrb[0].mxu0 %v2830
    %v3169 = vpop.f32.mrb[0].mxu0
    %v3170 = vadd.f32 %v3025, %v3169
    %v3171 = vpop.f32.mrb[0].mxu0
    %3172 = vmatprep.mubr.f32.mxu0 %v2835
    %3173 = vmatmul.mubr.f32.gmra.mrb[0].mxu0 %v2834
    %v3174 = vpop.f32.mrb[0].mxu0
    %v3175 = vadd.f32 %v3030, %v3174
    %v3176 = vpop.f32.mrb[0].mxu0
    %3177 = vmatprep.mubr.f32.mxu0 %v2839
    %3178 = vmatmul.mubr.f32.gmra.mrb[0].mxu0 %v2838
    %v3179 = vpop.f32.mrb[0].mxu0
    %v3180 = vadd.f32 %v3035, %v3179
    %v3181 = vpop.f32.mrb[0].mxu0
    %3182 = vmatprep.mubr.f32.mxu0 %v2843
    %3183 = vmatmul.mubr.f32.gmra.mrb[0].mxu0 %v2842
    %v3184 = vpop.f32.mrb[0].mxu0
    %v3185 = vadd.f32 %v3040, %v3184
    %v3186 = vpop.f32.mrb[0].mxu0
    %3187 = vmatprep.mubr.f32.mxu0 %v2847
    %3188 = vmatmul.mubr.f32.gmra.mrb[0].mxu0 %v2846
    %v3189 = vpop.f32.mrb[0].mxu0
    %v3190 = vadd.f32 %v3045, %v3189
    %v3191 = vpop.f32.mrb[0].mxu0
    %3192 = vmatprep.mubr.f32.mxu0 %v2851
    %3193 = vmatmul.mubr.f32.gmra.mrb[0].mxu0 %v2850
    %v3194 = vpop.f32.mrb[0].mxu0
    %v3195 = vadd.f32 %v3050, %v3194
    %v3196 = vpop.f32.mrb[0].mxu0
    %3197 = vmatprep.mubr.f32.mxu0 %v2855
    %3198 = vmatmul.mubr.f32.gmra.mrb[0].mxu0 %v2854
    %v3199 = vpop.f32.mrb[0].mxu0
    %v3200 = vadd.f32 %v3055, %v3199
    %v3201 = vpop.f32.mrb[0].mxu0
    %3202 = vmatprep.mubr.f32.mxu0 %v2859
    %3203 = vmatmul.mubr.f32.gmra.mrb[0].mxu0 %v2858
    %v3204 = vpop.f32.mrb[0].mxu0
    %v3205 = vadd.f32 %v3060, %v3204
    %v3206 = vpop.f32.mrb[0].mxu0
    %3207 = vmatprep.mubr.f32.mxu0 %v2863
    %3208 = vmatmul.mubr.f32.gmra.mrb[0].mxu0 %v2862
    %v3209 = vpop.f32.mrb[0].mxu0
    %v3210 = vadd.f32 %v3065, %v3209
    %v3211 = vpop.f32.mrb[0].mxu0
    %3212 = vmatprep.mubr.f32.mxu0 %v2867
    %3213 = vmatmul.mubr.f32.gmra.mrb[0].mxu0 %v2866
    %v3214 = vpop.f32.mrb[0].mxu0
    %v3215 = vadd.f32 %v3070, %v3214
    %v3216 = vpop.f32.mrb[0].mxu0
    %3217 = vmatprep.mubr.f32.mxu0 %v2871
    %3218 = vmatmul.mubr.f32.gmra.mrb[0].mxu0 %v2870
    %v3219 = vpop.f32.mrb[0].mxu0
    %v3220 = vadd.f32 %v3075, %v3219
    %v3221 = vpop.f32.mrb[0].mxu0
    %3222 = vmatprep.mubr.f32.mxu0 %v2875
    %3223 = vmatmul.mubr.f32.gmra.mrb[0].mxu0 %v2874
    %v3224 = vpop.f32.mrb[0].mxu0
    %v3225 = vadd.f32 %v3080, %v3224
    %v3226 = vpop.f32.mrb[0].mxu0
    %3227 = vmatprep.mubr.f32.mxu0 %v2879
    %3228 = vmatmul.mubr.f32.gmra.mrb[0].mxu0 %v2878
    %v3229 = vpop.f32.mrb[0].mxu0
    %v3230 = vadd.f32 %v3085, %v3229
    %v3231 = vpop.f32.mrb[0].mxu0
    %3232 = vmatprep.mubr.f32.mxu0 %v2883
    %3233 = vmatmul.mubr.f32.gmra.mrb[0].mxu0 %v2882
    %v3234 = vpop.f32.mrb[0].mxu0
    %v3235 = vadd.f32 %v3090, %v3234
    %v3236 = vpop.f32.mrb[0].mxu0
    %3237 = vmatprep.mubr.f32.mxu0 %v2887
    %3238 = vmatmul.mubr.f32.gmra.mrb[0].mxu0 %v2886
    %v3239 = vpop.f32.mrb[0].mxu0
    %v3240 = vadd.f32 %v3095, %v3239
    %v3241 = vpop.f32.mrb[0].mxu0
    %3242 = vdwg.mxu0
    %v3243 = vmax.f32 %v3165, 0.0
    %v3244 = vmax.f32 %v3170, 0.0
    %v3245 = vmax.f32 %v3175, 0.0
    %v3246 = vmax.f32 %v3180, 0.0
    %v3247 = vmax.f32 %v3185, 0.0
    %v3248 = vmax.f32 %v3190, 0.0
    %v3249 = vmax.f32 %v3195, 0.0
    %v3250 = vmax.f32 %v3200, 0.0
    %v3251 = vmax.f32 %v3205, 0.0
    %v3252 = vmax.f32 %v3210, 0.0
    %v3253 = vmax.f32 %v3215, 0.0
    %v3254 = vmax.f32 %v3220, 0.0
    %v3255 = vmax.f32 %v3225, 0.0
    %v3256 = vmax.f32 %v3230, 0.0
    %v3257 = vmax.f32 %v3235, 0.0
    %v3258 = vmax.f32 %v3240, 0.0
    %v3259 = vld [vmem:[%s4] sm:$0xff]
    %v3260 = vld [vmem:[%s4 + $0x8] sm:$0xff]
    %v3261 = vld [vmem:[%s4 + $0x10] sm:$0xff]
    %v3262 = vld [vmem:[%s4 + $0x18] sm:$0xff]
    %v3263 = vld [vmem:[%s4 + $0x20] sm:$0xff]
    %v3264 = vld [vmem:[%s4 + $0x28] sm:$0xff]
    %v3265 = vld [vmem:[%s4 + $0x30] sm:$0xff]
    %v3266 = vld [vmem:[%s4 + $0x38] sm:$0xff]
    %v3267 = vld [vmem:[%s4 + $0x40] sm:$0xff]
    %v3268 = vld [vmem:[%s4 + $0x48] sm:$0xff]
    %v3269 = vld [vmem:[%s4 + $0x50] sm:$0xff]
    %v3270 = vld [vmem:[%s4 + $0x58] sm:$0xff]
    %v3271 = vld [vmem:[%s4 + $0x60] sm:$0xff]
    %v3272 = vld [vmem:[%s4 + $0x68] sm:$0xff]
    %v3273 = vld [vmem:[%s4 + $0x70] sm:$0xff]
    %v3274 = vld [vmem:[%s4 + $0x78] sm:$0xff]
    %v3275 = vld [vmem:[#allocation10 + $0x3] ss:$0 sm:$0xff]
    %3276 = vmatprep.subr.mxu0 0.0
    %3277 = vmatpush1.msra.mxu0 %v3259
    %3278 = vmatprep.subr.mxu0 0.0
    %3279 = vmatpush1.msra.mxu0 %v3260
    %3280 = vmatprep.subr.mxu0 0.0
    %3281 = vmatpush1.msra.mxu0 %v3261
    %3282 = vmatprep.subr.mxu0 0.0
    %3283 = vmatpush1.msra.mxu0 %v3262
    %3284 = vmatprep.subr.mxu0 0.0
    %3285 = vmatpush1.msra.mxu0 %v3263
    %3286 = vmatprep.subr.mxu0 0.0
    %3287 = vmatpush1.msra.mxu0 %v3264
    %3288 = vmatprep.subr.mxu0 0.0
    %3289 = vmatpush1.msra.mxu0 %v3265
    %3290 = vmatprep.subr.mxu0 0.0
    %3291 = vmatpush1.msra.mxu0 %v3266
    %3292 = vmatprep.subr.mxu0 0.0
    %3293 = vmatpush1.msra.mxu0 %v3267
    %3294 = vmatprep.subr.mxu0 0.0
    %3295 = vmatpush1.msra.mxu0 %v3268
    %3296 = vmatprep.subr.mxu0 0.0
    %3297 = vmatpush1.msra.mxu0 %v3269
    %3298 = vmatprep.subr.mxu0 0.0
    %3299 = vmatpush1.msra.mxu0 %v3270
    %3300 = vmatprep.subr.mxu0 0.0
    %3301 = vmatpush1.msra.mxu0 %v3271
    %3302 = vmatprep.subr.mxu0 0.0
    %3303 = vmatpush1.msra.mxu0 %v3272
    %3304 = vmatprep.subr.mxu0 0.0
    %3305 = vmatpush1.msra.mxu0 %v3273
    %3306 = vmatprep.subr.mxu0 0.0
    %3307 = vmatpush1.msra.mxu0 %v3274
    %3308 = vmatprep.subr.mxu0 0.0
    %3309 = vmatpush1.msra.mxu0 0.0
    %3310 = vmatprep.subr.mxu0 0.0
    %3311 = vmatpush1.msra.mxu0 0.0
    %3312 = vmatprep.subr.mxu0 0.0
    %3313 = vmatpush1.msra.mxu0 0.0
    %3314 = vmatprep.subr.mxu0 0.0
    %3315 = vmatpush1.msra.mxu0 0.0
    %3316 = vmatprep.subr.mxu0 0.0
    %3317 = vmatpush1.msra.mxu0 0.0
    %3318 = vmatprep.subr.mxu0 0.0
    %3319 = vmatpush1.msra.mxu0 0.0
    %3320 = vmatprep.subr.mxu0 0.0
    %3321 = vmatpush1.msra.mxu0 0.0
    %3322 = vmatprep.subr.mxu0 0.0
    %3323 = vmatpush1.msra.mxu0 0.0
    %3324 = vmatprep.subr.mxu0 0.0
    %3325 = vmatpush1.msra.mxu0 0.0
    %3326 = vmatprep.subr.mxu0 0.0
    %3327 = vmatpush1.msra.mxu0 0.0
    %3328 = vmatprep.subr.mxu0 0.0
    %3329 = vmatpush1.msra.mxu0 0.0
    %3330 = vmatprep.subr.mxu0 0.0
    %3331 = vmatpush1.msra.mxu0 0.0
    %3332 = vmatprep.subr.mxu0 0.0
    %3333 = vmatpush1.msra.mxu0 0.0
    %3334 = vmatprep.subr.mxu0 0.0
    %3335 = vmatpush1.msra.mxu0 0.0
    %3336 = vmatprep.subr.mxu0 0.0
    %3337 = vmatpush1.msra.mxu0 0.0
    %3338 = vmatprep.subr.mxu0 0.0
    %3339 = vmatpush1.msra.mxu0 0.0
    %3340 = vmatprep.mubr.f32.mxu0 0.0
    %3341 = vmatmul.mubr.f32.gmra.mrb[0].mxu0 %v3243
    %v3342 = vpop.f32.mrb[0].mxu0
    %v3343 = vadd.f32 %v3275, %v3342
    %v3344 = vpop.f32.mrb[0].mxu0
    %3345 = vmatprep.mubr.f32.mxu0 0.0
    %3346 = vmatmul.mubr.f32.gmra.mrb[0].mxu0 %v3244
    %v3347 = vpop.f32.mrb[0].mxu0
    %v3348 = vadd.f32 %v3275, %v3347
    %v3349 = vpop.f32.mrb[0].mxu0
    %3350 = vmatprep.mubr.f32.mxu0 0.0
    %3351 = vmatmul.mubr.f32.gmra.mrb[0].mxu0 %v3245
    %v3352 = vpop.f32.mrb[0].mxu0
    %v3353 = vadd.f32 %v3275, %v3352
    %v3354 = vpop.f32.mrb[0].mxu0
    %3355 = vmatprep.mubr.f32.mxu0 0.0
    %3356 = vmatmul.mubr.f32.gmra.mrb[0].mxu0 %v3246
    %v3357 = vpop.f32.mrb[0].mxu0
    %v3358 = vadd.f32 %v3275, %v3357
    %v3359 = vpop.f32.mrb[0].mxu0
    %3360 = vmatprep.mubr.f32.mxu0 0.0
    %3361 = vmatmul.mubr.f32.gmra.mrb[0].mxu0 %v3247
    %v3362 = vpop.f32.mrb[0].mxu0
    %v3363 = vadd.f32 %v3275, %v3362
    %v3364 = vpop.f32.mrb[0].mxu0
    %3365 = vmatprep.mubr.f32.mxu0 0.0
    %3366 = vmatmul.mubr.f32.gmra.mrb[0].mxu0 %v3248
    %v3367 = vpop.f32.mrb[0].mxu0
    %v3368 = vadd.f32 %v3275, %v3367
    %v3369 = vpop.f32.mrb[0].mxu0
    %3370 = vmatprep.mubr.f32.mxu0 0.0
    %3371 = vmatmul.mubr.f32.gmra.mrb[0].mxu0 %v3249
    %v3372 = vpop.f32.mrb[0].mxu0
    %v3373 = vadd.f32 %v3275, %v3372
    %v3374 = vpop.f32.mrb[0].mxu0
    %3375 = vmatprep.mubr.f32.mxu0 0.0
    %3376 = vmatmul.mubr.f32.gmra.mrb[0].mxu0 %v3250
    %v3377 = vpop.f32.mrb[0].mxu0
    %v3378 = vadd.f32 %v3275, %v3377
    %v3379 = vpop.f32.mrb[0].mxu0
    %3380 = vmatprep.mubr.f32.mxu0 0.0
    %3381 = vmatmul.mubr.f32.gmra.mrb[0].mxu0 %v3251
    %v3382 = vpop.f32.mrb[0].mxu0
    %v3383 = vadd.f32 %v3275, %v3382
    %v3384 = vpop.f32.mrb[0].mxu0
    %3385 = vmatprep.mubr.f32.mxu0 0.0
    %3386 = vmatmul.mubr.f32.gmra.mrb[0].mxu0 %v3252
    %v3387 = vpop.f32.mrb[0].mxu0
    %v3388 = vadd.f32 %v3275, %v3387
    %v3389 = vpop.f32.mrb[0].mxu0
    %3390 = vmatprep.mubr.f32.mxu0 0.0
    %3391 = vmatmul.mubr.f32.gmra.mrb[0].mxu0 %v3253
    %v3392 = vpop.f32.mrb[0].mxu0
    %v3393 = vadd.f32 %v3275, %v3392
    %v3394 = vpop.f32.mrb[0].mxu0
    %3395 = vmatprep.mubr.f32.mxu0 0.0
    %3396 = vmatmul.mubr.f32.gmra.mrb[0].mxu0 %v3254
    %v3397 = vpop.f32.mrb[0].mxu0
    %v3398 = vadd.f32 %v3275, %v3397
    %v3399 = vpop.f32.mrb[0].mxu0
    %3400 = vmatprep.mubr.f32.mxu0 0.0
    %3401 = vmatmul.mubr.f32.gmra.mrb[0].mxu0 %v3255
    %v3402 = vpop.f32.mrb[0].mxu0
    %v3403 = vadd.f32 %v3275, %v3402
    %v3404 = vpop.f32.mrb[0].mxu0
    %3405 = vmatprep.mubr.f32.mxu0 0.0
    %3406 = vmatmul.mubr.f32.gmra.mrb[0].mxu0 %v3256
    %v3407 = vpop.f32.mrb[0].mxu0
    %v3408 = vadd.f32 %v3275, %v3407
    %v3409 = vpop.f32.mrb[0].mxu0
    %3410 = vmatprep.mubr.f32.mxu0 0.0
    %3411 = vmatmul.mubr.f32.gmra.mrb[0].mxu0 %v3257
    %v3412 = vpop.f32.mrb[0].mxu0
    %v3413 = vadd.f32 %v3275, %v3412
    %v3414 = vpop.f32.mrb[0].mxu0
    %3415 = vmatprep.mubr.f32.mxu0 0.0
    %3416 = vmatmul.mubr.f32.gmra.mrb[0].mxu0 %v3258
    %v3417 = vpop.f32.mrb[0].mxu0
    %v3418 = vadd.f32 %v3275, %v3417
    %v3419 = vpop.f32.mrb[0].mxu0
    %3420 = vdwg.mxu0
    %v3421 = vmax.f32 %v3343, 0.0
    %v3422 = vmax.f32 %v3348, 0.0
    %v3423 = vmax.f32 %v3353, 0.0
    %v3424 = vmax.f32 %v3358, 0.0
    %v3425 = vmax.f32 %v3363, 0.0
    %v3426 = vmax.f32 %v3368, 0.0
    %v3427 = vmax.f32 %v3373, 0.0
    %v3428 = vmax.f32 %v3378, 0.0
    %v3429 = vmax.f32 %v3383, 0.0
    %v3430 = vmax.f32 %v3388, 0.0
    %v3431 = vmax.f32 %v3393, 0.0
    %v3432 = vmax.f32 %v3398, 0.0
    %v3433 = vmax.f32 %v3403, 0.0
    %v3434 = vmax.f32 %v3408, 0.0
    %v3435 = vmax.f32 %v3413, 0.0
    %v3436 = vmax.f32 %v3418, 0.0
    %v3437 = vld [vmem:[%s5] sm:$0xff]
    %v3438 = vld [vmem:[%s5 + $0x8] sm:$0xff]
    %v3439 = vld [vmem:[%s5 + $0x10] sm:$0xff]
    %v3440 = vld [vmem:[%s5 + $0x18] sm:$0xff]
    %v3441 = vld [vmem:[%s5 + $0x20] sm:$0xff]
    %v3442 = vld [vmem:[%s5 + $0x28] sm:$0xff]
    %v3443 = vld [vmem:[%s5 + $0x30] sm:$0xff]
    %v3444 = vld [vmem:[%s5 + $0x38] sm:$0xff]
    %v3445 = vld [vmem:[#allocation10 + $0x4] ss:$0 sm:$0xff]
    %vm3446 = vcmask 523264
    %v3448 = vsel %vm3446, %v3421, 0
    %v3451 = vsel %vm3446, %v3422, 0
    %v3454 = vsel %vm3446, %v3423, 0
    %v3457 = vsel %vm3446, %v3424, 0
    %v3460 = vsel %vm3446, %v3425, 0
    %v3463 = vsel %vm3446, %v3426, 0
    %v3466 = vsel %vm3446, %v3427, 0
    %v3469 = vsel %vm3446, %v3428, 0
    %v3472 = vsel %vm3446, %v3429, 0
    %v3475 = vsel %vm3446, %v3430, 0
    %v3478 = vsel %vm3446, %v3431, 0
    %v3481 = vsel %vm3446, %v3432, 0
    %v3484 = vsel %vm3446, %v3433, 0
    %v3487 = vsel %vm3446, %v3434, 0
    %v3490 = vsel %vm3446, %v3435, 0
    %v3493 = vsel %vm3446, %v3436, 0
    %3495 = vmatprep.subr.mxu0 0.0
    %3496 = vmatpush1.msra.mxu0 %v3437
    %3497 = vmatprep.subr.mxu0 0.0
    %3498 = vmatpush1.msra.mxu0 %v3438
    %3499 = vmatprep.subr.mxu0 0.0
    %3500 = vmatpush1.msra.mxu0 %v3439
    %3501 = vmatprep.subr.mxu0 0.0
    %3502 = vmatpush1.msra.mxu0 %v3440
    %3503 = vmatprep.subr.mxu0 0.0
    %3504 = vmatpush1.msra.mxu0 %v3441
    %3505 = vmatprep.subr.mxu0 0.0
    %3506 = vmatpush1.msra.mxu0 %v3442
    %3507 = vmatprep.subr.mxu0 0.0
    %3508 = vmatpush1.msra.mxu0 %v3443
    %3509 = vmatprep.subr.mxu0 0.0
    %3510 = vmatpush1.msra.mxu0 %v3444
    %3511 = vmatprep.subr.mxu0 0.0
    %3512 = vmatpush1.msra.mxu0 0.0
    %3513 = vmatprep.subr.mxu0 0.0
    %3514 = vmatpush1.msra.mxu0 0.0
    %3515 = vmatprep.subr.mxu0 0.0
    %3516 = vmatpush1.msra.mxu0 0.0
    %3517 = vmatprep.subr.mxu0 0.0
    %3518 = vmatpush1.msra.mxu0 0.0
    %3519 = vmatprep.subr.mxu0 0.0
    %3520 = vmatpush1.msra.mxu0 0.0
    %3521 = vmatprep.subr.mxu0 0.0
    %3522 = vmatpush1.msra.mxu0 0.0
    %3523 = vmatprep.subr.mxu0 0.0
    %3524 = vmatpush1.msra.mxu0 0.0
    %3525 = vmatprep.subr.mxu0 0.0
    %3526 = vmatpush1.msra.mxu0 0.0
    %3527 = vmatprep.subr.mxu0 0.0
    %3528 = vmatpush1.msra.mxu0 0.0
    %3529 = vmatprep.subr.mxu0 0.0
    %3530 = vmatpush1.msra.mxu0 0.0
    %3531 = vmatprep.subr.mxu0 0.0
    %3532 = vmatpush1.msra.mxu0 0.0
    %3533 = vmatprep.subr.mxu0 0.0
    %3534 = vmatpush1.msra.mxu0 0.0
    %3535 = vmatprep.subr.mxu0 0.0
    %3536 = vmatpush1.msra.mxu0 0.0
    %3537 = vmatprep.subr.mxu0 0.0
    %3538 = vmatpush1.msra.mxu0 0.0
    %3539 = vmatprep.subr.mxu0 0.0
    %3540 = vmatpush1.msra.mxu0 0.0
    %3541 = vmatprep.subr.mxu0 0.0
    %3542 = vmatpush1.msra.mxu0 0.0
    %3543 = vmatprep.subr.mxu0 0.0
    %3544 = vmatpush1.msra.mxu0 0.0
    %3545 = vmatprep.subr.mxu0 0.0
    %3546 = vmatpush1.msra.mxu0 0.0
    %3547 = vmatprep.subr.mxu0 0.0
    %3548 = vmatpush1.msra.mxu0 0.0
    %3549 = vmatprep.subr.mxu0 0.0
    %3550 = vmatpush1.msra.mxu0 0.0
    %3551 = vmatprep.subr.mxu0 0.0
    %3552 = vmatpush1.msra.mxu0 0.0
    %3553 = vmatprep.subr.mxu0 0.0
    %3554 = vmatpush1.msra.mxu0 0.0
    %3555 = vmatprep.subr.mxu0 0.0
    %3556 = vmatpush1.msra.mxu0 0.0
    %3557 = vmatprep.subr.mxu0 0.0
    %3558 = vmatpush1.msra.mxu0 0.0
    %3559 = vmatprep.mubr.f32.mxu0 0.0
    %3560 = vmatmul.mubr.f32.gmra.mrb[0].mxu0 %v3448
    %v3561 = vpop.f32.mrb[0].mxu0
    %v3562 = vadd.f32 %v3445, %v3561
    %v3563 = vpop.f32.mrb[0].mxu0
    %3564 = vmatprep.mubr.f32.mxu0 0.0
    %3565 = vmatmul.mubr.f32.gmra.mrb[0].mxu0 %v3451
    %v3566 = vpop.f32.mrb[0].mxu0
    %v3567 = vadd.f32 %v3445, %v3566
    %v3568 = vpop.f32.mrb[0].mxu0
    %3569 = vmatprep.mubr.f32.mxu0 0.0
    %3570 = vmatmul.mubr.f32.gmra.mrb[0].mxu0 %v3454
    %v3571 = vpop.f32.mrb[0].mxu0
    %v3572 = vadd.f32 %v3445, %v3571
    %v3573 = vpop.f32.mrb[0].mxu0
    %3574 = vmatprep.mubr.f32.mxu0 0.0
    %3575 = vmatmul.mubr.f32.gmra.mrb[0].mxu0 %v3457
    %v3576 = vpop.f32.mrb[0].mxu0
    %v3577 = vadd.f32 %v3445, %v3576
    %v3578 = vpop.f32.mrb[0].mxu0
    %3579 = vmatprep.mubr.f32.mxu0 0.0
    %3580 = vmatmul.mubr.f32.gmra.mrb[0].mxu0 %v3460
    %v3581 = vpop.f32.mrb[0].mxu0
    %v3582 = vadd.f32 %v3445, %v3581
    %v3583 = vpop.f32.mrb[0].mxu0
    %3584 = vmatprep.mubr.f32.mxu0 0.0
    %3585 = vmatmul.mubr.f32.gmra.mrb[0].mxu0 %v3463
    %v3586 = vpop.f32.mrb[0].mxu0
    %v3587 = vadd.f32 %v3445, %v3586
    %v3588 = vpop.f32.mrb[0].mxu0
    %3589 = vmatprep.mubr.f32.mxu0 0.0
    %3590 = vmatmul.mubr.f32.gmra.mrb[0].mxu0 %v3466
    %v3591 = vpop.f32.mrb[0].mxu0
    %v3592 = vadd.f32 %v3445, %v3591
    %v3593 = vpop.f32.mrb[0].mxu0
    %3594 = vmatprep.mubr.f32.mxu0 0.0
    %3595 = vmatmul.mubr.f32.gmra.mrb[0].mxu0 %v3469
    %v3596 = vpop.f32.mrb[0].mxu0
    %v3597 = vadd.f32 %v3445, %v3596
    %v3598 = vpop.f32.mrb[0].mxu0
    %3599 = vmatprep.mubr.f32.mxu0 0.0
    %3600 = vmatmul.mubr.f32.gmra.mrb[0].mxu0 %v3472
    %v3601 = vpop.f32.mrb[0].mxu0
    %v3602 = vadd.f32 %v3445, %v3601
    %v3603 = vpop.f32.mrb[0].mxu0
    %3604 = vmatprep.mubr.f32.mxu0 0.0
    %3605 = vmatmul.mubr.f32.gmra.mrb[0].mxu0 %v3475
    %v3606 = vpop.f32.mrb[0].mxu0
    %v3607 = vadd.f32 %v3445, %v3606
    %v3608 = vpop.f32.mrb[0].mxu0
    %3609 = vmatprep.mubr.f32.mxu0 0.0
    %3610 = vmatmul.mubr.f32.gmra.mrb[0].mxu0 %v3478
    %v3611 = vpop.f32.mrb[0].mxu0
    %v3612 = vadd.f32 %v3445, %v3611
    %v3613 = vpop.f32.mrb[0].mxu0
    %3614 = vmatprep.mubr.f32.mxu0 0.0
    %3615 = vmatmul.mubr.f32.gmra.mrb[0].mxu0 %v3481
    %v3616 = vpop.f32.mrb[0].mxu0
    %v3617 = vadd.f32 %v3445, %v3616
    %v3618 = vpop.f32.mrb[0].mxu0
    %3619 = vmatprep.mubr.f32.mxu0 0.0
    %3620 = vmatmul.mubr.f32.gmra.mrb[0].mxu0 %v3484
    %v3621 = vpop.f32.mrb[0].mxu0
    %v3622 = vadd.f32 %v3445, %v3621
    %v3623 = vpop.f32.mrb[0].mxu0
    %3624 = vmatprep.mubr.f32.mxu0 0.0
    %3625 = vmatmul.mubr.f32.gmra.mrb[0].mxu0 %v3487
    %v3626 = vpop.f32.mrb[0].mxu0
    %v3627 = vadd.f32 %v3445, %v3626
    %v3628 = vpop.f32.mrb[0].mxu0
    %3629 = vmatprep.mubr.f32.mxu0 0.0
    %3630 = vmatmul.mubr.f32.gmra.mrb[0].mxu0 %v3490
    %v3631 = vpop.f32.mrb[0].mxu0
    %v3632 = vadd.f32 %v3445, %v3631
    %v3633 = vpop.f32.mrb[0].mxu0
    %3634 = vmatprep.mubr.f32.mxu0 0.0
    %3635 = vmatmul.mubr.f32.gmra.mrb[0].mxu0 %v3493
    %v3636 = vpop.f32.mrb[0].mxu0
    %v3637 = vadd.f32 %v3445, %v3636
    %v3638 = vpop.f32.mrb[0].mxu0
    %3639 = vdwg.mxu0
    %v3640 = vmax.f32 %v3562, 0.0
    %v3641 = vmax.f32 %v3567, 0.0
    %v3642 = vmax.f32 %v3572, 0.0
    %v3643 = vmax.f32 %v3577, 0.0
    %v3644 = vmax.f32 %v3582, 0.0
    %v3645 = vmax.f32 %v3587, 0.0
    %v3646 = vmax.f32 %v3592, 0.0
    %v3647 = vmax.f32 %v3597, 0.0
    %v3648 = vmax.f32 %v3602, 0.0
    %v3649 = vmax.f32 %v3607, 0.0
    %v3650 = vmax.f32 %v3612, 0.0
    %v3651 = vmax.f32 %v3617, 0.0
    %v3652 = vmax.f32 %v3622, 0.0
    %v3653 = vmax.f32 %v3627, 0.0
    %v3654 = vmax.f32 %v3632, 0.0
    %v3655 = vmax.f32 %v3637, 0.0
    %v3656 = vld [vmem:[#allocation8] sm:$0xff]
    %v3657 = vld [vmem:[#allocation8 + $0x8] sm:$0xff]
    %v3658 = vld [vmem:[#allocation8 + $0x10] sm:$0xff]
    %v3659 = vld [vmem:[#allocation8 + $0x18] sm:$0xff]
    %v3660 = vld [vmem:[#allocation10 + $0x5] ss:$0 sm:$0xff]
    %vm3661 = vcmask 261120
    %v3663 = vsel %vm3661, %v3640, 0
    %v3666 = vsel %vm3661, %v3641, 0
    %v3669 = vsel %vm3661, %v3642, 0
    %v3672 = vsel %vm3661, %v3643, 0
    %v3675 = vsel %vm3661, %v3644, 0
    %v3678 = vsel %vm3661, %v3645, 0
    %v3681 = vsel %vm3661, %v3646, 0
    %v3684 = vsel %vm3661, %v3647, 0
    %v3687 = vsel %vm3661, %v3648, 0
    %v3690 = vsel %vm3661, %v3649, 0
    %v3693 = vsel %vm3661, %v3650, 0
    %v3696 = vsel %vm3661, %v3651, 0
    %v3699 = vsel %vm3661, %v3652, 0
    %v3702 = vsel %vm3661, %v3653, 0
    %v3705 = vsel %vm3661, %v3654, 0
    %v3708 = vsel %vm3661, %v3655, 0
    %3710 = vmatprep.subr.mxu0 0.0
    %3711 = vmatpush1.msra.mxu0 %v3656
    %3712 = vmatprep.subr.mxu0 0.0
    %3713 = vmatpush1.msra.mxu0 %v3657
    %3714 = vmatprep.subr.mxu0 0.0
    %3715 = vmatpush1.msra.mxu0 %v3658
    %3716 = vmatprep.subr.mxu0 0.0
    %3717 = vmatpush1.msra.mxu0 %v3659
    %3718 = vmatprep.subr.mxu0 0.0
    %3719 = vmatpush1.msra.mxu0 0.0
    %3720 = vmatprep.subr.mxu0 0.0
    %3721 = vmatpush1.msra.mxu0 0.0
    %3722 = vmatprep.subr.mxu0 0.0
    %3723 = vmatpush1.msra.mxu0 0.0
    %3724 = vmatprep.subr.mxu0 0.0
    %3725 = vmatpush1.msra.mxu0 0.0
    %3726 = vmatprep.subr.mxu0 0.0
    %3727 = vmatpush1.msra.mxu0 0.0
    %3728 = vmatprep.subr.mxu0 0.0
    %3729 = vmatpush1.msra.mxu0 0.0
    %3730 = vmatprep.subr.mxu0 0.0
    %3731 = vmatpush1.msra.mxu0 0.0
    %3732 = vmatprep.subr.mxu0 0.0
    %3733 = vmatpush1.msra.mxu0 0.0
    %3734 = vmatprep.subr.mxu0 0.0
    %3735 = vmatpush1.msra.mxu0 0.0
    %3736 = vmatprep.subr.mxu0 0.0
    %3737 = vmatpush1.msra.mxu0 0.0
    %3738 = vmatprep.subr.mxu0 0.0
    %3739 = vmatpush1.msra.mxu0 0.0
    %3740 = vmatprep.subr.mxu0 0.0
    %3741 = vmatpush1.msra.mxu0 0.0
    %3742 = vmatprep.subr.mxu0 0.0
    %3743 = vmatpush1.msra.mxu0 0.0
    %3744 = vmatprep.subr.mxu0 0.0
    %3745 = vmatpush1.msra.mxu0 0.0
    %3746 = vmatprep.subr.mxu0 0.0
    %3747 = vmatpush1.msra.mxu0 0.0
    %3748 = vmatprep.subr.mxu0 0.0
    %3749 = vmatpush1.msra.mxu0 0.0
    %3750 = vmatprep.subr.mxu0 0.0
    %3751 = vmatpush1.msra.mxu0 0.0
    %3752 = vmatprep.subr.mxu0 0.0
    %3753 = vmatpush1.msra.mxu0 0.0
    %3754 = vmatprep.subr.mxu0 0.0
    %3755 = vmatpush1.msra.mxu0 0.0
    %3756 = vmatprep.subr.mxu0 0.0
    %3757 = vmatpush1.msra.mxu0 0.0
    %3758 = vmatprep.subr.mxu0 0.0
    %3759 = vmatpush1.msra.mxu0 0.0
    %3760 = vmatprep.subr.mxu0 0.0
    %3761 = vmatpush1.msra.mxu0 0.0
    %3762 = vmatprep.subr.mxu0 0.0
    %3763 = vmatpush1.msra.mxu0 0.0
    %3764 = vmatprep.subr.mxu0 0.0
    %3765 = vmatpush1.msra.mxu0 0.0
    %3766 = vmatprep.subr.mxu0 0.0
    %3767 = vmatpush1.msra.mxu0 0.0
    %3768 = vmatprep.subr.mxu0 0.0
    %3769 = vmatpush1.msra.mxu0 0.0
    %3770 = vmatprep.subr.mxu0 0.0
    %3771 = vmatpush1.msra.mxu0 0.0
    %3772 = vmatprep.subr.mxu0 0.0
    %3773 = vmatpush1.msra.mxu0 0.0
    %3774 = vmatprep.mubr.f32.mxu0 0.0
    %3775 = vmatmul.mubr.f32.gmra.mrb[0].mxu0 %v3663
    %v3776 = vpop.f32.mrb[0].mxu0
    %v3777 = vadd.f32 %v3660, %v3776
    %v3778 = vpop.f32.mrb[0].mxu0
    %3779 = vmatprep.mubr.f32.mxu0 0.0
    %3780 = vmatmul.mubr.f32.gmra.mrb[0].mxu0 %v3666
    %v3781 = vpop.f32.mrb[0].mxu0
    %v3782 = vadd.f32 %v3660, %v3781
    %v3783 = vpop.f32.mrb[0].mxu0
    %3784 = vmatprep.mubr.f32.mxu0 0.0
    %3785 = vmatmul.mubr.f32.gmra.mrb[0].mxu0 %v3669
    %v3786 = vpop.f32.mrb[0].mxu0
    %v3787 = vadd.f32 %v3660, %v3786
    %v3788 = vpop.f32.mrb[0].mxu0
    %3789 = vmatprep.mubr.f32.mxu0 0.0
    %3790 = vmatmul.mubr.f32.gmra.mrb[0].mxu0 %v3672
    %v3791 = vpop.f32.mrb[0].mxu0
    %v3792 = vadd.f32 %v3660, %v3791
    %v3793 = vpop.f32.mrb[0].mxu0
    %3794 = vmatprep.mubr.f32.mxu0 0.0
    %3795 = vmatmul.mubr.f32.gmra.mrb[0].mxu0 %v3675
    %v3796 = vpop.f32.mrb[0].mxu0
    %v3797 = vadd.f32 %v3660, %v3796
    %v3798 = vpop.f32.mrb[0].mxu0
    %3799 = vmatprep.mubr.f32.mxu0 0.0
    %3800 = vmatmul.mubr.f32.gmra.mrb[0].mxu0 %v3678
    %v3801 = vpop.f32.mrb[0].mxu0
    %v3802 = vadd.f32 %v3660, %v3801
    %v3803 = vpop.f32.mrb[0].mxu0
    %3804 = vmatprep.mubr.f32.mxu0 0.0
    %3805 = vmatmul.mubr.f32.gmra.mrb[0].mxu0 %v3681
    %v3806 = vpop.f32.mrb[0].mxu0
    %v3807 = vadd.f32 %v3660, %v3806
    %v3808 = vpop.f32.mrb[0].mxu0
    %3809 = vmatprep.mubr.f32.mxu0 0.0
    %3810 = vmatmul.mubr.f32.gmra.mrb[0].mxu0 %v3684
    %v3811 = vpop.f32.mrb[0].mxu0
    %v3812 = vadd.f32 %v3660, %v3811
    %v3813 = vpop.f32.mrb[0].mxu0
    %3814 = vmatprep.mubr.f32.mxu0 0.0
    %3815 = vmatmul.mubr.f32.gmra.mrb[0].mxu0 %v3687
    %v3816 = vpop.f32.mrb[0].mxu0
    %v3817 = vadd.f32 %v3660, %v3816
    %v3818 = vpop.f32.mrb[0].mxu0
    %3819 = vmatprep.mubr.f32.mxu0 0.0
    %3820 = vmatmul.mubr.f32.gmra.mrb[0].mxu0 %v3690
    %v3821 = vpop.f32.mrb[0].mxu0
    %v3822 = vadd.f32 %v3660, %v3821
    %v3823 = vpop.f32.mrb[0].mxu0
    %3824 = vmatprep.mubr.f32.mxu0 0.0
    %3825 = vmatmul.mubr.f32.gmra.mrb[0].mxu0 %v3693
    %v3826 = vpop.f32.mrb[0].mxu0
    %v3827 = vadd.f32 %v3660, %v3826
    %v3828 = vpop.f32.mrb[0].mxu0
    %3829 = vmatprep.mubr.f32.mxu0 0.0
    %3830 = vmatmul.mubr.f32.gmra.mrb[0].mxu0 %v3696
    %v3831 = vpop.f32.mrb[0].mxu0
    %v3832 = vadd.f32 %v3660, %v3831
    %v3833 = vpop.f32.mrb[0].mxu0
    %3834 = vmatprep.mubr.f32.mxu0 0.0
    %3835 = vmatmul.mubr.f32.gmra.mrb[0].mxu0 %v3699
    %v3836 = vpop.f32.mrb[0].mxu0
    %v3837 = vadd.f32 %v3660, %v3836
    %v3838 = vpop.f32.mrb[0].mxu0
    %3839 = vmatprep.mubr.f32.mxu0 0.0
    %3840 = vmatmul.mubr.f32.gmra.mrb[0].mxu0 %v3702
    %v3841 = vpop.f32.mrb[0].mxu0
    %v3842 = vadd.f32 %v3660, %v3841
    %v3843 = vpop.f32.mrb[0].mxu0
    %3844 = vmatprep.mubr.f32.mxu0 0.0
    %3845 = vmatmul.mubr.f32.gmra.mrb[0].mxu0 %v3705
    %v3846 = vpop.f32.mrb[0].mxu0
    %v3847 = vadd.f32 %v3660, %v3846
    %v3848 = vpop.f32.mrb[0].mxu0
    %3849 = vmatprep.mubr.f32.mxu0 0.0
    %3850 = vmatmul.mubr.f32.gmra.mrb[0].mxu0 %v3708
    %v3851 = vpop.f32.mrb[0].mxu0
    %v3852 = vadd.f32 %v3660, %v3851
    %v3853 = vpop.f32.mrb[0].mxu0
    %3854 = vdwg.mxu0
    %v3855 = vtanh.pop %v3777
    %v3856 = vtanh.pop %v3782
    %v3857 = vtanh.pop %v3787
    %v3858 = vtanh.pop %v3792
    %v3859 = vtanh.pop %v3797
    %v3860 = vtanh.pop %v3802
    %v3861 = vtanh.pop %v3807
    %v3862 = vtanh.pop %v3812
    %v3863 = vtanh.pop %v3817
    %v3864 = vtanh.pop %v3822
    %v3865 = vtanh.pop %v3827
    %v3866 = vtanh.pop %v3832
    %v3867 = vtanh.pop %v3837
    %v3868 = vtanh.pop %v3842
    %v3869 = vtanh.pop %v3847
    %v3870 = vtanh.pop %v3852
    %3871 = vst [vmem:[#allocation11] sm:$0xff] %v3855
    %3872 = vst [vmem:[#allocation11 + $0x8] sm:$0xff] %v3856
    %3873 = vst [vmem:[#allocation11 + $0x10] sm:$0xff] %v3857
    %3874 = vst [vmem:[#allocation11 + $0x18] sm:$0xff] %v3858
    %3875 = vst [vmem:[#allocation11 + $0x20] sm:$0xff] %v3859
    %3876 = vst [vmem:[#allocation11 + $0x28] sm:$0xff] %v3860
    %3877 = vst [vmem:[#allocation11 + $0x30] sm:$0xff] %v3861
    %3878 = vst [vmem:[#allocation11 + $0x38] sm:$0xff] %v3862
    %3879 = vst [vmem:[#allocation11 + $0x40] sm:$0xff] %v3863
    %3880 = vst [vmem:[#allocation11 + $0x48] sm:$0xff] %v3864
    %3881 = vst [vmem:[#allocation11 + $0x50] sm:$0xff] %v3865
    %3882 = vst [vmem:[#allocation11 + $0x58] sm:$0xff] %v3866
    %3883 = vst [vmem:[#allocation11 + $0x60] sm:$0xff] %v3867
    %3884 = vst [vmem:[#allocation11 + $0x68] sm:$0xff] %v3868
    %3885 = vst [vmem:[#allocation11 + $0x70] sm:$0xff] %v3869
    %3886 = vst [vmem:[#allocation11 + $0x78] sm:$0xff] %v3870
    // Predicated region
    $region54: #{tpu_custom_call.1} parent=1 // pred_check
      _
    $region55: #{tpu_custom_call.1} parent=1 // pred_check_branch
      %3888 = sbr.rel (0) target = $region57
    $region56: #{tpu_custom_call.1} parent=1 // pred_region
      %s3890 = ssub.s32 2048, 2048
      %3891 = vsyncadd [#allocation4], %s3890
      %s3892 = sshll.u32 [#allocation11], 4
      %s3893 = int_to_ptr.vmem [resolvable:$true] %s3892
      %3898 = dma.vmem_to_hbm [thread:$0]  %s3893, 2048, %s8, [#allocation4], 128, 128, 8
    $region57: #{tpu_custom_call.1} parent=1 // pred_fallthru
      _
    // Predicated region
    $region58: #{tpu_custom_call.1} parent=1 // pred_check
      _
    $region59: #{tpu_custom_call.1} parent=1 // pred_check_branch
      %3900 = sbr.rel (0) target = $region61
    $region60: #{tpu_custom_call.1} parent=1 // pred_region
      %3901 = dma.done [#allocation4], 2048
    $region61: #{tpu_custom_call.1} parent=1 // pred_fallthru
      _
    %3902 = vsyncpa [#allocation3], 1
    %3903 = vsyncpa [#allocation6], 1
    %3904 = vsyncpa [#allocation9], 1
    %3905 = vsyncpa [#allocation4], 1

</llo_original>
